<compile_context>
chip_gen: v7x
topology: tpu7x:2x2x1
jax: 0.10.0
libtpu: 0.0.40
codegen_flags: <defaults>
</compile_context>

<pallas_src>
import functools

import jax
import jax.numpy as jnp
from jax.experimental import pallas as pl
from jax.experimental.pallas import tpu as pltpu


def _round_up(x, m):
    return (x + m - 1) // m * m


def _choose_k_tiling(d_in, tk_max):
    """Pick (TK, K_pad) with K_pad as close to d_in as possible (no dead W1 bytes)."""
    n_k = max(1, -(-d_in // tk_max))          # number of K steps
    tk = _round_up(-(-d_in // n_k), 128)      # per-step tile, 128-aligned
    return tk, n_k * tk


def ffnn_kernel(x_ref, w1_ref, b1_ref, w2_ref, b2_ref, o_ref, acc_ref):
    k = pl.program_id(1)

    @pl.when(k == 0)
    def _init():
        acc_ref[...] = jnp.zeros_like(acc_ref)

    # Streamed hidden-layer GEMM: bf16 operands on the MXU, f32 accumulation.
    acc_ref[...] += jnp.dot(
        x_ref[...], w1_ref[...], preferred_element_type=jnp.float32
    )

    @pl.when(k == pl.num_programs(1) - 1)
    def _finalize():
        # Bias + ReLU in f32 on the VPU.
        h = jnp.maximum(acc_ref[...] + b1_ref[...], 0.0)
        # Tiny output-layer GEMM (W2 is VMEM-resident bf16, f32 accumulation).
        logits = jnp.dot(
            h.astype(w2_ref.dtype), w2_ref[...], preferred_element_type=jnp.float32
        )
        logits = logits + b2_ref[...]  # padded classes carry bias -1e30 (stays f32)
        # Numerically stable softmax over the (padded, lane-dense) class axis.
        # Exact normalization: the epilogue runs once per batch tile, so the
        # full-precision divide is essentially free and rows sum to 1.
        m = jnp.max(logits, axis=-1, keepdims=True)
        e = jnp.exp(logits - m)
        o_ref[...] = (e / jnp.sum(e, axis=-1, keepdims=True)).astype(o_ref.dtype)


def prepare_ffnn_params(w1, b1, w2, b2, *, tk_max=4096):
    """One-time weight preparation (hoisted out of the per-call forward).

    Pads to MXU/lane-friendly shapes and casts the streamed weights to bf16 so
    the per-call path never re-reads W1 in f32 or re-writes a padded copy.
    Returns ((w1_p, b1_p, w2_p, b2_p), tk) with tk a static Python int.
    """
    d_in, h_dim = w1.shape
    d_out = w2.shape[1]

    tk, k_pad = _choose_k_tiling(d_in, tk_max)
    h_pad = _round_up(h_dim, 128)
    o_pad = _round_up(d_out, 128)

    w1_p = jnp.pad(w1, ((0, k_pad - d_in), (0, h_pad - h_dim))).astype(jnp.bfloat16)
    b1_p = jnp.pad(b1.reshape(1, -1), ((0, 0), (0, h_pad - h_dim))).astype(jnp.float32)
    w2_p = jnp.pad(w2, ((0, h_pad - h_dim), (0, o_pad - d_out))).astype(jnp.bfloat16)
    # Huge negative bias on padded classes -> exp underflows to 0 in softmax.
    b2_p = jnp.pad(
        b2.reshape(1, -1), ((0, 0), (0, o_pad - d_out)), constant_values=-1e30
    ).astype(jnp.float32)

    w1_p, b1_p, w2_p, b2_p = jax.block_until_ready((w1_p, b1_p, w2_p, b2_p))
    return (w1_p, b1_p, w2_p, b2_p), tk


@functools.partial(jax.jit, static_argnames=("tk", "d_out"))
def ffnn_forward(x, w1_p, b1_p, w2_p, b2_p, *, tk, d_out):
    B, d_in = x.shape
    K_pad, H_pad = w1_p.shape
    O_pad = w2_p.shape[1]

    # Batch tile: >=16 sublanes (bf16 packed layout), up to 256 so large batches
    # re-stream W1 fewer times and match the 256-wide MXU on v6e/v7x.
    TB = min(256, _round_up(B, 16))
    B_pad = _round_up(B, TB)

    x_p = jnp.pad(x, ((0, B_pad - B), (0, K_pad - d_in))).astype(jnp.bfloat16)

    grid = (B_pad // TB, K_pad // tk)
    n_btiles = B_pad // TB

    # Advisory hint: long, memory-bound custom call (W1 re-streamed per batch tile).
    cost = pl.CostEstimate(
        flops=2 * B_pad * K_pad * H_pad + 2 * B_pad * H_pad * O_pad,
        transcendentals=B_pad * O_pad,
        bytes_accessed=(
            w1_p.size * 2 * n_btiles      # bf16 W1 stream, once per batch tile
            + x_p.size * 2                # bf16 activations
            + w2_p.size * 2 + b1_p.size * 4 + b2_p.size * 4
            + B_pad * O_pad * 4           # f32 output
        ),
    )

    out_padded = pl.pallas_call(
        ffnn_kernel,
        out_shape=jax.ShapeDtypeStruct((B_pad, O_pad), jnp.float32),
        grid_spec=pltpu.PrefetchScalarGridSpec(
            num_scalar_prefetch=0,
            grid=grid,
            in_specs=[
                pl.BlockSpec((TB, tk), lambda b, k: (b, k)),        # x tile
                pl.BlockSpec((tk, H_pad), lambda b, k: (k, 0)),     # W1 strip (streamed)
                pl.BlockSpec((1, H_pad), lambda b, k: (0, 0)),      # b1 (resident)
                pl.BlockSpec((H_pad, O_pad), lambda b, k: (0, 0)),  # W2 (resident, bf16)
                pl.BlockSpec((1, O_pad), lambda b, k: (0, 0)),      # b2 (resident)
            ],
            out_specs=pl.BlockSpec((TB, O_pad), lambda b, k: (b, 0)),
            scratch_shapes=[pltpu.VMEM((TB, H_pad), jnp.float32)],
        ),
        compiler_params=pltpu.CompilerParams(
            dimension_semantics=("parallel", "arbitrary"),
            # ~22-26 MiB actually used at TK=4096/TB=256; 48 MiB leaves headroom
            # even on v7x's 64 MiB physical VMEM (and raises v5e's 16 MiB default).
            vmem_limit_bytes=48 * 1024 * 1024,
        ),
        cost_estimate=cost,
    )(x_p, w1_p, b1_p, w2_p, b2_p)

    return out_padded[:B, :d_out]


def init_linear_params(key, fan_in, fan_out):
    """Deterministic init mimicking torch.nn.Linear: U(-1/sqrt(fan_in), +1/sqrt(fan_in))."""
    k_w, k_b = jax.random.split(key)
    bound = 1.0 / (fan_in ** 0.5)
    w = jax.random.uniform(k_w, (fan_in, fan_out), jnp.float32, -bound, bound)
    b = jax.random.uniform(k_b, (1, fan_out), jnp.float32, -bound, bound)
    return w, b


if __name__ == "__main__":
    # Small shapes consistent with the module (Linear -> ReLU -> Linear -> Softmax).
    # hidden_size/output_size match the module (1000 -> padded 1024, 10 -> 128);
    # input_size is scaled down (196608 -> 3072).
    batch = 8
    input_size = 3072
    hidden_size = 1000
    output_size = 10

    key = jax.random.PRNGKey(0)
    k_x, k_l1, k_l2 = jax.random.split(key, 3)

    x = jax.random.normal(k_x, (batch, input_size), jnp.float32)
    w1, b1 = init_linear_params(k_l1, input_size, hidden_size)
    w2, b2 = init_linear_params(k_l2, hidden_size, output_size)

    # One-time weight prep (hoisted out of the forward). tk_max=2048 here gives
    # TK=1536 / K_pad=3072: zero K-padding waste AND 2 K steps so the
    # accumulate-then-finalize path is exercised at this small test size.
    (w1_p, b1_p, w2_p, b2_p), tk = prepare_ffnn_params(w1, b1, w2, b2, tk_max=2048)

    out = ffnn_forward(x, w1_p, b1_p, w2_p, b2_p, tk=tk, d_out=output_size)
    out = jax.block_until_ready(out)

    # Pure-JAX reference using the same bf16 rounding of the streamed operands.
    as_bf = lambda a: a.astype(jnp.bfloat16).astype(jnp.float32)
    ref_h = jnp.maximum(as_bf(x) @ as_bf(w1) + b1, 0.0)
    ref_logits = as_bf(ref_h) @ as_bf(w2) + b2
    ref = jax.nn.softmax(ref_logits, axis=-1)

    assert out.shape == (batch, output_size)
    assert jnp.allclose(out, ref, atol=2e-3, rtol=2e-3), float(jnp.max(jnp.abs(out - ref)))
    assert jnp.allclose(jnp.sum(out, axis=-1), 1.0, atol=1e-3)

    print("KERNEL_OK")
</pallas_src>

<mosaic_0001>
module attributes {stable_mosaic.version = 11 : i64} {
  func.func @ffnn_kernel(%arg0: i32, %arg1: i32, %arg2: memref<16x1536xbf16, #tpu.memory_space<vmem>>, %arg3: memref<1536x1024xbf16, #tpu.memory_space<vmem>>, %arg4: memref<1x1024xf32, #tpu.memory_space<vmem>>, %arg5: memref<1024x128xbf16, #tpu.memory_space<vmem>>, %arg6: memref<1x128xf32, #tpu.memory_space<vmem>>, %arg7: memref<16x128xf32, #tpu.memory_space<vmem>>, %arg8: memref<16x1024xf32, #tpu.memory_space<vmem>>) attributes {dimension_semantics = [#tpu.dimension_semantics<parallel>, #tpu.dimension_semantics<arbitrary>], iteration_bounds = array<i64: 1, 2>, scalar_prefetch = 0 : i64, scratch_operands = 1 : i64, tpu.core_type = #tpu.core_type<tc>, window_params = [{transform_indices = @transform_0, window_bounds = array<i64: 16, 1536>}, {transform_indices = @transform_1, window_bounds = array<i64: 1536, 1024>}, {pipeline_mode = #tpu.pipeline_mode<synchronous>, transform_indices = @transform_2, window_bounds = array<i64: 1, 1024>}, {pipeline_mode = #tpu.pipeline_mode<synchronous>, transform_indices = @transform_3, window_bounds = array<i64: 1024, 128>}, {pipeline_mode = #tpu.pipeline_mode<synchronous>, transform_indices = @transform_4, window_bounds = array<i64: 1, 128>}, {transform_indices = @transform_5, window_bounds = array<i64: 16, 128>}]} {
    %c0_i32 = arith.constant 0 : i32
    %0 = arith.cmpi eq, %arg1, %c0_i32 : i32
    %1 = arith.extui %0 : i1 to i32
    %c0_i32_0 = arith.constant 0 : i32
    %2 = arith.cmpi ne, %1, %c0_i32_0 : i32
    scf.if %2 {
      %cst_9 = arith.constant 0.000000e+00 : f32
      %12 = vector.broadcast %cst_9 : f32 to vector<16x1024xf32>
      %c0_10 = arith.constant 0 : index
      %c0_11 = arith.constant 0 : index
      %13 = vector.load %arg8[%c0_10, %c0_11] : memref<16x1024xf32, #tpu.memory_space<vmem>>, vector<16x1024xf32>
      tpu.vector_store %arg8[%c0_10, %c0_11], %12 {strides = array<i32>} : memref<16x1024xf32, #tpu.memory_space<vmem>>, vector<16x1024xf32>,
    } else {
    }
    %c0 = arith.constant 0 : index
    %c0_1 = arith.constant 0 : index
    %3 = vector.load %arg8[%c0, %c0_1] : memref<16x1024xf32, #tpu.memory_space<vmem>>, vector<16x1024xf32>
    %c0_2 = arith.constant 0 : index
    %c0_3 = arith.constant 0 : index
    %4 = vector.load %arg2[%c0_2, %c0_3] : memref<16x1536xbf16, #tpu.memory_space<vmem>>, vector<16x1536xbf16>
    %c0_4 = arith.constant 0 : index
    %c0_5 = arith.constant 0 : index
    %5 = vector.load %arg3[%c0_4, %c0_5] : memref<1536x1024xbf16, #tpu.memory_space<vmem>>, vector<1536x1024xbf16>
    %cst = arith.constant dense<0.000000e+00> : vector<16x1024xf32>
    %6 = tpu.matmul %4, %5, %cst {dimension_numbers = #tpu.dot_dimension_numbers<[1], [0], [0], [1], [0, 0, 1, 1], [], []>} : vector<16x1536xbf16>, vector<1536x1024xbf16>, vector<16x1024xf32> -> vector<16x1024xf32>
    %7 = arith.addf %3, %6 : vector<16x1024xf32>
    %c0_6 = arith.constant 0 : index
    %c0_7 = arith.constant 0 : index
    %8 = vector.load %arg8[%c0_6, %c0_7] : memref<16x1024xf32, #tpu.memory_space<vmem>>, vector<16x1024xf32>
    tpu.vector_store %arg8[%c0_6, %c0_7], %7 {strides = array<i32>} : memref<16x1024xf32, #tpu.memory_space<vmem>>, vector<16x1024xf32>,
    %c1_i32 = arith.constant 1 : i32
    %9 = arith.cmpi eq, %arg1, %c1_i32 : i32
    %10 = arith.extui %9 : i1 to i32
    %c0_i32_8 = arith.constant 0 : i32
    %11 = arith.cmpi ne, %10, %c0_i32_8 : i32
    scf.if %11 {
      %c0_9 = arith.constant 0 : index
      %c0_10 = arith.constant 0 : index
      %12 = vector.load %arg8[%c0_9, %c0_10] : memref<16x1024xf32, #tpu.memory_space<vmem>>, vector<16x1024xf32>
      %c0_11 = arith.constant 0 : index
      %c0_12 = arith.constant 0 : index
      %13 = vector.load %arg4[%c0_11, %c0_12] : memref<1x1024xf32, #tpu.memory_space<vmem>>, vector<1x1024xf32>
      %14 = vector.broadcast %13 : vector<1x1024xf32> to vector<16x1024xf32>
      %15 = arith.addf %12, %14 : vector<16x1024xf32>
      %cst_13 = arith.constant 0.000000e+00 : f32
      %16 = vector.broadcast %cst_13 : f32 to vector<16x1024xf32>
      %17 = arith.maximumf %15, %16 : vector<16x1024xf32>
      %18 = arith.truncf %17 : vector<16x1024xf32> to vector<16x1024xbf16>
      %c0_14 = arith.constant 0 : index
      %c0_15 = arith.constant 0 : index
      %19 = vector.load %arg5[%c0_14, %c0_15] : memref<1024x128xbf16, #tpu.memory_space<vmem>>, vector<1024x128xbf16>
      %cst_16 = arith.constant dense<0.000000e+00> : vector<16x128xf32>
      %20 = tpu.matmul %18, %19, %cst_16 {dimension_numbers = #tpu.dot_dimension_numbers<[1], [0], [0], [1], [0, 0, 1, 1], [], []>} : vector<16x1024xbf16>, vector<1024x128xbf16>, vector<16x128xf32> -> vector<16x128xf32>
      %c0_17 = arith.constant 0 : index
      %c0_18 = arith.constant 0 : index
      %21 = vector.load %arg6[%c0_17, %c0_18] : memref<1x128xf32, #tpu.memory_space<vmem>>, vector<1x128xf32>
      %22 = vector.broadcast %21 : vector<1x128xf32> to vector<16x128xf32>
      %23 = arith.addf %20, %22 : vector<16x128xf32>
      %cst_19 = arith.constant dense<0xFF800000> : vector<16xf32>
      %24 = vector.multi_reduction <maximumf>, %23, %cst_19 [1] : vector<16x128xf32> to vector<16xf32>
      %25 = vector.shape_cast %24 : vector<16xf32> to vector<16x1xf32>
      %26 = vector.broadcast %25 : vector<16x1xf32> to vector<16x128xf32>
      %27 = arith.subf %23, %26 : vector<16x128xf32>
      %28 = math.exp %27 : vector<16x128xf32>
      %cst_20 = arith.constant dense<0.000000e+00> : vector<16xf32>
      %29 = vector.multi_reduction <add>, %28, %cst_20 [1] : vector<16x128xf32> to vector<16xf32>
      %30 = vector.shape_cast %29 : vector<16xf32> to vector<16x1xf32>
      %31 = vector.broadcast %30 : vector<16x1xf32> to vector<16x128xf32>
      %32 = arith.divf %28, %31 : vector<16x128xf32>
      %c0_21 = arith.constant 0 : index
      %c0_22 = arith.constant 0 : index
      %33 = vector.load %arg7[%c0_21, %c0_22] : memref<16x128xf32, #tpu.memory_space<vmem>>, vector<16x128xf32>
      tpu.vector_store %arg7[%c0_21, %c0_22], %32 {strides = array<i32>} : memref<16x128xf32, #tpu.memory_space<vmem>>, vector<16x128xf32>,
    } else {
    }
    return
  }
  func.func @transform_0(%arg0: i32, %arg1: i32) -> (i32, i32) {
    %c0_i32 = arith.constant 0 : i32
    return %arg0, %arg1 : i32, i32
  }
  func.func @transform_1(%arg0: i32, %arg1: i32) -> (i32, i32) {
    %c0_i32 = arith.constant 0 : i32
    %c0_i32_0 = arith.constant 0 : i32
    return %arg1, %c0_i32 : i32, i32
  }
  func.func @transform_2(%arg0: i32, %arg1: i32) -> (i32, i32) {
    %c0_i32 = arith.constant 0 : i32
    %c0_i32_0 = arith.constant 0 : i32
    %c0_i32_1 = arith.constant 0 : i32
    return %c0_i32, %c0_i32_0 : i32, i32
  }
  func.func @transform_3(%arg0: i32, %arg1: i32) -> (i32, i32) {
    %c0_i32 = arith.constant 0 : i32
    %c0_i32_0 = arith.constant 0 : i32
    %c0_i32_1 = arith.constant 0 : i32
    return %c0_i32, %c0_i32_0 : i32, i32
  }
  func.func @transform_4(%arg0: i32, %arg1: i32) -> (i32, i32) {
    %c0_i32 = arith.constant 0 : i32
    %c0_i32_0 = arith.constant 0 : i32
    %c0_i32_1 = arith.constant 0 : i32
    return %c0_i32, %c0_i32_0 : i32, i32
  }
  func.func @transform_5(%arg0: i32, %arg1: i32) -> (i32, i32) {
    %c0_i32 = arith.constant 0 : i32
    %c0_i32_0 = arith.constant 0 : i32
    return %arg0, %c0_i32 : i32, i32
  }
}

</mosaic_0001>

<llo_original>
// kernel: ffnn_forward.1
$region0: #{ffnn_forward.1}
  #allocation0 [shape = 'u32[]', space=smem, size = 0x4, offset = 0x4, fixed_abs, tag = 'smem constant byte address 0x4 - core index']
  #allocation1 [shape = 'u32[144,128]{1,0:T(1,128)}', space=vmem, size = 0x12000, scoped, tag = 'internal scratch']
  #allocation2 [shape = 'f32[16,1024]{1,0:T(8,128)}', space=vmem, size = 0x10000, scoped, tag = 'scratch operand']
  %s0 = inlined_call_operand.vmem [shape: bf16[16,3072], index: 0, kind: input, shape index: {}]
  %s1 = inlined_call_operand.hbm [shape: bf16[3072,1024], index: 1, kind: input, shape index: {}]
  %s2 = inlined_call_operand.hbm [shape: f32[1,1024], index: 2, kind: input, shape index: {}]
  %s3 = inlined_call_operand.hbm [shape: bf16[1024,128], index: 3, kind: input, shape index: {}]
  %s4 = inlined_call_operand.hbm [shape: f32[1,128], index: 4, kind: input, shape index: {}]
  %s5 = inlined_call_operand.vmem [shape: f32[16,128], index: 5, kind: output, shape index: {}]
  %s6 = sld [smem:[#allocation0]]
  $region100: #{ffnn_forward.1} parent=0
    _
  %s8 = ssub.s32 1, %s6
  %s9 = scalar_select 0, %s8, %s6
  $region1: #{ffnn_forward.1} parent=0
    #allocation3 [shape = 'u8[98304]{0}', space=vmem, size = 0x18000, scoped, tag = 'input window, operand 0']
    #allocation4 [shape = 'u8[6291456]{0}', space=vmem, size = 0x600000, scoped, tag = 'input window, operand 1']
    #allocation5 [shape = 's32[2]{0}', space=sflag, size = 0x8, scoped, tag = 'scoped memory for ffnn_forward.1']
    #allocation6 [shape = 'u8[4096]{0}', space=vmem, size = 0x1000, scoped, tag = 'input window, operand 2, single buffered']
    #allocation7 [shape = 's32[1]{0}', space=sflag, size = 0x4, scoped, tag = 'scoped memory for ffnn_forward.1']
    #allocation8 [shape = 'u8[262144]{0}', space=vmem, size = 0x40000, scoped, tag = 'input window, operand 3, single buffered']
    #allocation9 [shape = 'u8[512]{0}', space=vmem, size = 0x400, scoped, tag = 'input window, operand 4, single buffered']
    #allocation10 [shape = 's32[1]{0}', space=sflag, size = 0x4, scoped, tag = 'scoped memory for ffnn_forward.1']
    %10 = vsyncpa [#allocation5], 0
    %s11 = scalar_lea.sflag [#allocation5], 1
    %12 = vsyncpa %s11, 0
    %13 = vsyncpa [#allocation7], 0
    %14 = vsyncpa [#allocation10], 0
    loop: start=0, step=1, limit=4
    $region2: #{ffnn_forward.1} parent=1 // loop_pre_header
      _
    $region3: #{ffnn_forward.1} parent=1 // loop_header
      %s16 = sphi 0, %s20
      %p17 = scmp.ge.s32.totalorder %s16, 4
      %s23 = sphi 0, %s35
      %s24 = sphi 0, %s31
      %s25 = sphi 0, %s23
      %s26 = sphi 0, %s24
      %s27 = sphi 0, %s25
      %s28 = sphi 0, %s26
      %s40 = sphi 0, %s42
      %s43 = sphi 0, %s40
      %s44 = sphi 0, %s43
      %s60 = sphi 0, %s44
      %s66 = sphi 0, %s68
      %s69 = sphi 0, %s66
      %s70 = sphi 0, %s69
      %s86 = sphi 0, %s70
      %s90 = sphi 0, %s90
      %s92 = sphi 0, %s90
      %s93 = sphi 0, %s92
      %s107 = sphi 0, %s93
      %s111 = sphi 0, %s111
      %s113 = sphi 0, %s111
      %s114 = sphi 0, %s113
      %s128 = sphi 0, %s114
      %s132 = sphi 0, %s132
      %s134 = sphi 0, %s132
      %s135 = sphi 0, %s134
      %s149 = sphi 0, %s135
      %s155 = sphi 0, %s157
      %s158 = sphi 0, %s155
      %s159 = sphi 0, %s158
      %s175 = sphi 0, %s159
    $region4: #{ffnn_forward.1} parent=1 // loop_header_branch
      %19 = sbr.rel (%p17) target = $region8
    $region5: #{ffnn_forward.1} parent=1 // loop_body
      %s21 = ssub.s32 %s16, 1
      %s22 = ssub.s32 %s16, 2
      %s29 = sadd.s32 1, %s24
      %p30 = scmp.ge.s32.totalorder %s29, 2
      %s31 = scalar_select %p30, 0, %s29
      %s32 = sadd.s32 1, %s23
      %s33 = scalar_select %p30, %s32, %s23
      %p34 = scmp.ge.s32.totalorder %s33, 1
      %s35 = scalar_select %p34, 0, %s33
      %s36 = ssub.s32 %s23, %s35
      %s37 = ssub.s32 %s24, %s31
      %s38 = sor.u32 %s36, %s37
      %p39 = scmp.eq.s32.totalorder %s38, 0
      %s41 = sadd.s32 %s40, 1
      %s42 = scalar_select %p39, %s40, %s41
      %p45 = pneg %p39
      %p46 = scmp.eq.s32.totalorder %s16, 1
      %p47 = por %p45, %p46
      %p48 = scmp.ne.s32.totalorder %s40, %s43
      %p49 = scmp.eq.s32.totalorder %s16, 0
      %p50 = por %p48, %p49
      %p51 = scmp.ne.s32.totalorder %s40, %s43
      %p52 = scmp.eq.s32.totalorder %s21, 1
      %p53 = por %p51, %p52
      %p54 = scmp.ne.s32.totalorder %s43, %s44
      %p55 = scmp.eq.s32.totalorder %s21, 0
      %p56 = por %p54, %p55
      %p57 = scmp.ne.s32.totalorder %s43, %s44
      %p58 = scmp.eq.s32.totalorder %s22, 1
      %p59 = por %p57, %p58
      %p61 = scmp.ne.s32.totalorder %s44, %s60
      %p62 = scmp.eq.s32.totalorder %s22, 0
      %p63 = por %p61, %p62
      %s64 = ssub.s32 %s24, %s31
      %p65 = scmp.eq.s32.totalorder %s64, 0
      %s67 = sadd.s32 %s66, 1
      %s68 = scalar_select %p65, %s66, %s67
      %p71 = pneg %p65
      %p72 = scmp.eq.s32.totalorder %s16, 1
      %p73 = por %p71, %p72
      %p74 = scmp.ne.s32.totalorder %s66, %s69
      %p75 = scmp.eq.s32.totalorder %s16, 0
      %p76 = por %p74, %p75
      %p77 = scmp.ne.s32.totalorder %s66, %s69
      %p78 = scmp.eq.s32.totalorder %s21, 1
      %p79 = por %p77, %p78
      %p80 = scmp.ne.s32.totalorder %s69, %s70
      %p81 = scmp.eq.s32.totalorder %s21, 0
      %p82 = por %p80, %p81
      %p83 = scmp.ne.s32.totalorder %s69, %s70
      %p84 = scmp.eq.s32.totalorder %s22, 1
      %p85 = por %p83, %p84
      %p87 = scmp.ne.s32.totalorder %s70, %s86
      %p88 = scmp.eq.s32.totalorder %s22, 0
      %p89 = por %p87, %p88
      %s91 = sadd.s32 %s90, 1
      %p94 = scmp.eq.s32.totalorder %s16, 1
      %p95 = scmp.ne.s32.totalorder %s90, %s92
      %p96 = scmp.eq.s32.totalorder %s16, 0
      %p97 = por %p95, %p96
      %p98 = scmp.ne.s32.totalorder %s90, %s92
      %p99 = scmp.eq.s32.totalorder %s21, 1
      %p100 = por %p98, %p99
      %p101 = scmp.ne.s32.totalorder %s92, %s93
      %p102 = scmp.eq.s32.totalorder %s21, 0
      %p103 = por %p101, %p102
      %p104 = scmp.ne.s32.totalorder %s92, %s93
      %p105 = scmp.eq.s32.totalorder %s22, 1
      %p106 = por %p104, %p105
      %p108 = scmp.ne.s32.totalorder %s93, %s107
      %p109 = scmp.eq.s32.totalorder %s22, 0
      %p110 = por %p108, %p109
      %s112 = sadd.s32 %s111, 1
      %p115 = scmp.eq.s32.totalorder %s16, 1
      %p116 = scmp.ne.s32.totalorder %s111, %s113
      %p117 = scmp.eq.s32.totalorder %s16, 0
      %p118 = por %p116, %p117
      %p119 = scmp.ne.s32.totalorder %s111, %s113
      %p120 = scmp.eq.s32.totalorder %s21, 1
      %p121 = por %p119, %p120
      %p122 = scmp.ne.s32.totalorder %s113, %s114
      %p123 = scmp.eq.s32.totalorder %s21, 0
      %p124 = por %p122, %p123
      %p125 = scmp.ne.s32.totalorder %s113, %s114
      %p126 = scmp.eq.s32.totalorder %s22, 1
      %p127 = por %p125, %p126
      %p129 = scmp.ne.s32.totalorder %s114, %s128
      %p130 = scmp.eq.s32.totalorder %s22, 0
      %p131 = por %p129, %p130
      %s133 = sadd.s32 %s132, 1
      %p136 = scmp.eq.s32.totalorder %s16, 1
      %p137 = scmp.ne.s32.totalorder %s132, %s134
      %p138 = scmp.eq.s32.totalorder %s16, 0
      %p139 = por %p137, %p138
      %p140 = scmp.ne.s32.totalorder %s132, %s134
      %p141 = scmp.eq.s32.totalorder %s21, 1
      %p142 = por %p140, %p141
      %p143 = scmp.ne.s32.totalorder %s134, %s135
      %p144 = scmp.eq.s32.totalorder %s21, 0
      %p145 = por %p143, %p144
      %p146 = scmp.ne.s32.totalorder %s134, %s135
      %p147 = scmp.eq.s32.totalorder %s22, 1
      %p148 = por %p146, %p147
      %p150 = scmp.ne.s32.totalorder %s135, %s149
      %p151 = scmp.eq.s32.totalorder %s22, 0
      %p152 = por %p150, %p151
      %s153 = ssub.s32 %s23, %s35
      %p154 = scmp.eq.s32.totalorder %s153, 0
      %s156 = sadd.s32 %s155, 1
      %s157 = scalar_select %p154, %s155, %s156
      %p160 = pneg %p154
      %p161 = scmp.eq.s32.totalorder %s16, 1
      %p162 = por %p160, %p161
      %p163 = scmp.ne.s32.totalorder %s155, %s158
      %p164 = scmp.eq.s32.totalorder %s16, 0
      %p165 = por %p163, %p164
      %p166 = scmp.ne.s32.totalorder %s155, %s158
      %p167 = scmp.eq.s32.totalorder %s21, 1
      %p168 = por %p166, %p167
      %p169 = scmp.ne.s32.totalorder %s158, %s159
      %p170 = scmp.eq.s32.totalorder %s21, 0
      %p171 = por %p169, %p170
      %p172 = scmp.ne.s32.totalorder %s158, %s159
      %p173 = scmp.eq.s32.totalorder %s22, 1
      %p174 = por %p172, %p173
      %p176 = scmp.ne.s32.totalorder %s159, %s175
      %p177 = scmp.eq.s32.totalorder %s22, 0
      %p178 = por %p176, %p177
      %p179 = scmp.le.s32.totalorder 1, %s16
      %p180 = scmp.lt.s32.totalorder %s16, 3
      %p181 = pnand %p179, %p180
      %p182 = pneg %p181
      // Predicated region
      $region9: #{ffnn_forward.1} parent=5 // pred_check
        _
      $region10: #{ffnn_forward.1} parent=5 // pred_check_branch
        %184 = sbr.rel (%p181) target = $region12
      $region11: #{ffnn_forward.1} parent=5 // pred_region
        %s185 = ssub.s32 %s16, 1
        // Predicated region
        $region13: #{ffnn_forward.1} parent=11 // pred_check
          %p186 = pneg %p103
        $region14: #{ffnn_forward.1} parent=11 // pred_check_branch
          %188 = sbr.rel (%p186) target = $region16
        $region15: #{ffnn_forward.1} parent=11 // pred_region
          %s190 = ssub.s32 128, 128
          %191 = vsyncadd [#allocation7], %s190
          %s193 = sshll.u32 [#allocation6], 4
          %s194 = int_to_ptr.vmem [resolvable:$true] %s193
          %196 = dma.hbm_to_vmem [thread:$0]  %s2, 128, %s194, [#allocation7]
        $region16: #{ffnn_forward.1} parent=11 // pred_fallthru
          _
        // Predicated region
        $region17: #{ffnn_forward.1} parent=11 // pred_check
          %p197 = pneg %p124
        $region18: #{ffnn_forward.1} parent=11 // pred_check_branch
          %199 = sbr.rel (%p197) target = $region20
        $region19: #{ffnn_forward.1} parent=11 // pred_region
          %s201 = ssub.s32 8192, 8192
          %202 = vsyncadd [#allocation7], %s201
          %s203 = sshll.u32 [#allocation8], 4
          %s204 = int_to_ptr.vmem [resolvable:$true] %s203
          %209 = dma.hbm_to_vmem [thread:$0]  %s3, 8192, %s204, [#allocation7], 64, 64, 4
        $region20: #{ffnn_forward.1} parent=11 // pred_fallthru
          _
        // Predicated region
        $region21: #{ffnn_forward.1} parent=11 // pred_check
          %p210 = pneg %p145
        $region22: #{ffnn_forward.1} parent=11 // pred_check_branch
          %212 = sbr.rel (%p210) target = $region24
        $region23: #{ffnn_forward.1} parent=11 // pred_region
          %s214 = ssub.s32 16, 16
          %215 = vsyncadd [#allocation10], %s214
          %s217 = sshll.u32 [#allocation9], 4
          %s218 = int_to_ptr.vmem [resolvable:$true] %s217
          %220 = dma.hbm_to_vmem [thread:$0]  %s4, 16, %s218, [#allocation10]
        $region24: #{ffnn_forward.1} parent=11 // pred_fallthru
          _
      $region12: #{ffnn_forward.1} parent=5 // pred_fallthru
        _
      %p221 = scmp.lt.s32.totalorder %s16, 2
      // Predicated region
      $region25: #{ffnn_forward.1} parent=5 // pred_check
        %p222 = pneg %p221
      $region26: #{ffnn_forward.1} parent=5 // pred_check_branch
        %224 = sbr.rel (%p222) target = $region28
      $region27: #{ffnn_forward.1} parent=5 // pred_region
        // Predicated region
        $region29: #{ffnn_forward.1} parent=27 // pred_check
          %p225 = pneg %p50
        $region30: #{ffnn_forward.1} parent=27 // pred_check_branch
          %227 = sbr.rel (%p225) target = $region32
        $region31: #{ffnn_forward.1} parent=27 // pred_region
          %s228 = sand.u32 %s40, 1
          %s229 = sand.u32 %s40, 1
          %s230 = smul.addr %s229, 96
          %s231 = scalar_lea.vmem [#allocation3], %s230
          %s232 = smul.u32 2, %s23
          %s233 = smul.u32 12, %s24
          %s234 = smul.addr %s232, 24
          %s235 = sadd.s32 %s233, %s234
          %s236 = smul.addr %s235, 4
          %s237 = scalar_lea.vmem %s0, %s236
          // Predicated region
          $region33: #{ffnn_forward.1} parent=31 // pred_check
            _
          $region34: #{ffnn_forward.1} parent=31 // pred_check_branch
            %239 = sbr.rel (0) target = $region36
          $region35: #{ffnn_forward.1} parent=31 // pred_region
            // Predicated region
            $region37: #{ffnn_forward.1} parent=35 // pred_check
              _
            $region38: #{ffnn_forward.1} parent=35 // pred_check_branch
              %241 = sbr.rel (0) target = $region40
            $region39: #{ffnn_forward.1} parent=35 // pred_region
              loop: start=0, step=1, limit=1
              $region41: #{ffnn_forward.1} parent=39 // loop_pre_header
                _
              $region42: #{ffnn_forward.1} parent=39 // loop_header
                %s243 = sphi 0, %s247
                %p244 = scmp.ge.s32.totalorder %s243, 1
                %s248 = sphi %s237, %s237
                %s249 = sphi %s231, %s231
              $region43: #{ffnn_forward.1} parent=39 // loop_header_branch
                %246 = sbr.rel (%p244) target = $region47
              $region44: #{ffnn_forward.1} parent=39 // loop_body
                %v250 = vld [vmem:[%s248] sm:$0xff]
                %251 = vst [vmem:[%s249] sm:$0xff] %v250
                %v252 = vld [vmem:[%s248 + $0x8] sm:$0xff]
                %253 = vst [vmem:[%s249 + $0x8] sm:$0xff] %v252
                %v254 = vld [vmem:[%s248 + $0x10] sm:$0xff]
                %255 = vst [vmem:[%s249 + $0x10] sm:$0xff] %v254
                %v256 = vld [vmem:[%s248 + $0x18] sm:$0xff]
                %257 = vst [vmem:[%s249 + $0x18] sm:$0xff] %v256
                %v258 = vld [vmem:[%s248 + $0x20] sm:$0xff]
                %259 = vst [vmem:[%s249 + $0x20] sm:$0xff] %v258
                %v260 = vld [vmem:[%s248 + $0x28] sm:$0xff]
                %261 = vst [vmem:[%s249 + $0x28] sm:$0xff] %v260
                %v262 = vld [vmem:[%s248 + $0x60] sm:$0xff]
                %263 = vst [vmem:[%s249 + $0x30] sm:$0xff] %v262
                %v264 = vld [vmem:[%s248 + $0x68] sm:$0xff]
                %265 = vst [vmem:[%s249 + $0x38] sm:$0xff] %v264
                %v266 = vld [vmem:[%s248 + $0x70] sm:$0xff]
                %267 = vst [vmem:[%s249 + $0x40] sm:$0xff] %v266
                %v268 = vld [vmem:[%s248 + $0x78] sm:$0xff]
                %269 = vst [vmem:[%s249 + $0x48] sm:$0xff] %v268
                %v270 = vld [vmem:[%s248 + $0x80] sm:$0xff]
                %271 = vst [vmem:[%s249 + $0x50] sm:$0xff] %v270
                %v272 = vld [vmem:[%s248 + $0x88] sm:$0xff]
                %273 = vst [vmem:[%s249 + $0x58] sm:$0xff] %v272
              $region45: #{ffnn_forward.1} parent=39 // loop_footer
                %s247 = sadd.s32 1, %s243
              $region46: #{ffnn_forward.1} parent=39 // loop_footer_branch
                %242 = sbr.rel target = $region42
              $region47: #{ffnn_forward.1} parent=39 // loop_exit
                _
            $region40: #{ffnn_forward.1} parent=35 // pred_fallthru
              _
            // Predicated region
            $region48: #{ffnn_forward.1} parent=35 // pred_check
              _
            $region49: #{ffnn_forward.1} parent=35 // pred_check_branch
              %275 = sbr.rel target = $region51
            $region50: #{ffnn_forward.1} parent=35 // pred_region
              _
            $region51: #{ffnn_forward.1} parent=35 // pred_fallthru
              _
          $region36: #{ffnn_forward.1} parent=31 // pred_fallthru
            _
          %276 = vnop
        $region32: #{ffnn_forward.1} parent=27 // pred_fallthru
          _
        // Predicated region
        $region52: #{ffnn_forward.1} parent=27 // pred_check
          %p277 = pneg %p76
        $region53: #{ffnn_forward.1} parent=27 // pred_check_branch
          %279 = sbr.rel (%p277) target = $region55
        $region54: #{ffnn_forward.1} parent=27 // pred_region
          %s280 = sand.u32 %s66, 1
          %s281 = scalar_lea.sflag [#allocation5], %s280
          %s282 = sand.u32 %s66, 1
          %s283 = smul.addr %s282, 6144
          %s284 = scalar_lea.vmem [#allocation4], %s283
          %s285 = smul.u32 192, %s24
          %s287 = ssub.s32 98304, 98304
          %288 = vsyncadd %s281, %s287
          %s289 = smul.addr %s285, 8
          %s290 = smul.addr %s289, 64
          %s291 = scalar_lea.hbm %s1, %s290
          %s292 = sshll.u32 %s284, 4
          %s293 = int_to_ptr.vmem [resolvable:$true] %s292
          %298 = dma.hbm_to_vmem [thread:$0]  %s291, 98304, %s293, %s281, 512, 512, 32
        $region55: #{ffnn_forward.1} parent=27 // pred_fallthru
          _
      $region28: #{ffnn_forward.1} parent=5 // pred_fallthru
        _
      %p299 = scmp.le.s32.totalorder 1, %s16
      %p300 = scmp.lt.s32.totalorder %s16, 3
      %p301 = pnand %p299, %p300
      %p302 = pneg %p301
      // Predicated region
      $region56: #{ffnn_forward.1} parent=5 // pred_check
        _
      $region57: #{ffnn_forward.1} parent=5 // pred_check_branch
        %304 = sbr.rel (%p301) target = $region59
      $region58: #{ffnn_forward.1} parent=5 // pred_region
        %s305 = ssub.s32 %s16, 1
        %s306 = sand.u32 %s43, 1
        %s307 = sand.u32 %s43, 1
        %s308 = smul.addr %s307, 96
        %s309 = scalar_lea.vmem [#allocation3], %s308
        // Predicated region
        $region60: #{ffnn_forward.1} parent=58 // pred_check
          %p310 = pneg %p56
        $region61: #{ffnn_forward.1} parent=58 // pred_check_branch
          %312 = sbr.rel (%p310) target = $region63
        $region62: #{ffnn_forward.1} parent=58 // pred_region
          _
        $region63: #{ffnn_forward.1} parent=58 // pred_fallthru
          _
        %s313 = sand.u32 %s69, 1
        %s314 = scalar_lea.sflag [#allocation5], %s313
        %s315 = sand.u32 %s69, 1
        %s316 = smul.addr %s315, 6144
        %s317 = scalar_lea.vmem [#allocation4], %s316
        // Predicated region
        $region64: #{ffnn_forward.1} parent=58 // pred_check
          %p318 = pneg %p82
        $region65: #{ffnn_forward.1} parent=58 // pred_check_branch
          %320 = sbr.rel (%p318) target = $region67
        $region66: #{ffnn_forward.1} parent=58 // pred_region
          %321 = dma.done %s314, 98304
        $region67: #{ffnn_forward.1} parent=58 // pred_fallthru
          _
        // Predicated region
        $region68: #{ffnn_forward.1} parent=58 // pred_check
          %p322 = pneg %p103
        $region69: #{ffnn_forward.1} parent=58 // pred_check_branch
          %324 = sbr.rel (%p322) target = $region71
        $region70: #{ffnn_forward.1} parent=58 // pred_region
          %325 = dma.done [#allocation7], 128
        $region71: #{ffnn_forward.1} parent=58 // pred_fallthru
          _
        // Predicated region
        $region72: #{ffnn_forward.1} parent=58 // pred_check
          %p326 = pneg %p124
        $region73: #{ffnn_forward.1} parent=58 // pred_check_branch
          %328 = sbr.rel (%p326) target = $region75
        $region74: #{ffnn_forward.1} parent=58 // pred_region
          %329 = dma.done [#allocation7], 8192
        $region75: #{ffnn_forward.1} parent=58 // pred_fallthru
          _
        // Predicated region
        $region76: #{ffnn_forward.1} parent=58 // pred_check
          %p330 = pneg %p145
        $region77: #{ffnn_forward.1} parent=58 // pred_check_branch
          %332 = sbr.rel (%p330) target = $region79
        $region78: #{ffnn_forward.1} parent=58 // pred_region
          %333 = dma.done [#allocation10], 16
        $region79: #{ffnn_forward.1} parent=58 // pred_fallthru
          _
        %s334 = sand.u32 %s43, 1
        %s335 = sand.u32 %s43, 1
        %s336 = smul.addr %s335, 96
        %s337 = scalar_lea.vmem [#allocation3], %s336
        %p338 = pneg %p56
        %p339 = pneg %p53
        %s340 = sand.u32 %s69, 1
        %s341 = scalar_lea.sflag [#allocation5], %s340
        %s342 = sand.u32 %s69, 1
        %s343 = smul.addr %s342, 6144
        %s344 = scalar_lea.vmem [#allocation4], %s343
        %p345 = pneg %p82
        %p346 = pneg %p79
        %p347 = pneg %p103
        %p348 = pneg %p100
        %p349 = pneg %p124
        %p350 = pneg %p121
        %p351 = pneg %p145
        %p352 = pneg %p142
        %p353 = pneg %p171
        %p354 = pneg %p168
        %s355 = smul.u32 2, %s25
        %p356 = scmp.lt.s32.totalorder %s355, 1
        %s357 = scalar_select %p356, %s355, 1
        %s358 = smul.addr %s357, 8
        %s359 = scalar_lea.vmem %s5, %s358
        %s360 = smul.u32 2, %s25
        %s361 = smul.u32 12, %s26
        %s362 = smul.u32 192, %s26
        %s363 = smul.u32 2, %s25
        %p364 = scmp.lt.s32.totalorder %s363, 1
        %s365 = scalar_select %p364, %s363, 1
        %s366 = smul.addr %s365, 8
        %s367 = scalar_lea.vmem %s5, %s366
        %s368 = smul.u32 2, %s25
        %p370 = scmp.eq.s32.totalorder %s26, 0
        // Predicated region
        $region80: #{ffnn_forward.1} parent=58 // pred_check
          %p371 = pneg %p370
        $region81: #{ffnn_forward.1} parent=58 // pred_check_branch
          %373 = sbr.rel (%p371) target = $region83
        $region82: #{ffnn_forward.1} parent=58 // pred_region
          %374 = vst [vmem:[#allocation2] sm:$0xff] 0.0
          %375 = vst [vmem:[#allocation2 + $0x8] sm:$0xff] 0.0
          %376 = vst [vmem:[#allocation2 + $0x10] sm:$0xff] 0.0
          %377 = vst [vmem:[#allocation2 + $0x18] sm:$0xff] 0.0
          %378 = vst [vmem:[#allocation2 + $0x20] sm:$0xff] 0.0
          %379 = vst [vmem:[#allocation2 + $0x28] sm:$0xff] 0.0
          %380 = vst [vmem:[#allocation2 + $0x30] sm:$0xff] 0.0
          %381 = vst [vmem:[#allocation2 + $0x38] sm:$0xff] 0.0
          %382 = vst [vmem:[#allocation2 + $0x40] sm:$0xff] 0.0
          %383 = vst [vmem:[#allocation2 + $0x48] sm:$0xff] 0.0
          %384 = vst [vmem:[#allocation2 + $0x50] sm:$0xff] 0.0
          %385 = vst [vmem:[#allocation2 + $0x58] sm:$0xff] 0.0
          %386 = vst [vmem:[#allocation2 + $0x60] sm:$0xff] 0.0
          %387 = vst [vmem:[#allocation2 + $0x68] sm:$0xff] 0.0
          %388 = vst [vmem:[#allocation2 + $0x70] sm:$0xff] 0.0
          %389 = vst [vmem:[#allocation2 + $0x78] sm:$0xff] 0.0
        $region83: #{ffnn_forward.1} parent=58 // pred_fallthru
          _
        %v390 = vld [vmem:[#allocation2] sm:$0xff]
        %v391 = vld [vmem:[#allocation2 + $0x8] sm:$0xff]
        %v392 = vld [vmem:[#allocation2 + $0x10] sm:$0xff]
        %v393 = vld [vmem:[#allocation2 + $0x18] sm:$0xff]
        %v394 = vld [vmem:[#allocation2 + $0x20] sm:$0xff]
        %v395 = vld [vmem:[#allocation2 + $0x28] sm:$0xff]
        %v396 = vld [vmem:[#allocation2 + $0x30] sm:$0xff]
        %v397 = vld [vmem:[#allocation2 + $0x38] sm:$0xff]
        %v398 = vld [vmem:[#allocation2 + $0x40] sm:$0xff]
        %v399 = vld [vmem:[#allocation2 + $0x48] sm:$0xff]
        %v400 = vld [vmem:[#allocation2 + $0x50] sm:$0xff]
        %v401 = vld [vmem:[#allocation2 + $0x58] sm:$0xff]
        %v402 = vld [vmem:[#allocation2 + $0x60] sm:$0xff]
        %v403 = vld [vmem:[#allocation2 + $0x68] sm:$0xff]
        %v404 = vld [vmem:[#allocation2 + $0x70] sm:$0xff]
        %v405 = vld [vmem:[#allocation2 + $0x78] sm:$0xff]
        %v406 = vld [vmem:[%s309] sm:$0xff]
        %v407 = vld [vmem:[%s309 + $0x8] sm:$0xff]
        %v408 = vld [vmem:[%s309 + $0x10] sm:$0xff]
        %v409 = vld [vmem:[%s309 + $0x18] sm:$0xff]
        %v410 = vld [vmem:[%s309 + $0x20] sm:$0xff]
        %v411 = vld [vmem:[%s309 + $0x28] sm:$0xff]
        %v412 = vld [vmem:[%s309 + $0x30] sm:$0xff]
        %v413 = vld [vmem:[%s309 + $0x38] sm:$0xff]
        %v414 = vld [vmem:[%s309 + $0x40] sm:$0xff]
        %v415 = vld [vmem:[%s309 + $0x48] sm:$0xff]
        %v416 = vld [vmem:[%s309 + $0x50] sm:$0xff]
        %v417 = vld [vmem:[%s309 + $0x58] sm:$0xff]
        %v418 = vld [vmem:[%s317] sm:$0xff]
        %v419 = vld [vmem:[%s317 + $0x8] sm:$0xff]
        %v420 = vld [vmem:[%s317 + $0x10] sm:$0xff]
        %v421 = vld [vmem:[%s317 + $0x18] sm:$0xff]
        %v422 = vld [vmem:[%s317 + $0x20] sm:$0xff]
        %v423 = vld [vmem:[%s317 + $0x28] sm:$0xff]
        %v424 = vld [vmem:[%s317 + $0x30] sm:$0xff]
        %v425 = vld [vmem:[%s317 + $0x38] sm:$0xff]
        %v426 = vld [vmem:[%s317 + $0x40] sm:$0xff]
        %v427 = vld [vmem:[%s317 + $0x48] sm:$0xff]
        %v428 = vld [vmem:[%s317 + $0x50] sm:$0xff]
        %v429 = vld [vmem:[%s317 + $0x58] sm:$0xff]
        %v430 = vld [vmem:[%s317 + $0x60] sm:$0xff]
        %v431 = vld [vmem:[%s317 + $0x68] sm:$0xff]
        %v432 = vld [vmem:[%s317 + $0x70] sm:$0xff]
        %v433 = vld [vmem:[%s317 + $0x78] sm:$0xff]
        %v434 = vld [vmem:[%s317 + $0x80] sm:$0xff]
        %v435 = vld [vmem:[%s317 + $0x88] sm:$0xff]
        %v436 = vld [vmem:[%s317 + $0x90] sm:$0xff]
        %v437 = vld [vmem:[%s317 + $0x98] sm:$0xff]
        %v438 = vld [vmem:[%s317 + $0xa0] sm:$0xff]
        %v439 = vld [vmem:[%s317 + $0xa8] sm:$0xff]
        %v440 = vld [vmem:[%s317 + $0xb0] sm:$0xff]
        %v441 = vld [vmem:[%s317 + $0xb8] sm:$0xff]
        %v442 = vld [vmem:[%s317 + $0xc0] sm:$0xff]
        %v443 = vld [vmem:[%s317 + $0xc8] sm:$0xff]
        %v444 = vld [vmem:[%s317 + $0xd0] sm:$0xff]
        %v445 = vld [vmem:[%s317 + $0xd8] sm:$0xff]
        %v446 = vld [vmem:[%s317 + $0xe0] sm:$0xff]
        %v447 = vld [vmem:[%s317 + $0xe8] sm:$0xff]
        %v448 = vld [vmem:[%s317 + $0xf0] sm:$0xff]
        %v449 = vld [vmem:[%s317 + $0xf8] sm:$0xff]
        %v450 = vld [vmem:[%s317 + $0x100] sm:$0xff]
        %v451 = vld [vmem:[%s317 + $0x108] sm:$0xff]
        %v452 = vld [vmem:[%s317 + $0x110] sm:$0xff]
        %v453 = vld [vmem:[%s317 + $0x118] sm:$0xff]
        %v454 = vld [vmem:[%s317 + $0x120] sm:$0xff]
        %v455 = vld [vmem:[%s317 + $0x128] sm:$0xff]
        %v456 = vld [vmem:[%s317 + $0x130] sm:$0xff]
        %v457 = vld [vmem:[%s317 + $0x138] sm:$0xff]
        %v458 = vld [vmem:[%s317 + $0x140] sm:$0xff]
        %v459 = vld [vmem:[%s317 + $0x148] sm:$0xff]
        %v460 = vld [vmem:[%s317 + $0x150] sm:$0xff]
        %v461 = vld [vmem:[%s317 + $0x158] sm:$0xff]
        %v462 = vld [vmem:[%s317 + $0x160] sm:$0xff]
        %v463 = vld [vmem:[%s317 + $0x168] sm:$0xff]
        %v464 = vld [vmem:[%s317 + $0x170] sm:$0xff]
        %v465 = vld [vmem:[%s317 + $0x178] sm:$0xff]
        %v466 = vld [vmem:[%s317 + $0x180] sm:$0xff]
        %v467 = vld [vmem:[%s317 + $0x188] sm:$0xff]
        %v468 = vld [vmem:[%s317 + $0x190] sm:$0xff]
        %v469 = vld [vmem:[%s317 + $0x198] sm:$0xff]
        %v470 = vld [vmem:[%s317 + $0x1a0] sm:$0xff]
        %v471 = vld [vmem:[%s317 + $0x1a8] sm:$0xff]
        %v472 = vld [vmem:[%s317 + $0x1b0] sm:$0xff]
        %v473 = vld [vmem:[%s317 + $0x1b8] sm:$0xff]
        %v474 = vld [vmem:[%s317 + $0x1c0] sm:$0xff]
        %v475 = vld [vmem:[%s317 + $0x1c8] sm:$0xff]
        %v476 = vld [vmem:[%s317 + $0x1d0] sm:$0xff]
        %v477 = vld [vmem:[%s317 + $0x1d8] sm:$0xff]
        %v478 = vld [vmem:[%s317 + $0x1e0] sm:$0xff]
        %v479 = vld [vmem:[%s317 + $0x1e8] sm:$0xff]
        %v480 = vld [vmem:[%s317 + $0x1f0] sm:$0xff]
        %v481 = vld [vmem:[%s317 + $0x1f8] sm:$0xff]
        %v482 = vld [vmem:[%s317 + $0x200] sm:$0xff]
        %v483 = vld [vmem:[%s317 + $0x208] sm:$0xff]
        %v484 = vld [vmem:[%s317 + $0x210] sm:$0xff]
        %v485 = vld [vmem:[%s317 + $0x218] sm:$0xff]
        %v486 = vld [vmem:[%s317 + $0x220] sm:$0xff]
        %v487 = vld [vmem:[%s317 + $0x228] sm:$0xff]
        %v488 = vld [vmem:[%s317 + $0x230] sm:$0xff]
        %v489 = vld [vmem:[%s317 + $0x238] sm:$0xff]
        %v490 = vld [vmem:[%s317 + $0x240] sm:$0xff]
        %v491 = vld [vmem:[%s317 + $0x248] sm:$0xff]
        %v492 = vld [vmem:[%s317 + $0x250] sm:$0xff]
        %v493 = vld [vmem:[%s317 + $0x258] sm:$0xff]
        %v494 = vld [vmem:[%s317 + $0x260] sm:$0xff]
        %v495 = vld [vmem:[%s317 + $0x268] sm:$0xff]
        %v496 = vld [vmem:[%s317 + $0x270] sm:$0xff]
        %v497 = vld [vmem:[%s317 + $0x278] sm:$0xff]
        %v498 = vld [vmem:[%s317 + $0x280] sm:$0xff]
        %v499 = vld [vmem:[%s317 + $0x288] sm:$0xff]
        %v500 = vld [vmem:[%s317 + $0x290] sm:$0xff]
        %v501 = vld [vmem:[%s317 + $0x298] sm:$0xff]
        %v502 = vld [vmem:[%s317 + $0x2a0] sm:$0xff]
        %v503 = vld [vmem:[%s317 + $0x2a8] sm:$0xff]
        %v504 = vld [vmem:[%s317 + $0x2b0] sm:$0xff]
        %v505 = vld [vmem:[%s317 + $0x2b8] sm:$0xff]
        %v506 = vld [vmem:[%s317 + $0x2c0] sm:$0xff]
        %v507 = vld [vmem:[%s317 + $0x2c8] sm:$0xff]
        %v508 = vld [vmem:[%s317 + $0x2d0] sm:$0xff]
        %v509 = vld [vmem:[%s317 + $0x2d8] sm:$0xff]
        %v510 = vld [vmem:[%s317 + $0x2e0] sm:$0xff]
        %v511 = vld [vmem:[%s317 + $0x2e8] sm:$0xff]
        %v512 = vld [vmem:[%s317 + $0x2f0] sm:$0xff]
        %v513 = vld [vmem:[%s317 + $0x2f8] sm:$0xff]
        %v514 = vld [vmem:[%s317 + $0x300] sm:$0xff]
        %v515 = vld [vmem:[%s317 + $0x308] sm:$0xff]
        %v516 = vld [vmem:[%s317 + $0x310] sm:$0xff]
        %v517 = vld [vmem:[%s317 + $0x318] sm:$0xff]
        %v518 = vld [vmem:[%s317 + $0x320] sm:$0xff]
        %v519 = vld [vmem:[%s317 + $0x328] sm:$0xff]
        %v520 = vld [vmem:[%s317 + $0x330] sm:$0xff]
        %v521 = vld [vmem:[%s317 + $0x338] sm:$0xff]
        %v522 = vld [vmem:[%s317 + $0x340] sm:$0xff]
        %v523 = vld [vmem:[%s317 + $0x348] sm:$0xff]
        %v524 = vld [vmem:[%s317 + $0x350] sm:$0xff]
        %v525 = vld [vmem:[%s317 + $0x358] sm:$0xff]
        %v526 = vld [vmem:[%s317 + $0x360] sm:$0xff]
        %v527 = vld [vmem:[%s317 + $0x368] sm:$0xff]
        %v528 = vld [vmem:[%s317 + $0x370] sm:$0xff]
        %v529 = vld [vmem:[%s317 + $0x378] sm:$0xff]
        %v530 = vld [vmem:[%s317 + $0x380] sm:$0xff]
        %v531 = vld [vmem:[%s317 + $0x388] sm:$0xff]
        %v532 = vld [vmem:[%s317 + $0x390] sm:$0xff]
        %v533 = vld [vmem:[%s317 + $0x398] sm:$0xff]
        %v534 = vld [vmem:[%s317 + $0x3a0] sm:$0xff]
        %v535 = vld [vmem:[%s317 + $0x3a8] sm:$0xff]
        %v536 = vld [vmem:[%s317 + $0x3b0] sm:$0xff]
        %v537 = vld [vmem:[%s317 + $0x3b8] sm:$0xff]
        %v538 = vld [vmem:[%s317 + $0x3c0] sm:$0xff]
        %v539 = vld [vmem:[%s317 + $0x3c8] sm:$0xff]
        %v540 = vld [vmem:[%s317 + $0x3d0] sm:$0xff]
        %v541 = vld [vmem:[%s317 + $0x3d8] sm:$0xff]
        %v542 = vld [vmem:[%s317 + $0x3e0] sm:$0xff]
        %v543 = vld [vmem:[%s317 + $0x3e8] sm:$0xff]
        %v544 = vld [vmem:[%s317 + $0x3f0] sm:$0xff]
        %v545 = vld [vmem:[%s317 + $0x3f8] sm:$0xff]
        %v546 = vld [vmem:[%s317 + $0x400] sm:$0xff]
        %v547 = vld [vmem:[%s317 + $0x408] sm:$0xff]
        %v548 = vld [vmem:[%s317 + $0x410] sm:$0xff]
        %v549 = vld [vmem:[%s317 + $0x418] sm:$0xff]
        %v550 = vld [vmem:[%s317 + $0x420] sm:$0xff]
        %v551 = vld [vmem:[%s317 + $0x428] sm:$0xff]
        %v552 = vld [vmem:[%s317 + $0x430] sm:$0xff]
        %v553 = vld [vmem:[%s317 + $0x438] sm:$0xff]
        %v554 = vld [vmem:[%s317 + $0x440] sm:$0xff]
        %v555 = vld [vmem:[%s317 + $0x448] sm:$0xff]
        %v556 = vld [vmem:[%s317 + $0x450] sm:$0xff]
        %v557 = vld [vmem:[%s317 + $0x458] sm:$0xff]
        %v558 = vld [vmem:[%s317 + $0x460] sm:$0xff]
        %v559 = vld [vmem:[%s317 + $0x468] sm:$0xff]
        %v560 = vld [vmem:[%s317 + $0x470] sm:$0xff]
        %v561 = vld [vmem:[%s317 + $0x478] sm:$0xff]
        %v562 = vld [vmem:[%s317 + $0x480] sm:$0xff]
        %v563 = vld [vmem:[%s317 + $0x488] sm:$0xff]
        %v564 = vld [vmem:[%s317 + $0x490] sm:$0xff]
        %v565 = vld [vmem:[%s317 + $0x498] sm:$0xff]
        %v566 = vld [vmem:[%s317 + $0x4a0] sm:$0xff]
        %v567 = vld [vmem:[%s317 + $0x4a8] sm:$0xff]
        %v568 = vld [vmem:[%s317 + $0x4b0] sm:$0xff]
        %v569 = vld [vmem:[%s317 + $0x4b8] sm:$0xff]
        %v570 = vld [vmem:[%s317 + $0x4c0] sm:$0xff]
        %v571 = vld [vmem:[%s317 + $0x4c8] sm:$0xff]
        %v572 = vld [vmem:[%s317 + $0x4d0] sm:$0xff]
        %v573 = vld [vmem:[%s317 + $0x4d8] sm:$0xff]
        %v574 = vld [vmem:[%s317 + $0x4e0] sm:$0xff]
        %v575 = vld [vmem:[%s317 + $0x4e8] sm:$0xff]
        %v576 = vld [vmem:[%s317 + $0x4f0] sm:$0xff]
        %v577 = vld [vmem:[%s317 + $0x4f8] sm:$0xff]
        %v578 = vld [vmem:[%s317 + $0x500] sm:$0xff]
        %v579 = vld [vmem:[%s317 + $0x508] sm:$0xff]
        %v580 = vld [vmem:[%s317 + $0x510] sm:$0xff]
        %v581 = vld [vmem:[%s317 + $0x518] sm:$0xff]
        %v582 = vld [vmem:[%s317 + $0x520] sm:$0xff]
        %v583 = vld [vmem:[%s317 + $0x528] sm:$0xff]
        %v584 = vld [vmem:[%s317 + $0x530] sm:$0xff]
        %v585 = vld [vmem:[%s317 + $0x538] sm:$0xff]
        %v586 = vld [vmem:[%s317 + $0x540] sm:$0xff]
        %v587 = vld [vmem:[%s317 + $0x548] sm:$0xff]
        %v588 = vld [vmem:[%s317 + $0x550] sm:$0xff]
        %v589 = vld [vmem:[%s317 + $0x558] sm:$0xff]
        %v590 = vld [vmem:[%s317 + $0x560] sm:$0xff]
        %v591 = vld [vmem:[%s317 + $0x568] sm:$0xff]
        %v592 = vld [vmem:[%s317 + $0x570] sm:$0xff]
        %v593 = vld [vmem:[%s317 + $0x578] sm:$0xff]
        %v594 = vld [vmem:[%s317 + $0x580] sm:$0xff]
        %v595 = vld [vmem:[%s317 + $0x588] sm:$0xff]
        %v596 = vld [vmem:[%s317 + $0x590] sm:$0xff]
        %v597 = vld [vmem:[%s317 + $0x598] sm:$0xff]
        %v598 = vld [vmem:[%s317 + $0x5a0] sm:$0xff]
        %v599 = vld [vmem:[%s317 + $0x5a8] sm:$0xff]
        %v600 = vld [vmem:[%s317 + $0x5b0] sm:$0xff]
        %v601 = vld [vmem:[%s317 + $0x5b8] sm:$0xff]
        %v602 = vld [vmem:[%s317 + $0x5c0] sm:$0xff]
        %v603 = vld [vmem:[%s317 + $0x5c8] sm:$0xff]
        %v604 = vld [vmem:[%s317 + $0x5d0] sm:$0xff]
        %v605 = vld [vmem:[%s317 + $0x5d8] sm:$0xff]
        %v606 = vld [vmem:[%s317 + $0x5e0] sm:$0xff]
        %v607 = vld [vmem:[%s317 + $0x5e8] sm:$0xff]
        %v608 = vld [vmem:[%s317 + $0x5f0] sm:$0xff]
        %v609 = vld [vmem:[%s317 + $0x5f8] sm:$0xff]
        %v610 = vld [vmem:[%s317 + $0x600] sm:$0xff]
        %v611 = vld [vmem:[%s317 + $0x608] sm:$0xff]
        %v612 = vld [vmem:[%s317 + $0x610] sm:$0xff]
        %v613 = vld [vmem:[%s317 + $0x618] sm:$0xff]
        %v614 = vld [vmem:[%s317 + $0x620] sm:$0xff]
        %v615 = vld [vmem:[%s317 + $0x628] sm:$0xff]
        %v616 = vld [vmem:[%s317 + $0x630] sm:$0xff]
        %v617 = vld [vmem:[%s317 + $0x638] sm:$0xff]
        %v618 = vld [vmem:[%s317 + $0x640] sm:$0xff]
        %v619 = vld [vmem:[%s317 + $0x648] sm:$0xff]
        %v620 = vld [vmem:[%s317 + $0x650] sm:$0xff]
        %v621 = vld [vmem:[%s317 + $0x658] sm:$0xff]
        %v622 = vld [vmem:[%s317 + $0x660] sm:$0xff]
        %v623 = vld [vmem:[%s317 + $0x668] sm:$0xff]
        %v624 = vld [vmem:[%s317 + $0x670] sm:$0xff]
        %v625 = vld [vmem:[%s317 + $0x678] sm:$0xff]
        %v626 = vld [vmem:[%s317 + $0x680] sm:$0xff]
        %v627 = vld [vmem:[%s317 + $0x688] sm:$0xff]
        %v628 = vld [vmem:[%s317 + $0x690] sm:$0xff]
        %v629 = vld [vmem:[%s317 + $0x698] sm:$0xff]
        %v630 = vld [vmem:[%s317 + $0x6a0] sm:$0xff]
        %v631 = vld [vmem:[%s317 + $0x6a8] sm:$0xff]
        %v632 = vld [vmem:[%s317 + $0x6b0] sm:$0xff]
        %v633 = vld [vmem:[%s317 + $0x6b8] sm:$0xff]
        %v634 = vld [vmem:[%s317 + $0x6c0] sm:$0xff]
        %v635 = vld [vmem:[%s317 + $0x6c8] sm:$0xff]
        %v636 = vld [vmem:[%s317 + $0x6d0] sm:$0xff]
        %v637 = vld [vmem:[%s317 + $0x6d8] sm:$0xff]
        %v638 = vld [vmem:[%s317 + $0x6e0] sm:$0xff]
        %v639 = vld [vmem:[%s317 + $0x6e8] sm:$0xff]
        %v640 = vld [vmem:[%s317 + $0x6f0] sm:$0xff]
        %v641 = vld [vmem:[%s317 + $0x6f8] sm:$0xff]
        %v642 = vld [vmem:[%s317 + $0x700] sm:$0xff]
        %v643 = vld [vmem:[%s317 + $0x708] sm:$0xff]
        %v644 = vld [vmem:[%s317 + $0x710] sm:$0xff]
        %v645 = vld [vmem:[%s317 + $0x718] sm:$0xff]
        %v646 = vld [vmem:[%s317 + $0x720] sm:$0xff]
        %v647 = vld [vmem:[%s317 + $0x728] sm:$0xff]
        %v648 = vld [vmem:[%s317 + $0x730] sm:$0xff]
        %v649 = vld [vmem:[%s317 + $0x738] sm:$0xff]
        %v650 = vld [vmem:[%s317 + $0x740] sm:$0xff]
        %v651 = vld [vmem:[%s317 + $0x748] sm:$0xff]
        %v652 = vld [vmem:[%s317 + $0x750] sm:$0xff]
        %v653 = vld [vmem:[%s317 + $0x758] sm:$0xff]
        %v654 = vld [vmem:[%s317 + $0x760] sm:$0xff]
        %v655 = vld [vmem:[%s317 + $0x768] sm:$0xff]
        %v656 = vld [vmem:[%s317 + $0x770] sm:$0xff]
        %v657 = vld [vmem:[%s317 + $0x778] sm:$0xff]
        %v658 = vld [vmem:[%s317 + $0x780] sm:$0xff]
        %v659 = vld [vmem:[%s317 + $0x788] sm:$0xff]
        %v660 = vld [vmem:[%s317 + $0x790] sm:$0xff]
        %v661 = vld [vmem:[%s317 + $0x798] sm:$0xff]
        %v662 = vld [vmem:[%s317 + $0x7a0] sm:$0xff]
        %v663 = vld [vmem:[%s317 + $0x7a8] sm:$0xff]
        %v664 = vld [vmem:[%s317 + $0x7b0] sm:$0xff]
        %v665 = vld [vmem:[%s317 + $0x7b8] sm:$0xff]
        %v666 = vld [vmem:[%s317 + $0x7c0] sm:$0xff]
        %v667 = vld [vmem:[%s317 + $0x7c8] sm:$0xff]
        %v668 = vld [vmem:[%s317 + $0x7d0] sm:$0xff]
        %v669 = vld [vmem:[%s317 + $0x7d8] sm:$0xff]
        %v670 = vld [vmem:[%s317 + $0x7e0] sm:$0xff]
        %v671 = vld [vmem:[%s317 + $0x7e8] sm:$0xff]
        %v672 = vld [vmem:[%s317 + $0x7f0] sm:$0xff]
        %v673 = vld [vmem:[%s317 + $0x7f8] sm:$0xff]
        %v674 = vld [vmem:[%s317 + $0x800] sm:$0xff]
        %v675 = vld [vmem:[%s317 + $0x808] sm:$0xff]
        %v676 = vld [vmem:[%s317 + $0x810] sm:$0xff]
        %v677 = vld [vmem:[%s317 + $0x818] sm:$0xff]
        %v678 = vld [vmem:[%s317 + $0x820] sm:$0xff]
        %v679 = vld [vmem:[%s317 + $0x828] sm:$0xff]
        %v680 = vld [vmem:[%s317 + $0x830] sm:$0xff]
        %v681 = vld [vmem:[%s317 + $0x838] sm:$0xff]
        %v682 = vld [vmem:[%s317 + $0x840] sm:$0xff]
        %v683 = vld [vmem:[%s317 + $0x848] sm:$0xff]
        %v684 = vld [vmem:[%s317 + $0x850] sm:$0xff]
        %v685 = vld [vmem:[%s317 + $0x858] sm:$0xff]
        %v686 = vld [vmem:[%s317 + $0x860] sm:$0xff]
        %v687 = vld [vmem:[%s317 + $0x868] sm:$0xff]
        %v688 = vld [vmem:[%s317 + $0x870] sm:$0xff]
        %v689 = vld [vmem:[%s317 + $0x878] sm:$0xff]
        %v690 = vld [vmem:[%s317 + $0x880] sm:$0xff]
        %v691 = vld [vmem:[%s317 + $0x888] sm:$0xff]
        %v692 = vld [vmem:[%s317 + $0x890] sm:$0xff]
        %v693 = vld [vmem:[%s317 + $0x898] sm:$0xff]
        %v694 = vld [vmem:[%s317 + $0x8a0] sm:$0xff]
        %v695 = vld [vmem:[%s317 + $0x8a8] sm:$0xff]
        %v696 = vld [vmem:[%s317 + $0x8b0] sm:$0xff]
        %v697 = vld [vmem:[%s317 + $0x8b8] sm:$0xff]
        %v698 = vld [vmem:[%s317 + $0x8c0] sm:$0xff]
        %v699 = vld [vmem:[%s317 + $0x8c8] sm:$0xff]
        %v700 = vld [vmem:[%s317 + $0x8d0] sm:$0xff]
        %v701 = vld [vmem:[%s317 + $0x8d8] sm:$0xff]
        %v702 = vld [vmem:[%s317 + $0x8e0] sm:$0xff]
        %v703 = vld [vmem:[%s317 + $0x8e8] sm:$0xff]
        %v704 = vld [vmem:[%s317 + $0x8f0] sm:$0xff]
        %v705 = vld [vmem:[%s317 + $0x8f8] sm:$0xff]
        %v706 = vld [vmem:[%s317 + $0x900] sm:$0xff]
        %v707 = vld [vmem:[%s317 + $0x908] sm:$0xff]
        %v708 = vld [vmem:[%s317 + $0x910] sm:$0xff]
        %v709 = vld [vmem:[%s317 + $0x918] sm:$0xff]
        %v710 = vld [vmem:[%s317 + $0x920] sm:$0xff]
        %v711 = vld [vmem:[%s317 + $0x928] sm:$0xff]
        %v712 = vld [vmem:[%s317 + $0x930] sm:$0xff]
        %v713 = vld [vmem:[%s317 + $0x938] sm:$0xff]
        %v714 = vld [vmem:[%s317 + $0x940] sm:$0xff]
        %v715 = vld [vmem:[%s317 + $0x948] sm:$0xff]
        %v716 = vld [vmem:[%s317 + $0x950] sm:$0xff]
        %v717 = vld [vmem:[%s317 + $0x958] sm:$0xff]
        %v718 = vld [vmem:[%s317 + $0x960] sm:$0xff]
        %v719 = vld [vmem:[%s317 + $0x968] sm:$0xff]
        %v720 = vld [vmem:[%s317 + $0x970] sm:$0xff]
        %v721 = vld [vmem:[%s317 + $0x978] sm:$0xff]
        %v722 = vld [vmem:[%s317 + $0x980] sm:$0xff]
        %v723 = vld [vmem:[%s317 + $0x988] sm:$0xff]
        %v724 = vld [vmem:[%s317 + $0x990] sm:$0xff]
        %v725 = vld [vmem:[%s317 + $0x998] sm:$0xff]
        %v726 = vld [vmem:[%s317 + $0x9a0] sm:$0xff]
        %v727 = vld [vmem:[%s317 + $0x9a8] sm:$0xff]
        %v728 = vld [vmem:[%s317 + $0x9b0] sm:$0xff]
        %v729 = vld [vmem:[%s317 + $0x9b8] sm:$0xff]
        %v730 = vld [vmem:[%s317 + $0x9c0] sm:$0xff]
        %v731 = vld [vmem:[%s317 + $0x9c8] sm:$0xff]
        %v732 = vld [vmem:[%s317 + $0x9d0] sm:$0xff]
        %v733 = vld [vmem:[%s317 + $0x9d8] sm:$0xff]
        %v734 = vld [vmem:[%s317 + $0x9e0] sm:$0xff]
        %v735 = vld [vmem:[%s317 + $0x9e8] sm:$0xff]
        %v736 = vld [vmem:[%s317 + $0x9f0] sm:$0xff]
        %v737 = vld [vmem:[%s317 + $0x9f8] sm:$0xff]
        %v738 = vld [vmem:[%s317 + $0xa00] sm:$0xff]
        %v739 = vld [vmem:[%s317 + $0xa08] sm:$0xff]
        %v740 = vld [vmem:[%s317 + $0xa10] sm:$0xff]
        %v741 = vld [vmem:[%s317 + $0xa18] sm:$0xff]
        %v742 = vld [vmem:[%s317 + $0xa20] sm:$0xff]
        %v743 = vld [vmem:[%s317 + $0xa28] sm:$0xff]
        %v744 = vld [vmem:[%s317 + $0xa30] sm:$0xff]
        %v745 = vld [vmem:[%s317 + $0xa38] sm:$0xff]
        %v746 = vld [vmem:[%s317 + $0xa40] sm:$0xff]
        %v747 = vld [vmem:[%s317 + $0xa48] sm:$0xff]
        %v748 = vld [vmem:[%s317 + $0xa50] sm:$0xff]
        %v749 = vld [vmem:[%s317 + $0xa58] sm:$0xff]
        %v750 = vld [vmem:[%s317 + $0xa60] sm:$0xff]
        %v751 = vld [vmem:[%s317 + $0xa68] sm:$0xff]
        %v752 = vld [vmem:[%s317 + $0xa70] sm:$0xff]
        %v753 = vld [vmem:[%s317 + $0xa78] sm:$0xff]
        %v754 = vld [vmem:[%s317 + $0xa80] sm:$0xff]
        %v755 = vld [vmem:[%s317 + $0xa88] sm:$0xff]
        %v756 = vld [vmem:[%s317 + $0xa90] sm:$0xff]
        %v757 = vld [vmem:[%s317 + $0xa98] sm:$0xff]
        %v758 = vld [vmem:[%s317 + $0xaa0] sm:$0xff]
        %v759 = vld [vmem:[%s317 + $0xaa8] sm:$0xff]
        %v760 = vld [vmem:[%s317 + $0xab0] sm:$0xff]
        %v761 = vld [vmem:[%s317 + $0xab8] sm:$0xff]
        %v762 = vld [vmem:[%s317 + $0xac0] sm:$0xff]
        %v763 = vld [vmem:[%s317 + $0xac8] sm:$0xff]
        %v764 = vld [vmem:[%s317 + $0xad0] sm:$0xff]
        %v765 = vld [vmem:[%s317 + $0xad8] sm:$0xff]
        %v766 = vld [vmem:[%s317 + $0xae0] sm:$0xff]
        %v767 = vld [vmem:[%s317 + $0xae8] sm:$0xff]
        %v768 = vld [vmem:[%s317 + $0xaf0] sm:$0xff]
        %v769 = vld [vmem:[%s317 + $0xaf8] sm:$0xff]
        %v770 = vld [vmem:[%s317 + $0xb00] sm:$0xff]
        %v771 = vld [vmem:[%s317 + $0xb08] sm:$0xff]
        %v772 = vld [vmem:[%s317 + $0xb10] sm:$0xff]
        %v773 = vld [vmem:[%s317 + $0xb18] sm:$0xff]
        %v774 = vld [vmem:[%s317 + $0xb20] sm:$0xff]
        %v775 = vld [vmem:[%s317 + $0xb28] sm:$0xff]
        %v776 = vld [vmem:[%s317 + $0xb30] sm:$0xff]
        %v777 = vld [vmem:[%s317 + $0xb38] sm:$0xff]
        %v778 = vld [vmem:[%s317 + $0xb40] sm:$0xff]
        %v779 = vld [vmem:[%s317 + $0xb48] sm:$0xff]
        %v780 = vld [vmem:[%s317 + $0xb50] sm:$0xff]
        %v781 = vld [vmem:[%s317 + $0xb58] sm:$0xff]
        %v782 = vld [vmem:[%s317 + $0xb60] sm:$0xff]
        %v783 = vld [vmem:[%s317 + $0xb68] sm:$0xff]
        %v784 = vld [vmem:[%s317 + $0xb70] sm:$0xff]
        %v785 = vld [vmem:[%s317 + $0xb78] sm:$0xff]
        %v786 = vld [vmem:[%s317 + $0xb80] sm:$0xff]
        %v787 = vld [vmem:[%s317 + $0xb88] sm:$0xff]
        %v788 = vld [vmem:[%s317 + $0xb90] sm:$0xff]
        %v789 = vld [vmem:[%s317 + $0xb98] sm:$0xff]
        %v790 = vld [vmem:[%s317 + $0xba0] sm:$0xff]
        %v791 = vld [vmem:[%s317 + $0xba8] sm:$0xff]
        %v792 = vld [vmem:[%s317 + $0xbb0] sm:$0xff]
        %v793 = vld [vmem:[%s317 + $0xbb8] sm:$0xff]
        %v794 = vld [vmem:[%s317 + $0xbc0] sm:$0xff]
        %v795 = vld [vmem:[%s317 + $0xbc8] sm:$0xff]
        %v796 = vld [vmem:[%s317 + $0xbd0] sm:$0xff]
        %v797 = vld [vmem:[%s317 + $0xbd8] sm:$0xff]
        %v798 = vld [vmem:[%s317 + $0xbe0] sm:$0xff]
        %v799 = vld [vmem:[%s317 + $0xbe8] sm:$0xff]
        %v800 = vld [vmem:[%s317 + $0xbf0] sm:$0xff]
        %v801 = vld [vmem:[%s317 + $0xbf8] sm:$0xff]
        %v802 = vld [vmem:[%s317 + $0xc00] sm:$0xff]
        %v803 = vld [vmem:[%s317 + $0xc08] sm:$0xff]
        %v804 = vld [vmem:[%s317 + $0xc10] sm:$0xff]
        %v805 = vld [vmem:[%s317 + $0xc18] sm:$0xff]
        %v806 = vld [vmem:[%s317 + $0xc20] sm:$0xff]
        %v807 = vld [vmem:[%s317 + $0xc28] sm:$0xff]
        %v808 = vld [vmem:[%s317 + $0xc30] sm:$0xff]
        %v809 = vld [vmem:[%s317 + $0xc38] sm:$0xff]
        %v810 = vld [vmem:[%s317 + $0xc40] sm:$0xff]
        %v811 = vld [vmem:[%s317 + $0xc48] sm:$0xff]
        %v812 = vld [vmem:[%s317 + $0xc50] sm:$0xff]
        %v813 = vld [vmem:[%s317 + $0xc58] sm:$0xff]
        %v814 = vld [vmem:[%s317 + $0xc60] sm:$0xff]
        %v815 = vld [vmem:[%s317 + $0xc68] sm:$0xff]
        %v816 = vld [vmem:[%s317 + $0xc70] sm:$0xff]
        %v817 = vld [vmem:[%s317 + $0xc78] sm:$0xff]
        %v818 = vld [vmem:[%s317 + $0xc80] sm:$0xff]
        %v819 = vld [vmem:[%s317 + $0xc88] sm:$0xff]
        %v820 = vld [vmem:[%s317 + $0xc90] sm:$0xff]
        %v821 = vld [vmem:[%s317 + $0xc98] sm:$0xff]
        %v822 = vld [vmem:[%s317 + $0xca0] sm:$0xff]
        %v823 = vld [vmem:[%s317 + $0xca8] sm:$0xff]
        %v824 = vld [vmem:[%s317 + $0xcb0] sm:$0xff]
        %v825 = vld [vmem:[%s317 + $0xcb8] sm:$0xff]
        %v826 = vld [vmem:[%s317 + $0xcc0] sm:$0xff]
        %v827 = vld [vmem:[%s317 + $0xcc8] sm:$0xff]
        %v828 = vld [vmem:[%s317 + $0xcd0] sm:$0xff]
        %v829 = vld [vmem:[%s317 + $0xcd8] sm:$0xff]
        %v830 = vld [vmem:[%s317 + $0xce0] sm:$0xff]
        %v831 = vld [vmem:[%s317 + $0xce8] sm:$0xff]
        %v832 = vld [vmem:[%s317 + $0xcf0] sm:$0xff]
        %v833 = vld [vmem:[%s317 + $0xcf8] sm:$0xff]
        %v834 = vld [vmem:[%s317 + $0xd00] sm:$0xff]
        %v835 = vld [vmem:[%s317 + $0xd08] sm:$0xff]
        %v836 = vld [vmem:[%s317 + $0xd10] sm:$0xff]
        %v837 = vld [vmem:[%s317 + $0xd18] sm:$0xff]
        %v838 = vld [vmem:[%s317 + $0xd20] sm:$0xff]
        %v839 = vld [vmem:[%s317 + $0xd28] sm:$0xff]
        %v840 = vld [vmem:[%s317 + $0xd30] sm:$0xff]
        %v841 = vld [vmem:[%s317 + $0xd38] sm:$0xff]
        %v842 = vld [vmem:[%s317 + $0xd40] sm:$0xff]
        %v843 = vld [vmem:[%s317 + $0xd48] sm:$0xff]
        %v844 = vld [vmem:[%s317 + $0xd50] sm:$0xff]
        %v845 = vld [vmem:[%s317 + $0xd58] sm:$0xff]
        %v846 = vld [vmem:[%s317 + $0xd60] sm:$0xff]
        %v847 = vld [vmem:[%s317 + $0xd68] sm:$0xff]
        %v848 = vld [vmem:[%s317 + $0xd70] sm:$0xff]
        %v849 = vld [vmem:[%s317 + $0xd78] sm:$0xff]
        %v850 = vld [vmem:[%s317 + $0xd80] sm:$0xff]
        %v851 = vld [vmem:[%s317 + $0xd88] sm:$0xff]
        %v852 = vld [vmem:[%s317 + $0xd90] sm:$0xff]
        %v853 = vld [vmem:[%s317 + $0xd98] sm:$0xff]
        %v854 = vld [vmem:[%s317 + $0xda0] sm:$0xff]
        %v855 = vld [vmem:[%s317 + $0xda8] sm:$0xff]
        %v856 = vld [vmem:[%s317 + $0xdb0] sm:$0xff]
        %v857 = vld [vmem:[%s317 + $0xdb8] sm:$0xff]
        %v858 = vld [vmem:[%s317 + $0xdc0] sm:$0xff]
        %v859 = vld [vmem:[%s317 + $0xdc8] sm:$0xff]
        %v860 = vld [vmem:[%s317 + $0xdd0] sm:$0xff]
        %v861 = vld [vmem:[%s317 + $0xdd8] sm:$0xff]
        %v862 = vld [vmem:[%s317 + $0xde0] sm:$0xff]
        %v863 = vld [vmem:[%s317 + $0xde8] sm:$0xff]
        %v864 = vld [vmem:[%s317 + $0xdf0] sm:$0xff]
        %v865 = vld [vmem:[%s317 + $0xdf8] sm:$0xff]
        %v866 = vld [vmem:[%s317 + $0xe00] sm:$0xff]
        %v867 = vld [vmem:[%s317 + $0xe08] sm:$0xff]
        %v868 = vld [vmem:[%s317 + $0xe10] sm:$0xff]
        %v869 = vld [vmem:[%s317 + $0xe18] sm:$0xff]
        %v870 = vld [vmem:[%s317 + $0xe20] sm:$0xff]
        %v871 = vld [vmem:[%s317 + $0xe28] sm:$0xff]
        %v872 = vld [vmem:[%s317 + $0xe30] sm:$0xff]
        %v873 = vld [vmem:[%s317 + $0xe38] sm:$0xff]
        %v874 = vld [vmem:[%s317 + $0xe40] sm:$0xff]
        %v875 = vld [vmem:[%s317 + $0xe48] sm:$0xff]
        %v876 = vld [vmem:[%s317 + $0xe50] sm:$0xff]
        %v877 = vld [vmem:[%s317 + $0xe58] sm:$0xff]
        %v878 = vld [vmem:[%s317 + $0xe60] sm:$0xff]
        %v879 = vld [vmem:[%s317 + $0xe68] sm:$0xff]
        %v880 = vld [vmem:[%s317 + $0xe70] sm:$0xff]
        %v881 = vld [vmem:[%s317 + $0xe78] sm:$0xff]
        %v882 = vld [vmem:[%s317 + $0xe80] sm:$0xff]
        %v883 = vld [vmem:[%s317 + $0xe88] sm:$0xff]
        %v884 = vld [vmem:[%s317 + $0xe90] sm:$0xff]
        %v885 = vld [vmem:[%s317 + $0xe98] sm:$0xff]
        %v886 = vld [vmem:[%s317 + $0xea0] sm:$0xff]
        %v887 = vld [vmem:[%s317 + $0xea8] sm:$0xff]
        %v888 = vld [vmem:[%s317 + $0xeb0] sm:$0xff]
        %v889 = vld [vmem:[%s317 + $0xeb8] sm:$0xff]
        %v890 = vld [vmem:[%s317 + $0xec0] sm:$0xff]
        %v891 = vld [vmem:[%s317 + $0xec8] sm:$0xff]
        %v892 = vld [vmem:[%s317 + $0xed0] sm:$0xff]
        %v893 = vld [vmem:[%s317 + $0xed8] sm:$0xff]
        %v894 = vld [vmem:[%s317 + $0xee0] sm:$0xff]
        %v895 = vld [vmem:[%s317 + $0xee8] sm:$0xff]
        %v896 = vld [vmem:[%s317 + $0xef0] sm:$0xff]
        %v897 = vld [vmem:[%s317 + $0xef8] sm:$0xff]
        %v898 = vld [vmem:[%s317 + $0xf00] sm:$0xff]
        %v899 = vld [vmem:[%s317 + $0xf08] sm:$0xff]
        %v900 = vld [vmem:[%s317 + $0xf10] sm:$0xff]
        %v901 = vld [vmem:[%s317 + $0xf18] sm:$0xff]
        %v902 = vld [vmem:[%s317 + $0xf20] sm:$0xff]
        %v903 = vld [vmem:[%s317 + $0xf28] sm:$0xff]
        %v904 = vld [vmem:[%s317 + $0xf30] sm:$0xff]
        %v905 = vld [vmem:[%s317 + $0xf38] sm:$0xff]
        %v906 = vld [vmem:[%s317 + $0xf40] sm:$0xff]
        %v907 = vld [vmem:[%s317 + $0xf48] sm:$0xff]
        %v908 = vld [vmem:[%s317 + $0xf50] sm:$0xff]
        %v909 = vld [vmem:[%s317 + $0xf58] sm:$0xff]
        %v910 = vld [vmem:[%s317 + $0xf60] sm:$0xff]
        %v911 = vld [vmem:[%s317 + $0xf68] sm:$0xff]
        %v912 = vld [vmem:[%s317 + $0xf70] sm:$0xff]
        %v913 = vld [vmem:[%s317 + $0xf78] sm:$0xff]
        %v914 = vld [vmem:[%s317 + $0xf80] sm:$0xff]
        %v915 = vld [vmem:[%s317 + $0xf88] sm:$0xff]
        %v916 = vld [vmem:[%s317 + $0xf90] sm:$0xff]
        %v917 = vld [vmem:[%s317 + $0xf98] sm:$0xff]
        %v918 = vld [vmem:[%s317 + $0xfa0] sm:$0xff]
        %v919 = vld [vmem:[%s317 + $0xfa8] sm:$0xff]
        %v920 = vld [vmem:[%s317 + $0xfb0] sm:$0xff]
        %v921 = vld [vmem:[%s317 + $0xfb8] sm:$0xff]
        %v922 = vld [vmem:[%s317 + $0xfc0] sm:$0xff]
        %v923 = vld [vmem:[%s317 + $0xfc8] sm:$0xff]
        %v924 = vld [vmem:[%s317 + $0xfd0] sm:$0xff]
        %v925 = vld [vmem:[%s317 + $0xfd8] sm:$0xff]
        %v926 = vld [vmem:[%s317 + $0xfe0] sm:$0xff]
        %v927 = vld [vmem:[%s317 + $0xfe8] sm:$0xff]
        %v928 = vld [vmem:[%s317 + $0xff0] sm:$0xff]
        %v929 = vld [vmem:[%s317 + $0xff8] sm:$0xff]
        %v930 = vld [vmem:[%s317 + $0x1000] sm:$0xff]
        %v931 = vld [vmem:[%s317 + $0x1008] sm:$0xff]
        %v932 = vld [vmem:[%s317 + $0x1010] sm:$0xff]
        %v933 = vld [vmem:[%s317 + $0x1018] sm:$0xff]
        %v934 = vld [vmem:[%s317 + $0x1020] sm:$0xff]
        %v935 = vld [vmem:[%s317 + $0x1028] sm:$0xff]
        %v936 = vld [vmem:[%s317 + $0x1030] sm:$0xff]
        %v937 = vld [vmem:[%s317 + $0x1038] sm:$0xff]
        %v938 = vld [vmem:[%s317 + $0x1040] sm:$0xff]
        %v939 = vld [vmem:[%s317 + $0x1048] sm:$0xff]
        %v940 = vld [vmem:[%s317 + $0x1050] sm:$0xff]
        %v941 = vld [vmem:[%s317 + $0x1058] sm:$0xff]
        %v942 = vld [vmem:[%s317 + $0x1060] sm:$0xff]
        %v943 = vld [vmem:[%s317 + $0x1068] sm:$0xff]
        %v944 = vld [vmem:[%s317 + $0x1070] sm:$0xff]
        %v945 = vld [vmem:[%s317 + $0x1078] sm:$0xff]
        %v946 = vld [vmem:[%s317 + $0x1080] sm:$0xff]
        %v947 = vld [vmem:[%s317 + $0x1088] sm:$0xff]
        %v948 = vld [vmem:[%s317 + $0x1090] sm:$0xff]
        %v949 = vld [vmem:[%s317 + $0x1098] sm:$0xff]
        %v950 = vld [vmem:[%s317 + $0x10a0] sm:$0xff]
        %v951 = vld [vmem:[%s317 + $0x10a8] sm:$0xff]
        %v952 = vld [vmem:[%s317 + $0x10b0] sm:$0xff]
        %v953 = vld [vmem:[%s317 + $0x10b8] sm:$0xff]
        %v954 = vld [vmem:[%s317 + $0x10c0] sm:$0xff]
        %v955 = vld [vmem:[%s317 + $0x10c8] sm:$0xff]
        %v956 = vld [vmem:[%s317 + $0x10d0] sm:$0xff]
        %v957 = vld [vmem:[%s317 + $0x10d8] sm:$0xff]
        %v958 = vld [vmem:[%s317 + $0x10e0] sm:$0xff]
        %v959 = vld [vmem:[%s317 + $0x10e8] sm:$0xff]
        %v960 = vld [vmem:[%s317 + $0x10f0] sm:$0xff]
        %v961 = vld [vmem:[%s317 + $0x10f8] sm:$0xff]
        %v962 = vld [vmem:[%s317 + $0x1100] sm:$0xff]
        %v963 = vld [vmem:[%s317 + $0x1108] sm:$0xff]
        %v964 = vld [vmem:[%s317 + $0x1110] sm:$0xff]
        %v965 = vld [vmem:[%s317 + $0x1118] sm:$0xff]
        %v966 = vld [vmem:[%s317 + $0x1120] sm:$0xff]
        %v967 = vld [vmem:[%s317 + $0x1128] sm:$0xff]
        %v968 = vld [vmem:[%s317 + $0x1130] sm:$0xff]
        %v969 = vld [vmem:[%s317 + $0x1138] sm:$0xff]
        %v970 = vld [vmem:[%s317 + $0x1140] sm:$0xff]
        %v971 = vld [vmem:[%s317 + $0x1148] sm:$0xff]
        %v972 = vld [vmem:[%s317 + $0x1150] sm:$0xff]
        %v973 = vld [vmem:[%s317 + $0x1158] sm:$0xff]
        %v974 = vld [vmem:[%s317 + $0x1160] sm:$0xff]
        %v975 = vld [vmem:[%s317 + $0x1168] sm:$0xff]
        %v976 = vld [vmem:[%s317 + $0x1170] sm:$0xff]
        %v977 = vld [vmem:[%s317 + $0x1178] sm:$0xff]
        %v978 = vld [vmem:[%s317 + $0x1180] sm:$0xff]
        %v979 = vld [vmem:[%s317 + $0x1188] sm:$0xff]
        %v980 = vld [vmem:[%s317 + $0x1190] sm:$0xff]
        %v981 = vld [vmem:[%s317 + $0x1198] sm:$0xff]
        %v982 = vld [vmem:[%s317 + $0x11a0] sm:$0xff]
        %v983 = vld [vmem:[%s317 + $0x11a8] sm:$0xff]
        %v984 = vld [vmem:[%s317 + $0x11b0] sm:$0xff]
        %v985 = vld [vmem:[%s317 + $0x11b8] sm:$0xff]
        %v986 = vld [vmem:[%s317 + $0x11c0] sm:$0xff]
        %v987 = vld [vmem:[%s317 + $0x11c8] sm:$0xff]
        %v988 = vld [vmem:[%s317 + $0x11d0] sm:$0xff]
        %v989 = vld [vmem:[%s317 + $0x11d8] sm:$0xff]
        %v990 = vld [vmem:[%s317 + $0x11e0] sm:$0xff]
        %v991 = vld [vmem:[%s317 + $0x11e8] sm:$0xff]
        %v992 = vld [vmem:[%s317 + $0x11f0] sm:$0xff]
        %v993 = vld [vmem:[%s317 + $0x11f8] sm:$0xff]
        %v994 = vld [vmem:[%s317 + $0x1200] sm:$0xff]
        %v995 = vld [vmem:[%s317 + $0x1208] sm:$0xff]
        %v996 = vld [vmem:[%s317 + $0x1210] sm:$0xff]
        %v997 = vld [vmem:[%s317 + $0x1218] sm:$0xff]
        %v998 = vld [vmem:[%s317 + $0x1220] sm:$0xff]
        %v999 = vld [vmem:[%s317 + $0x1228] sm:$0xff]
        %v1000 = vld [vmem:[%s317 + $0x1230] sm:$0xff]
        %v1001 = vld [vmem:[%s317 + $0x1238] sm:$0xff]
        %v1002 = vld [vmem:[%s317 + $0x1240] sm:$0xff]
        %v1003 = vld [vmem:[%s317 + $0x1248] sm:$0xff]
        %v1004 = vld [vmem:[%s317 + $0x1250] sm:$0xff]
        %v1005 = vld [vmem:[%s317 + $0x1258] sm:$0xff]
        %v1006 = vld [vmem:[%s317 + $0x1260] sm:$0xff]
        %v1007 = vld [vmem:[%s317 + $0x1268] sm:$0xff]
        %v1008 = vld [vmem:[%s317 + $0x1270] sm:$0xff]
        %v1009 = vld [vmem:[%s317 + $0x1278] sm:$0xff]
        %v1010 = vld [vmem:[%s317 + $0x1280] sm:$0xff]
        %v1011 = vld [vmem:[%s317 + $0x1288] sm:$0xff]
        %v1012 = vld [vmem:[%s317 + $0x1290] sm:$0xff]
        %v1013 = vld [vmem:[%s317 + $0x1298] sm:$0xff]
        %v1014 = vld [vmem:[%s317 + $0x12a0] sm:$0xff]
        %v1015 = vld [vmem:[%s317 + $0x12a8] sm:$0xff]
        %v1016 = vld [vmem:[%s317 + $0x12b0] sm:$0xff]
        %v1017 = vld [vmem:[%s317 + $0x12b8] sm:$0xff]
        %v1018 = vld [vmem:[%s317 + $0x12c0] sm:$0xff]
        %v1019 = vld [vmem:[%s317 + $0x12c8] sm:$0xff]
        %v1020 = vld [vmem:[%s317 + $0x12d0] sm:$0xff]
        %v1021 = vld [vmem:[%s317 + $0x12d8] sm:$0xff]
        %v1022 = vld [vmem:[%s317 + $0x12e0] sm:$0xff]
        %v1023 = vld [vmem:[%s317 + $0x12e8] sm:$0xff]
        %v1024 = vld [vmem:[%s317 + $0x12f0] sm:$0xff]
        %v1025 = vld [vmem:[%s317 + $0x12f8] sm:$0xff]
        %v1026 = vld [vmem:[%s317 + $0x1300] sm:$0xff]
        %v1027 = vld [vmem:[%s317 + $0x1308] sm:$0xff]
        %v1028 = vld [vmem:[%s317 + $0x1310] sm:$0xff]
        %v1029 = vld [vmem:[%s317 + $0x1318] sm:$0xff]
        %v1030 = vld [vmem:[%s317 + $0x1320] sm:$0xff]
        %v1031 = vld [vmem:[%s317 + $0x1328] sm:$0xff]
        %v1032 = vld [vmem:[%s317 + $0x1330] sm:$0xff]
        %v1033 = vld [vmem:[%s317 + $0x1338] sm:$0xff]
        %v1034 = vld [vmem:[%s317 + $0x1340] sm:$0xff]
        %v1035 = vld [vmem:[%s317 + $0x1348] sm:$0xff]
        %v1036 = vld [vmem:[%s317 + $0x1350] sm:$0xff]
        %v1037 = vld [vmem:[%s317 + $0x1358] sm:$0xff]
        %v1038 = vld [vmem:[%s317 + $0x1360] sm:$0xff]
        %v1039 = vld [vmem:[%s317 + $0x1368] sm:$0xff]
        %v1040 = vld [vmem:[%s317 + $0x1370] sm:$0xff]
        %v1041 = vld [vmem:[%s317 + $0x1378] sm:$0xff]
        %v1042 = vld [vmem:[%s317 + $0x1380] sm:$0xff]
        %v1043 = vld [vmem:[%s317 + $0x1388] sm:$0xff]
        %v1044 = vld [vmem:[%s317 + $0x1390] sm:$0xff]
        %v1045 = vld [vmem:[%s317 + $0x1398] sm:$0xff]
        %v1046 = vld [vmem:[%s317 + $0x13a0] sm:$0xff]
        %v1047 = vld [vmem:[%s317 + $0x13a8] sm:$0xff]
        %v1048 = vld [vmem:[%s317 + $0x13b0] sm:$0xff]
        %v1049 = vld [vmem:[%s317 + $0x13b8] sm:$0xff]
        %v1050 = vld [vmem:[%s317 + $0x13c0] sm:$0xff]
        %v1051 = vld [vmem:[%s317 + $0x13c8] sm:$0xff]
        %v1052 = vld [vmem:[%s317 + $0x13d0] sm:$0xff]
        %v1053 = vld [vmem:[%s317 + $0x13d8] sm:$0xff]
        %v1054 = vld [vmem:[%s317 + $0x13e0] sm:$0xff]
        %v1055 = vld [vmem:[%s317 + $0x13e8] sm:$0xff]
        %v1056 = vld [vmem:[%s317 + $0x13f0] sm:$0xff]
        %v1057 = vld [vmem:[%s317 + $0x13f8] sm:$0xff]
        %v1058 = vld [vmem:[%s317 + $0x1400] sm:$0xff]
        %v1059 = vld [vmem:[%s317 + $0x1408] sm:$0xff]
        %v1060 = vld [vmem:[%s317 + $0x1410] sm:$0xff]
        %v1061 = vld [vmem:[%s317 + $0x1418] sm:$0xff]
        %v1062 = vld [vmem:[%s317 + $0x1420] sm:$0xff]
        %v1063 = vld [vmem:[%s317 + $0x1428] sm:$0xff]
        %v1064 = vld [vmem:[%s317 + $0x1430] sm:$0xff]
        %v1065 = vld [vmem:[%s317 + $0x1438] sm:$0xff]
        %v1066 = vld [vmem:[%s317 + $0x1440] sm:$0xff]
        %v1067 = vld [vmem:[%s317 + $0x1448] sm:$0xff]
        %v1068 = vld [vmem:[%s317 + $0x1450] sm:$0xff]
        %v1069 = vld [vmem:[%s317 + $0x1458] sm:$0xff]
        %v1070 = vld [vmem:[%s317 + $0x1460] sm:$0xff]
        %v1071 = vld [vmem:[%s317 + $0x1468] sm:$0xff]
        %v1072 = vld [vmem:[%s317 + $0x1470] sm:$0xff]
        %v1073 = vld [vmem:[%s317 + $0x1478] sm:$0xff]
        %v1074 = vld [vmem:[%s317 + $0x1480] sm:$0xff]
        %v1075 = vld [vmem:[%s317 + $0x1488] sm:$0xff]
        %v1076 = vld [vmem:[%s317 + $0x1490] sm:$0xff]
        %v1077 = vld [vmem:[%s317 + $0x1498] sm:$0xff]
        %v1078 = vld [vmem:[%s317 + $0x14a0] sm:$0xff]
        %v1079 = vld [vmem:[%s317 + $0x14a8] sm:$0xff]
        %v1080 = vld [vmem:[%s317 + $0x14b0] sm:$0xff]
        %v1081 = vld [vmem:[%s317 + $0x14b8] sm:$0xff]
        %v1082 = vld [vmem:[%s317 + $0x14c0] sm:$0xff]
        %v1083 = vld [vmem:[%s317 + $0x14c8] sm:$0xff]
        %v1084 = vld [vmem:[%s317 + $0x14d0] sm:$0xff]
        %v1085 = vld [vmem:[%s317 + $0x14d8] sm:$0xff]
        %v1086 = vld [vmem:[%s317 + $0x14e0] sm:$0xff]
        %v1087 = vld [vmem:[%s317 + $0x14e8] sm:$0xff]
        %v1088 = vld [vmem:[%s317 + $0x14f0] sm:$0xff]
        %v1089 = vld [vmem:[%s317 + $0x14f8] sm:$0xff]
        %v1090 = vld [vmem:[%s317 + $0x1500] sm:$0xff]
        %v1091 = vld [vmem:[%s317 + $0x1508] sm:$0xff]
        %v1092 = vld [vmem:[%s317 + $0x1510] sm:$0xff]
        %v1093 = vld [vmem:[%s317 + $0x1518] sm:$0xff]
        %v1094 = vld [vmem:[%s317 + $0x1520] sm:$0xff]
        %v1095 = vld [vmem:[%s317 + $0x1528] sm:$0xff]
        %v1096 = vld [vmem:[%s317 + $0x1530] sm:$0xff]
        %v1097 = vld [vmem:[%s317 + $0x1538] sm:$0xff]
        %v1098 = vld [vmem:[%s317 + $0x1540] sm:$0xff]
        %v1099 = vld [vmem:[%s317 + $0x1548] sm:$0xff]
        %v1100 = vld [vmem:[%s317 + $0x1550] sm:$0xff]
        %v1101 = vld [vmem:[%s317 + $0x1558] sm:$0xff]
        %v1102 = vld [vmem:[%s317 + $0x1560] sm:$0xff]
        %v1103 = vld [vmem:[%s317 + $0x1568] sm:$0xff]
        %v1104 = vld [vmem:[%s317 + $0x1570] sm:$0xff]
        %v1105 = vld [vmem:[%s317 + $0x1578] sm:$0xff]
        %v1106 = vld [vmem:[%s317 + $0x1580] sm:$0xff]
        %v1107 = vld [vmem:[%s317 + $0x1588] sm:$0xff]
        %v1108 = vld [vmem:[%s317 + $0x1590] sm:$0xff]
        %v1109 = vld [vmem:[%s317 + $0x1598] sm:$0xff]
        %v1110 = vld [vmem:[%s317 + $0x15a0] sm:$0xff]
        %v1111 = vld [vmem:[%s317 + $0x15a8] sm:$0xff]
        %v1112 = vld [vmem:[%s317 + $0x15b0] sm:$0xff]
        %v1113 = vld [vmem:[%s317 + $0x15b8] sm:$0xff]
        %v1114 = vld [vmem:[%s317 + $0x15c0] sm:$0xff]
        %v1115 = vld [vmem:[%s317 + $0x15c8] sm:$0xff]
        %v1116 = vld [vmem:[%s317 + $0x15d0] sm:$0xff]
        %v1117 = vld [vmem:[%s317 + $0x15d8] sm:$0xff]
        %v1118 = vld [vmem:[%s317 + $0x15e0] sm:$0xff]
        %v1119 = vld [vmem:[%s317 + $0x15e8] sm:$0xff]
        %v1120 = vld [vmem:[%s317 + $0x15f0] sm:$0xff]
        %v1121 = vld [vmem:[%s317 + $0x15f8] sm:$0xff]
        %v1122 = vld [vmem:[%s317 + $0x1600] sm:$0xff]
        %v1123 = vld [vmem:[%s317 + $0x1608] sm:$0xff]
        %v1124 = vld [vmem:[%s317 + $0x1610] sm:$0xff]
        %v1125 = vld [vmem:[%s317 + $0x1618] sm:$0xff]
        %v1126 = vld [vmem:[%s317 + $0x1620] sm:$0xff]
        %v1127 = vld [vmem:[%s317 + $0x1628] sm:$0xff]
        %v1128 = vld [vmem:[%s317 + $0x1630] sm:$0xff]
        %v1129 = vld [vmem:[%s317 + $0x1638] sm:$0xff]
        %v1130 = vld [vmem:[%s317 + $0x1640] sm:$0xff]
        %v1131 = vld [vmem:[%s317 + $0x1648] sm:$0xff]
        %v1132 = vld [vmem:[%s317 + $0x1650] sm:$0xff]
        %v1133 = vld [vmem:[%s317 + $0x1658] sm:$0xff]
        %v1134 = vld [vmem:[%s317 + $0x1660] sm:$0xff]
        %v1135 = vld [vmem:[%s317 + $0x1668] sm:$0xff]
        %v1136 = vld [vmem:[%s317 + $0x1670] sm:$0xff]
        %v1137 = vld [vmem:[%s317 + $0x1678] sm:$0xff]
        %v1138 = vld [vmem:[%s317 + $0x1680] sm:$0xff]
        %v1139 = vld [vmem:[%s317 + $0x1688] sm:$0xff]
        %v1140 = vld [vmem:[%s317 + $0x1690] sm:$0xff]
        %v1141 = vld [vmem:[%s317 + $0x1698] sm:$0xff]
        %v1142 = vld [vmem:[%s317 + $0x16a0] sm:$0xff]
        %v1143 = vld [vmem:[%s317 + $0x16a8] sm:$0xff]
        %v1144 = vld [vmem:[%s317 + $0x16b0] sm:$0xff]
        %v1145 = vld [vmem:[%s317 + $0x16b8] sm:$0xff]
        %v1146 = vld [vmem:[%s317 + $0x16c0] sm:$0xff]
        %v1147 = vld [vmem:[%s317 + $0x16c8] sm:$0xff]
        %v1148 = vld [vmem:[%s317 + $0x16d0] sm:$0xff]
        %v1149 = vld [vmem:[%s317 + $0x16d8] sm:$0xff]
        %v1150 = vld [vmem:[%s317 + $0x16e0] sm:$0xff]
        %v1151 = vld [vmem:[%s317 + $0x16e8] sm:$0xff]
        %v1152 = vld [vmem:[%s317 + $0x16f0] sm:$0xff]
        %v1153 = vld [vmem:[%s317 + $0x16f8] sm:$0xff]
        %v1154 = vld [vmem:[%s317 + $0x1700] sm:$0xff]
        %v1155 = vld [vmem:[%s317 + $0x1708] sm:$0xff]
        %v1156 = vld [vmem:[%s317 + $0x1710] sm:$0xff]
        %v1157 = vld [vmem:[%s317 + $0x1718] sm:$0xff]
        %v1158 = vld [vmem:[%s317 + $0x1720] sm:$0xff]
        %v1159 = vld [vmem:[%s317 + $0x1728] sm:$0xff]
        %v1160 = vld [vmem:[%s317 + $0x1730] sm:$0xff]
        %v1161 = vld [vmem:[%s317 + $0x1738] sm:$0xff]
        %v1162 = vld [vmem:[%s317 + $0x1740] sm:$0xff]
        %v1163 = vld [vmem:[%s317 + $0x1748] sm:$0xff]
        %v1164 = vld [vmem:[%s317 + $0x1750] sm:$0xff]
        %v1165 = vld [vmem:[%s317 + $0x1758] sm:$0xff]
        %v1166 = vld [vmem:[%s317 + $0x1760] sm:$0xff]
        %v1167 = vld [vmem:[%s317 + $0x1768] sm:$0xff]
        %v1168 = vld [vmem:[%s317 + $0x1770] sm:$0xff]
        %v1169 = vld [vmem:[%s317 + $0x1778] sm:$0xff]
        %v1170 = vld [vmem:[%s317 + $0x1780] sm:$0xff]
        %v1171 = vld [vmem:[%s317 + $0x1788] sm:$0xff]
        %v1172 = vld [vmem:[%s317 + $0x1790] sm:$0xff]
        %v1173 = vld [vmem:[%s317 + $0x1798] sm:$0xff]
        %v1174 = vld [vmem:[%s317 + $0x17a0] sm:$0xff]
        %v1175 = vld [vmem:[%s317 + $0x17a8] sm:$0xff]
        %v1176 = vld [vmem:[%s317 + $0x17b0] sm:$0xff]
        %v1177 = vld [vmem:[%s317 + $0x17b8] sm:$0xff]
        %v1178 = vld [vmem:[%s317 + $0x17c0] sm:$0xff]
        %v1179 = vld [vmem:[%s317 + $0x17c8] sm:$0xff]
        %v1180 = vld [vmem:[%s317 + $0x17d0] sm:$0xff]
        %v1181 = vld [vmem:[%s317 + $0x17d8] sm:$0xff]
        %v1182 = vld [vmem:[%s317 + $0x17e0] sm:$0xff]
        %v1183 = vld [vmem:[%s317 + $0x17e8] sm:$0xff]
        %v1184 = vld [vmem:[%s317 + $0x17f0] sm:$0xff]
        %v1185 = vld [vmem:[%s317 + $0x17f8] sm:$0xff]
        %v1198 = vunpack.c.l.b16 %v406
        %v1199 = vunpack.c.h.b16 %v406
        %v1200 = vunpack.c.l.b16 %v407
        %v1201 = vunpack.c.h.b16 %v407
        %v1202 = vunpack.c.l.b16 %v408
        %v1203 = vunpack.c.h.b16 %v408
        %v1204 = vunpack.c.l.b16 %v409
        %v1205 = vunpack.c.h.b16 %v409
        %v1206 = vunpack.c.l.b16 %v410
        %v1207 = vunpack.c.h.b16 %v410
        %v1208 = vunpack.c.l.b16 %v411
        %v1209 = vunpack.c.h.b16 %v411
        %v1210 = vunpack.c.l.b16 %v412
        %v1211 = vunpack.c.h.b16 %v412
        %v1212 = vunpack.c.l.b16 %v413
        %v1213 = vunpack.c.h.b16 %v413
        %v1214 = vunpack.c.l.b16 %v414
        %v1215 = vunpack.c.h.b16 %v414
        %v1216 = vunpack.c.l.b16 %v415
        %v1217 = vunpack.c.h.b16 %v415
        %v1218 = vunpack.c.l.b16 %v416
        %v1219 = vunpack.c.h.b16 %v416
        %v1220 = vunpack.c.l.b16 %v417
        %v1221 = vunpack.c.h.b16 %v417
        %v1222 = vpack.c.b16 %v1210, %v1198
        %v1223 = vpack.c.b16 %v1211, %v1199
        %v1224 = vpack.c.b16 %v1212, %v1200
        %v1225 = vpack.c.b16 %v1213, %v1201
        %v1226 = vpack.c.b16 %v1214, %v1202
        %v1227 = vpack.c.b16 %v1215, %v1203
        %v1228 = vpack.c.b16 %v1216, %v1204
        %v1229 = vpack.c.b16 %v1217, %v1205
        %v1230 = vpack.c.b16 %v1218, %v1206
        %v1231 = vpack.c.b16 %v1219, %v1207
        %v1232 = vpack.c.b16 %v1220, %v1208
        %v1233 = vpack.c.b16 %v1221, %v1209
        %v2014 = vunpack.c.l.b16 %v418
        %v2015 = vunpack.c.h.b16 %v418
        %v2016 = vunpack.c.l.b16 %v419
        %v2017 = vunpack.c.h.b16 %v419
        %v2018 = vunpack.c.l.b16 %v420
        %v2019 = vunpack.c.h.b16 %v420
        %v2020 = vunpack.c.l.b16 %v421
        %v2021 = vunpack.c.h.b16 %v421
        %v2022 = vunpack.c.l.b16 %v422
        %v2023 = vunpack.c.h.b16 %v422
        %v2024 = vunpack.c.l.b16 %v423
        %v2025 = vunpack.c.h.b16 %v423
        %v2026 = vunpack.c.l.b16 %v424
        %v2027 = vunpack.c.h.b16 %v424
        %v2028 = vunpack.c.l.b16 %v425
        %v2029 = vunpack.c.h.b16 %v425
        %v2030 = vunpack.c.l.b16 %v426
        %v2031 = vunpack.c.h.b16 %v426
        %v2032 = vunpack.c.l.b16 %v427
        %v2033 = vunpack.c.h.b16 %v427
        %v2034 = vunpack.c.l.b16 %v428
        %v2035 = vunpack.c.h.b16 %v428
        %v2036 = vunpack.c.l.b16 %v429
        %v2037 = vunpack.c.h.b16 %v429
        %v2038 = vunpack.c.l.b16 %v430
        %v2039 = vunpack.c.h.b16 %v430
        %v2040 = vunpack.c.l.b16 %v431
        %v2041 = vunpack.c.h.b16 %v431
        %v2042 = vunpack.c.l.b16 %v432
        %v2043 = vunpack.c.h.b16 %v432
        %v2044 = vunpack.c.l.b16 %v433
        %v2045 = vunpack.c.h.b16 %v433
        %v2046 = vunpack.c.l.b16 %v434
        %v2047 = vunpack.c.h.b16 %v434
        %v2048 = vunpack.c.l.b16 %v435
        %v2049 = vunpack.c.h.b16 %v435
        %v2050 = vunpack.c.l.b16 %v436
        %v2051 = vunpack.c.h.b16 %v436
        %v2052 = vunpack.c.l.b16 %v437
        %v2053 = vunpack.c.h.b16 %v437
        %v2054 = vunpack.c.l.b16 %v438
        %v2055 = vunpack.c.h.b16 %v438
        %v2056 = vunpack.c.l.b16 %v439
        %v2057 = vunpack.c.h.b16 %v439
        %v2058 = vunpack.c.l.b16 %v440
        %v2059 = vunpack.c.h.b16 %v440
        %v2060 = vunpack.c.l.b16 %v441
        %v2061 = vunpack.c.h.b16 %v441
        %v2062 = vunpack.c.l.b16 %v442
        %v2063 = vunpack.c.h.b16 %v442
        %v2064 = vunpack.c.l.b16 %v443
        %v2065 = vunpack.c.h.b16 %v443
        %v2066 = vunpack.c.l.b16 %v444
        %v2067 = vunpack.c.h.b16 %v444
        %v2068 = vunpack.c.l.b16 %v445
        %v2069 = vunpack.c.h.b16 %v445
        %v2070 = vunpack.c.l.b16 %v446
        %v2071 = vunpack.c.h.b16 %v446
        %v2072 = vunpack.c.l.b16 %v447
        %v2073 = vunpack.c.h.b16 %v447
        %v2074 = vunpack.c.l.b16 %v448
        %v2075 = vunpack.c.h.b16 %v448
        %v2076 = vunpack.c.l.b16 %v449
        %v2077 = vunpack.c.h.b16 %v449
        %v2078 = vunpack.c.l.b16 %v450
        %v2079 = vunpack.c.h.b16 %v450
        %v2080 = vunpack.c.l.b16 %v451
        %v2081 = vunpack.c.h.b16 %v451
        %v2082 = vunpack.c.l.b16 %v452
        %v2083 = vunpack.c.h.b16 %v452
        %v2084 = vunpack.c.l.b16 %v453
        %v2085 = vunpack.c.h.b16 %v453
        %v2086 = vunpack.c.l.b16 %v454
        %v2087 = vunpack.c.h.b16 %v454
        %v2088 = vunpack.c.l.b16 %v455
        %v2089 = vunpack.c.h.b16 %v455
        %v2090 = vunpack.c.l.b16 %v456
        %v2091 = vunpack.c.h.b16 %v456
        %v2092 = vunpack.c.l.b16 %v457
        %v2093 = vunpack.c.h.b16 %v457
        %v2094 = vunpack.c.l.b16 %v458
        %v2095 = vunpack.c.h.b16 %v458
        %v2096 = vunpack.c.l.b16 %v459
        %v2097 = vunpack.c.h.b16 %v459
        %v2098 = vunpack.c.l.b16 %v460
        %v2099 = vunpack.c.h.b16 %v460
        %v2100 = vunpack.c.l.b16 %v461
        %v2101 = vunpack.c.h.b16 %v461
        %v2102 = vunpack.c.l.b16 %v462
        %v2103 = vunpack.c.h.b16 %v462
        %v2104 = vunpack.c.l.b16 %v463
        %v2105 = vunpack.c.h.b16 %v463
        %v2106 = vunpack.c.l.b16 %v464
        %v2107 = vunpack.c.h.b16 %v464
        %v2108 = vunpack.c.l.b16 %v465
        %v2109 = vunpack.c.h.b16 %v465
        %v2110 = vunpack.c.l.b16 %v466
        %v2111 = vunpack.c.h.b16 %v466
        %v2112 = vunpack.c.l.b16 %v467
        %v2113 = vunpack.c.h.b16 %v467
        %v2114 = vunpack.c.l.b16 %v468
        %v2115 = vunpack.c.h.b16 %v468
        %v2116 = vunpack.c.l.b16 %v469
        %v2117 = vunpack.c.h.b16 %v469
        %v2118 = vunpack.c.l.b16 %v470
        %v2119 = vunpack.c.h.b16 %v470
        %v2120 = vunpack.c.l.b16 %v471
        %v2121 = vunpack.c.h.b16 %v471
        %v2122 = vunpack.c.l.b16 %v472
        %v2123 = vunpack.c.h.b16 %v472
        %v2124 = vunpack.c.l.b16 %v473
        %v2125 = vunpack.c.h.b16 %v473
        %v2126 = vunpack.c.l.b16 %v474
        %v2127 = vunpack.c.h.b16 %v474
        %v2128 = vunpack.c.l.b16 %v475
        %v2129 = vunpack.c.h.b16 %v475
        %v2130 = vunpack.c.l.b16 %v476
        %v2131 = vunpack.c.h.b16 %v476
        %v2132 = vunpack.c.l.b16 %v477
        %v2133 = vunpack.c.h.b16 %v477
        %v2134 = vunpack.c.l.b16 %v478
        %v2135 = vunpack.c.h.b16 %v478
        %v2136 = vunpack.c.l.b16 %v479
        %v2137 = vunpack.c.h.b16 %v479
        %v2138 = vunpack.c.l.b16 %v480
        %v2139 = vunpack.c.h.b16 %v480
        %v2140 = vunpack.c.l.b16 %v481
        %v2141 = vunpack.c.h.b16 %v481
        %v2142 = vunpack.c.l.b16 %v482
        %v2143 = vunpack.c.h.b16 %v482
        %v2144 = vunpack.c.l.b16 %v483
        %v2145 = vunpack.c.h.b16 %v483
        %v2146 = vunpack.c.l.b16 %v484
        %v2147 = vunpack.c.h.b16 %v484
        %v2148 = vunpack.c.l.b16 %v485
        %v2149 = vunpack.c.h.b16 %v485
        %v2150 = vunpack.c.l.b16 %v486
        %v2151 = vunpack.c.h.b16 %v486
        %v2152 = vunpack.c.l.b16 %v487
        %v2153 = vunpack.c.h.b16 %v487
        %v2154 = vunpack.c.l.b16 %v488
        %v2155 = vunpack.c.h.b16 %v488
        %v2156 = vunpack.c.l.b16 %v489
        %v2157 = vunpack.c.h.b16 %v489
        %v2158 = vunpack.c.l.b16 %v490
        %v2159 = vunpack.c.h.b16 %v490
        %v2160 = vunpack.c.l.b16 %v491
        %v2161 = vunpack.c.h.b16 %v491
        %v2162 = vunpack.c.l.b16 %v492
        %v2163 = vunpack.c.h.b16 %v492
        %v2164 = vunpack.c.l.b16 %v493
        %v2165 = vunpack.c.h.b16 %v493
        %v2166 = vunpack.c.l.b16 %v494
        %v2167 = vunpack.c.h.b16 %v494
        %v2168 = vunpack.c.l.b16 %v495
        %v2169 = vunpack.c.h.b16 %v495
        %v2170 = vunpack.c.l.b16 %v496
        %v2171 = vunpack.c.h.b16 %v496
        %v2172 = vunpack.c.l.b16 %v497
        %v2173 = vunpack.c.h.b16 %v497
        %v2174 = vunpack.c.l.b16 %v498
        %v2175 = vunpack.c.h.b16 %v498
        %v2176 = vunpack.c.l.b16 %v499
        %v2177 = vunpack.c.h.b16 %v499
        %v2178 = vunpack.c.l.b16 %v500
        %v2179 = vunpack.c.h.b16 %v500
        %v2180 = vunpack.c.l.b16 %v501
        %v2181 = vunpack.c.h.b16 %v501
        %v2182 = vunpack.c.l.b16 %v502
        %v2183 = vunpack.c.h.b16 %v502
        %v2184 = vunpack.c.l.b16 %v503
        %v2185 = vunpack.c.h.b16 %v503
        %v2186 = vunpack.c.l.b16 %v504
        %v2187 = vunpack.c.h.b16 %v504
        %v2188 = vunpack.c.l.b16 %v505
        %v2189 = vunpack.c.h.b16 %v505
        %v2190 = vunpack.c.l.b16 %v506
        %v2191 = vunpack.c.h.b16 %v506
        %v2192 = vunpack.c.l.b16 %v507
        %v2193 = vunpack.c.h.b16 %v507
        %v2194 = vunpack.c.l.b16 %v508
        %v2195 = vunpack.c.h.b16 %v508
        %v2196 = vunpack.c.l.b16 %v509
        %v2197 = vunpack.c.h.b16 %v509
        %v2198 = vunpack.c.l.b16 %v510
        %v2199 = vunpack.c.h.b16 %v510
        %v2200 = vunpack.c.l.b16 %v511
        %v2201 = vunpack.c.h.b16 %v511
        %v2202 = vunpack.c.l.b16 %v512
        %v2203 = vunpack.c.h.b16 %v512
        %v2204 = vunpack.c.l.b16 %v513
        %v2205 = vunpack.c.h.b16 %v513
        %v2206 = vunpack.c.l.b16 %v514
        %v2207 = vunpack.c.h.b16 %v514
        %v2208 = vunpack.c.l.b16 %v515
        %v2209 = vunpack.c.h.b16 %v515
        %v2210 = vunpack.c.l.b16 %v516
        %v2211 = vunpack.c.h.b16 %v516
        %v2212 = vunpack.c.l.b16 %v517
        %v2213 = vunpack.c.h.b16 %v517
        %v2214 = vunpack.c.l.b16 %v518
        %v2215 = vunpack.c.h.b16 %v518
        %v2216 = vunpack.c.l.b16 %v519
        %v2217 = vunpack.c.h.b16 %v519
        %v2218 = vunpack.c.l.b16 %v520
        %v2219 = vunpack.c.h.b16 %v520
        %v2220 = vunpack.c.l.b16 %v521
        %v2221 = vunpack.c.h.b16 %v521
        %v2222 = vunpack.c.l.b16 %v522
        %v2223 = vunpack.c.h.b16 %v522
        %v2224 = vunpack.c.l.b16 %v523
        %v2225 = vunpack.c.h.b16 %v523
        %v2226 = vunpack.c.l.b16 %v524
        %v2227 = vunpack.c.h.b16 %v524
        %v2228 = vunpack.c.l.b16 %v525
        %v2229 = vunpack.c.h.b16 %v525
        %v2230 = vunpack.c.l.b16 %v526
        %v2231 = vunpack.c.h.b16 %v526
        %v2232 = vunpack.c.l.b16 %v527
        %v2233 = vunpack.c.h.b16 %v527
        %v2234 = vunpack.c.l.b16 %v528
        %v2235 = vunpack.c.h.b16 %v528
        %v2236 = vunpack.c.l.b16 %v529
        %v2237 = vunpack.c.h.b16 %v529
        %v2238 = vunpack.c.l.b16 %v530
        %v2239 = vunpack.c.h.b16 %v530
        %v2240 = vunpack.c.l.b16 %v531
        %v2241 = vunpack.c.h.b16 %v531
        %v2242 = vunpack.c.l.b16 %v532
        %v2243 = vunpack.c.h.b16 %v532
        %v2244 = vunpack.c.l.b16 %v533
        %v2245 = vunpack.c.h.b16 %v533
        %v2246 = vunpack.c.l.b16 %v534
        %v2247 = vunpack.c.h.b16 %v534
        %v2248 = vunpack.c.l.b16 %v535
        %v2249 = vunpack.c.h.b16 %v535
        %v2250 = vunpack.c.l.b16 %v536
        %v2251 = vunpack.c.h.b16 %v536
        %v2252 = vunpack.c.l.b16 %v537
        %v2253 = vunpack.c.h.b16 %v537
        %v2254 = vunpack.c.l.b16 %v538
        %v2255 = vunpack.c.h.b16 %v538
        %v2256 = vunpack.c.l.b16 %v539
        %v2257 = vunpack.c.h.b16 %v539
        %v2258 = vunpack.c.l.b16 %v540
        %v2259 = vunpack.c.h.b16 %v540
        %v2260 = vunpack.c.l.b16 %v541
        %v2261 = vunpack.c.h.b16 %v541
        %v2262 = vunpack.c.l.b16 %v542
        %v2263 = vunpack.c.h.b16 %v542
        %v2264 = vunpack.c.l.b16 %v543
        %v2265 = vunpack.c.h.b16 %v543
        %v2266 = vunpack.c.l.b16 %v544
        %v2267 = vunpack.c.h.b16 %v544
        %v2268 = vunpack.c.l.b16 %v545
        %v2269 = vunpack.c.h.b16 %v545
        %v2270 = vunpack.c.l.b16 %v546
        %v2271 = vunpack.c.h.b16 %v546
        %v2272 = vunpack.c.l.b16 %v547
        %v2273 = vunpack.c.h.b16 %v547
        %v2274 = vunpack.c.l.b16 %v548
        %v2275 = vunpack.c.h.b16 %v548
        %v2276 = vunpack.c.l.b16 %v549
        %v2277 = vunpack.c.h.b16 %v549
        %v2278 = vunpack.c.l.b16 %v550
        %v2279 = vunpack.c.h.b16 %v550
        %v2280 = vunpack.c.l.b16 %v551
        %v2281 = vunpack.c.h.b16 %v551
        %v2282 = vunpack.c.l.b16 %v552
        %v2283 = vunpack.c.h.b16 %v552
        %v2284 = vunpack.c.l.b16 %v553
        %v2285 = vunpack.c.h.b16 %v553
        %v2286 = vunpack.c.l.b16 %v554
        %v2287 = vunpack.c.h.b16 %v554
        %v2288 = vunpack.c.l.b16 %v555
        %v2289 = vunpack.c.h.b16 %v555
        %v2290 = vunpack.c.l.b16 %v556
        %v2291 = vunpack.c.h.b16 %v556
        %v2292 = vunpack.c.l.b16 %v557
        %v2293 = vunpack.c.h.b16 %v557
        %v2294 = vunpack.c.l.b16 %v558
        %v2295 = vunpack.c.h.b16 %v558
        %v2296 = vunpack.c.l.b16 %v559
        %v2297 = vunpack.c.h.b16 %v559
        %v2298 = vunpack.c.l.b16 %v560
        %v2299 = vunpack.c.h.b16 %v560
        %v2300 = vunpack.c.l.b16 %v561
        %v2301 = vunpack.c.h.b16 %v561
        %v2302 = vunpack.c.l.b16 %v562
        %v2303 = vunpack.c.h.b16 %v562
        %v2304 = vunpack.c.l.b16 %v563
        %v2305 = vunpack.c.h.b16 %v563
        %v2306 = vunpack.c.l.b16 %v564
        %v2307 = vunpack.c.h.b16 %v564
        %v2308 = vunpack.c.l.b16 %v565
        %v2309 = vunpack.c.h.b16 %v565
        %v2310 = vunpack.c.l.b16 %v566
        %v2311 = vunpack.c.h.b16 %v566
        %v2312 = vunpack.c.l.b16 %v567
        %v2313 = vunpack.c.h.b16 %v567
        %v2314 = vunpack.c.l.b16 %v568
        %v2315 = vunpack.c.h.b16 %v568
        %v2316 = vunpack.c.l.b16 %v569
        %v2317 = vunpack.c.h.b16 %v569
        %v2318 = vunpack.c.l.b16 %v570
        %v2319 = vunpack.c.h.b16 %v570
        %v2320 = vunpack.c.l.b16 %v571
        %v2321 = vunpack.c.h.b16 %v571
        %v2322 = vunpack.c.l.b16 %v572
        %v2323 = vunpack.c.h.b16 %v572
        %v2324 = vunpack.c.l.b16 %v573
        %v2325 = vunpack.c.h.b16 %v573
        %v2326 = vunpack.c.l.b16 %v574
        %v2327 = vunpack.c.h.b16 %v574
        %v2328 = vunpack.c.l.b16 %v575
        %v2329 = vunpack.c.h.b16 %v575
        %v2330 = vunpack.c.l.b16 %v576
        %v2331 = vunpack.c.h.b16 %v576
        %v2332 = vunpack.c.l.b16 %v577
        %v2333 = vunpack.c.h.b16 %v577
        %v2334 = vunpack.c.l.b16 %v578
        %v2335 = vunpack.c.h.b16 %v578
        %v2336 = vunpack.c.l.b16 %v579
        %v2337 = vunpack.c.h.b16 %v579
        %v2338 = vunpack.c.l.b16 %v580
        %v2339 = vunpack.c.h.b16 %v580
        %v2340 = vunpack.c.l.b16 %v581
        %v2341 = vunpack.c.h.b16 %v581
        %v2342 = vunpack.c.l.b16 %v582
        %v2343 = vunpack.c.h.b16 %v582
        %v2344 = vunpack.c.l.b16 %v583
        %v2345 = vunpack.c.h.b16 %v583
        %v2346 = vunpack.c.l.b16 %v584
        %v2347 = vunpack.c.h.b16 %v584
        %v2348 = vunpack.c.l.b16 %v585
        %v2349 = vunpack.c.h.b16 %v585
        %v2350 = vunpack.c.l.b16 %v586
        %v2351 = vunpack.c.h.b16 %v586
        %v2352 = vunpack.c.l.b16 %v587
        %v2353 = vunpack.c.h.b16 %v587
        %v2354 = vunpack.c.l.b16 %v588
        %v2355 = vunpack.c.h.b16 %v588
        %v2356 = vunpack.c.l.b16 %v589
        %v2357 = vunpack.c.h.b16 %v589
        %v2358 = vunpack.c.l.b16 %v590
        %v2359 = vunpack.c.h.b16 %v590
        %v2360 = vunpack.c.l.b16 %v591
        %v2361 = vunpack.c.h.b16 %v591
        %v2362 = vunpack.c.l.b16 %v592
        %v2363 = vunpack.c.h.b16 %v592
        %v2364 = vunpack.c.l.b16 %v593
        %v2365 = vunpack.c.h.b16 %v593
        %v2366 = vunpack.c.l.b16 %v594
        %v2367 = vunpack.c.h.b16 %v594
        %v2368 = vunpack.c.l.b16 %v595
        %v2369 = vunpack.c.h.b16 %v595
        %v2370 = vunpack.c.l.b16 %v596
        %v2371 = vunpack.c.h.b16 %v596
        %v2372 = vunpack.c.l.b16 %v597
        %v2373 = vunpack.c.h.b16 %v597
        %v2374 = vunpack.c.l.b16 %v598
        %v2375 = vunpack.c.h.b16 %v598
        %v2376 = vunpack.c.l.b16 %v599
        %v2377 = vunpack.c.h.b16 %v599
        %v2378 = vunpack.c.l.b16 %v600
        %v2379 = vunpack.c.h.b16 %v600
        %v2380 = vunpack.c.l.b16 %v601
        %v2381 = vunpack.c.h.b16 %v601
        %v2382 = vunpack.c.l.b16 %v602
        %v2383 = vunpack.c.h.b16 %v602
        %v2384 = vunpack.c.l.b16 %v603
        %v2385 = vunpack.c.h.b16 %v603
        %v2386 = vunpack.c.l.b16 %v604
        %v2387 = vunpack.c.h.b16 %v604
        %v2388 = vunpack.c.l.b16 %v605
        %v2389 = vunpack.c.h.b16 %v605
        %v2390 = vunpack.c.l.b16 %v606
        %v2391 = vunpack.c.h.b16 %v606
        %v2392 = vunpack.c.l.b16 %v607
        %v2393 = vunpack.c.h.b16 %v607
        %v2394 = vunpack.c.l.b16 %v608
        %v2395 = vunpack.c.h.b16 %v608
        %v2396 = vunpack.c.l.b16 %v609
        %v2397 = vunpack.c.h.b16 %v609
        %v2398 = vunpack.c.l.b16 %v610
        %v2399 = vunpack.c.h.b16 %v610
        %v2400 = vunpack.c.l.b16 %v611
        %v2401 = vunpack.c.h.b16 %v611
        %v2402 = vunpack.c.l.b16 %v612
        %v2403 = vunpack.c.h.b16 %v612
        %v2404 = vunpack.c.l.b16 %v613
        %v2405 = vunpack.c.h.b16 %v613
        %v2406 = vunpack.c.l.b16 %v614
        %v2407 = vunpack.c.h.b16 %v614
        %v2408 = vunpack.c.l.b16 %v615
        %v2409 = vunpack.c.h.b16 %v615
        %v2410 = vunpack.c.l.b16 %v616
        %v2411 = vunpack.c.h.b16 %v616
        %v2412 = vunpack.c.l.b16 %v617
        %v2413 = vunpack.c.h.b16 %v617
        %v2414 = vunpack.c.l.b16 %v618
        %v2415 = vunpack.c.h.b16 %v618
        %v2416 = vunpack.c.l.b16 %v619
        %v2417 = vunpack.c.h.b16 %v619
        %v2418 = vunpack.c.l.b16 %v620
        %v2419 = vunpack.c.h.b16 %v620
        %v2420 = vunpack.c.l.b16 %v621
        %v2421 = vunpack.c.h.b16 %v621
        %v2422 = vunpack.c.l.b16 %v622
        %v2423 = vunpack.c.h.b16 %v622
        %v2424 = vunpack.c.l.b16 %v623
        %v2425 = vunpack.c.h.b16 %v623
        %v2426 = vunpack.c.l.b16 %v624
        %v2427 = vunpack.c.h.b16 %v624
        %v2428 = vunpack.c.l.b16 %v625
        %v2429 = vunpack.c.h.b16 %v625
        %v2430 = vunpack.c.l.b16 %v626
        %v2431 = vunpack.c.h.b16 %v626
        %v2432 = vunpack.c.l.b16 %v627
        %v2433 = vunpack.c.h.b16 %v627
        %v2434 = vunpack.c.l.b16 %v628
        %v2435 = vunpack.c.h.b16 %v628
        %v2436 = vunpack.c.l.b16 %v629
        %v2437 = vunpack.c.h.b16 %v629
        %v2438 = vunpack.c.l.b16 %v630
        %v2439 = vunpack.c.h.b16 %v630
        %v2440 = vunpack.c.l.b16 %v631
        %v2441 = vunpack.c.h.b16 %v631
        %v2442 = vunpack.c.l.b16 %v632
        %v2443 = vunpack.c.h.b16 %v632
        %v2444 = vunpack.c.l.b16 %v633
        %v2445 = vunpack.c.h.b16 %v633
        %v2446 = vunpack.c.l.b16 %v634
        %v2447 = vunpack.c.h.b16 %v634
        %v2448 = vunpack.c.l.b16 %v635
        %v2449 = vunpack.c.h.b16 %v635
        %v2450 = vunpack.c.l.b16 %v636
        %v2451 = vunpack.c.h.b16 %v636
        %v2452 = vunpack.c.l.b16 %v637
        %v2453 = vunpack.c.h.b16 %v637
        %v2454 = vunpack.c.l.b16 %v638
        %v2455 = vunpack.c.h.b16 %v638
        %v2456 = vunpack.c.l.b16 %v639
        %v2457 = vunpack.c.h.b16 %v639
        %v2458 = vunpack.c.l.b16 %v640
        %v2459 = vunpack.c.h.b16 %v640
        %v2460 = vunpack.c.l.b16 %v641
        %v2461 = vunpack.c.h.b16 %v641
        %v2462 = vunpack.c.l.b16 %v642
        %v2463 = vunpack.c.h.b16 %v642
        %v2464 = vunpack.c.l.b16 %v643
        %v2465 = vunpack.c.h.b16 %v643
        %v2466 = vunpack.c.l.b16 %v644
        %v2467 = vunpack.c.h.b16 %v644
        %v2468 = vunpack.c.l.b16 %v645
        %v2469 = vunpack.c.h.b16 %v645
        %v2470 = vunpack.c.l.b16 %v646
        %v2471 = vunpack.c.h.b16 %v646
        %v2472 = vunpack.c.l.b16 %v647
        %v2473 = vunpack.c.h.b16 %v647
        %v2474 = vunpack.c.l.b16 %v648
        %v2475 = vunpack.c.h.b16 %v648
        %v2476 = vunpack.c.l.b16 %v649
        %v2477 = vunpack.c.h.b16 %v649
        %v2478 = vunpack.c.l.b16 %v650
        %v2479 = vunpack.c.h.b16 %v650
        %v2480 = vunpack.c.l.b16 %v651
        %v2481 = vunpack.c.h.b16 %v651
        %v2482 = vunpack.c.l.b16 %v652
        %v2483 = vunpack.c.h.b16 %v652
        %v2484 = vunpack.c.l.b16 %v653
        %v2485 = vunpack.c.h.b16 %v653
        %v2486 = vunpack.c.l.b16 %v654
        %v2487 = vunpack.c.h.b16 %v654
        %v2488 = vunpack.c.l.b16 %v655
        %v2489 = vunpack.c.h.b16 %v655
        %v2490 = vunpack.c.l.b16 %v656
        %v2491 = vunpack.c.h.b16 %v656
        %v2492 = vunpack.c.l.b16 %v657
        %v2493 = vunpack.c.h.b16 %v657
        %v2494 = vunpack.c.l.b16 %v658
        %v2495 = vunpack.c.h.b16 %v658
        %v2496 = vunpack.c.l.b16 %v659
        %v2497 = vunpack.c.h.b16 %v659
        %v2498 = vunpack.c.l.b16 %v660
        %v2499 = vunpack.c.h.b16 %v660
        %v2500 = vunpack.c.l.b16 %v661
        %v2501 = vunpack.c.h.b16 %v661
        %v2502 = vunpack.c.l.b16 %v662
        %v2503 = vunpack.c.h.b16 %v662
        %v2504 = vunpack.c.l.b16 %v663
        %v2505 = vunpack.c.h.b16 %v663
        %v2506 = vunpack.c.l.b16 %v664
        %v2507 = vunpack.c.h.b16 %v664
        %v2508 = vunpack.c.l.b16 %v665
        %v2509 = vunpack.c.h.b16 %v665
        %v2510 = vunpack.c.l.b16 %v666
        %v2511 = vunpack.c.h.b16 %v666
        %v2512 = vunpack.c.l.b16 %v667
        %v2513 = vunpack.c.h.b16 %v667
        %v2514 = vunpack.c.l.b16 %v668
        %v2515 = vunpack.c.h.b16 %v668
        %v2516 = vunpack.c.l.b16 %v669
        %v2517 = vunpack.c.h.b16 %v669
        %v2518 = vunpack.c.l.b16 %v670
        %v2519 = vunpack.c.h.b16 %v670
        %v2520 = vunpack.c.l.b16 %v671
        %v2521 = vunpack.c.h.b16 %v671
        %v2522 = vunpack.c.l.b16 %v672
        %v2523 = vunpack.c.h.b16 %v672
        %v2524 = vunpack.c.l.b16 %v673
        %v2525 = vunpack.c.h.b16 %v673
        %v2526 = vunpack.c.l.b16 %v674
        %v2527 = vunpack.c.h.b16 %v674
        %v2528 = vunpack.c.l.b16 %v675
        %v2529 = vunpack.c.h.b16 %v675
        %v2530 = vunpack.c.l.b16 %v676
        %v2531 = vunpack.c.h.b16 %v676
        %v2532 = vunpack.c.l.b16 %v677
        %v2533 = vunpack.c.h.b16 %v677
        %v2534 = vunpack.c.l.b16 %v678
        %v2535 = vunpack.c.h.b16 %v678
        %v2536 = vunpack.c.l.b16 %v679
        %v2537 = vunpack.c.h.b16 %v679
        %v2538 = vunpack.c.l.b16 %v680
        %v2539 = vunpack.c.h.b16 %v680
        %v2540 = vunpack.c.l.b16 %v681
        %v2541 = vunpack.c.h.b16 %v681
        %v2542 = vunpack.c.l.b16 %v682
        %v2543 = vunpack.c.h.b16 %v682
        %v2544 = vunpack.c.l.b16 %v683
        %v2545 = vunpack.c.h.b16 %v683
        %v2546 = vunpack.c.l.b16 %v684
        %v2547 = vunpack.c.h.b16 %v684
        %v2548 = vunpack.c.l.b16 %v685
        %v2549 = vunpack.c.h.b16 %v685
        %v2550 = vunpack.c.l.b16 %v686
        %v2551 = vunpack.c.h.b16 %v686
        %v2552 = vunpack.c.l.b16 %v687
        %v2553 = vunpack.c.h.b16 %v687
        %v2554 = vunpack.c.l.b16 %v688
        %v2555 = vunpack.c.h.b16 %v688
        %v2556 = vunpack.c.l.b16 %v689
        %v2557 = vunpack.c.h.b16 %v689
        %v2558 = vunpack.c.l.b16 %v690
        %v2559 = vunpack.c.h.b16 %v690
        %v2560 = vunpack.c.l.b16 %v691
        %v2561 = vunpack.c.h.b16 %v691
        %v2562 = vunpack.c.l.b16 %v692
        %v2563 = vunpack.c.h.b16 %v692
        %v2564 = vunpack.c.l.b16 %v693
        %v2565 = vunpack.c.h.b16 %v693
        %v2566 = vunpack.c.l.b16 %v694
        %v2567 = vunpack.c.h.b16 %v694
        %v2568 = vunpack.c.l.b16 %v695
        %v2569 = vunpack.c.h.b16 %v695
        %v2570 = vunpack.c.l.b16 %v696
        %v2571 = vunpack.c.h.b16 %v696
        %v2572 = vunpack.c.l.b16 %v697
        %v2573 = vunpack.c.h.b16 %v697
        %v2574 = vunpack.c.l.b16 %v698
        %v2575 = vunpack.c.h.b16 %v698
        %v2576 = vunpack.c.l.b16 %v699
        %v2577 = vunpack.c.h.b16 %v699
        %v2578 = vunpack.c.l.b16 %v700
        %v2579 = vunpack.c.h.b16 %v700
        %v2580 = vunpack.c.l.b16 %v701
        %v2581 = vunpack.c.h.b16 %v701
        %v2582 = vunpack.c.l.b16 %v702
        %v2583 = vunpack.c.h.b16 %v702
        %v2584 = vunpack.c.l.b16 %v703
        %v2585 = vunpack.c.h.b16 %v703
        %v2586 = vunpack.c.l.b16 %v704
        %v2587 = vunpack.c.h.b16 %v704
        %v2588 = vunpack.c.l.b16 %v705
        %v2589 = vunpack.c.h.b16 %v705
        %v2590 = vunpack.c.l.b16 %v706
        %v2591 = vunpack.c.h.b16 %v706
        %v2592 = vunpack.c.l.b16 %v707
        %v2593 = vunpack.c.h.b16 %v707
        %v2594 = vunpack.c.l.b16 %v708
        %v2595 = vunpack.c.h.b16 %v708
        %v2596 = vunpack.c.l.b16 %v709
        %v2597 = vunpack.c.h.b16 %v709
        %v2598 = vunpack.c.l.b16 %v710
        %v2599 = vunpack.c.h.b16 %v710
        %v2600 = vunpack.c.l.b16 %v711
        %v2601 = vunpack.c.h.b16 %v711
        %v2602 = vunpack.c.l.b16 %v712
        %v2603 = vunpack.c.h.b16 %v712
        %v2604 = vunpack.c.l.b16 %v713
        %v2605 = vunpack.c.h.b16 %v713
        %v2606 = vunpack.c.l.b16 %v714
        %v2607 = vunpack.c.h.b16 %v714
        %v2608 = vunpack.c.l.b16 %v715
        %v2609 = vunpack.c.h.b16 %v715
        %v2610 = vunpack.c.l.b16 %v716
        %v2611 = vunpack.c.h.b16 %v716
        %v2612 = vunpack.c.l.b16 %v717
        %v2613 = vunpack.c.h.b16 %v717
        %v2614 = vunpack.c.l.b16 %v718
        %v2615 = vunpack.c.h.b16 %v718
        %v2616 = vunpack.c.l.b16 %v719
        %v2617 = vunpack.c.h.b16 %v719
        %v2618 = vunpack.c.l.b16 %v720
        %v2619 = vunpack.c.h.b16 %v720
        %v2620 = vunpack.c.l.b16 %v721
        %v2621 = vunpack.c.h.b16 %v721
        %v2622 = vunpack.c.l.b16 %v722
        %v2623 = vunpack.c.h.b16 %v722
        %v2624 = vunpack.c.l.b16 %v723
        %v2625 = vunpack.c.h.b16 %v723
        %v2626 = vunpack.c.l.b16 %v724
        %v2627 = vunpack.c.h.b16 %v724
        %v2628 = vunpack.c.l.b16 %v725
        %v2629 = vunpack.c.h.b16 %v725
        %v2630 = vunpack.c.l.b16 %v726
        %v2631 = vunpack.c.h.b16 %v726
        %v2632 = vunpack.c.l.b16 %v727
        %v2633 = vunpack.c.h.b16 %v727
        %v2634 = vunpack.c.l.b16 %v728
        %v2635 = vunpack.c.h.b16 %v728
        %v2636 = vunpack.c.l.b16 %v729
        %v2637 = vunpack.c.h.b16 %v729
        %v2638 = vunpack.c.l.b16 %v730
        %v2639 = vunpack.c.h.b16 %v730
        %v2640 = vunpack.c.l.b16 %v731
        %v2641 = vunpack.c.h.b16 %v731
        %v2642 = vunpack.c.l.b16 %v732
        %v2643 = vunpack.c.h.b16 %v732
        %v2644 = vunpack.c.l.b16 %v733
        %v2645 = vunpack.c.h.b16 %v733
        %v2646 = vunpack.c.l.b16 %v734
        %v2647 = vunpack.c.h.b16 %v734
        %v2648 = vunpack.c.l.b16 %v735
        %v2649 = vunpack.c.h.b16 %v735
        %v2650 = vunpack.c.l.b16 %v736
        %v2651 = vunpack.c.h.b16 %v736
        %v2652 = vunpack.c.l.b16 %v737
        %v2653 = vunpack.c.h.b16 %v737
        %v2654 = vunpack.c.l.b16 %v738
        %v2655 = vunpack.c.h.b16 %v738
        %v2656 = vunpack.c.l.b16 %v739
        %v2657 = vunpack.c.h.b16 %v739
        %v2658 = vunpack.c.l.b16 %v740
        %v2659 = vunpack.c.h.b16 %v740
        %v2660 = vunpack.c.l.b16 %v741
        %v2661 = vunpack.c.h.b16 %v741
        %v2662 = vunpack.c.l.b16 %v742
        %v2663 = vunpack.c.h.b16 %v742
        %v2664 = vunpack.c.l.b16 %v743
        %v2665 = vunpack.c.h.b16 %v743
        %v2666 = vunpack.c.l.b16 %v744
        %v2667 = vunpack.c.h.b16 %v744
        %v2668 = vunpack.c.l.b16 %v745
        %v2669 = vunpack.c.h.b16 %v745
        %v2670 = vunpack.c.l.b16 %v746
        %v2671 = vunpack.c.h.b16 %v746
        %v2672 = vunpack.c.l.b16 %v747
        %v2673 = vunpack.c.h.b16 %v747
        %v2674 = vunpack.c.l.b16 %v748
        %v2675 = vunpack.c.h.b16 %v748
        %v2676 = vunpack.c.l.b16 %v749
        %v2677 = vunpack.c.h.b16 %v749
        %v2678 = vunpack.c.l.b16 %v750
        %v2679 = vunpack.c.h.b16 %v750
        %v2680 = vunpack.c.l.b16 %v751
        %v2681 = vunpack.c.h.b16 %v751
        %v2682 = vunpack.c.l.b16 %v752
        %v2683 = vunpack.c.h.b16 %v752
        %v2684 = vunpack.c.l.b16 %v753
        %v2685 = vunpack.c.h.b16 %v753
        %v2686 = vunpack.c.l.b16 %v754
        %v2687 = vunpack.c.h.b16 %v754
        %v2688 = vunpack.c.l.b16 %v755
        %v2689 = vunpack.c.h.b16 %v755
        %v2690 = vunpack.c.l.b16 %v756
        %v2691 = vunpack.c.h.b16 %v756
        %v2692 = vunpack.c.l.b16 %v757
        %v2693 = vunpack.c.h.b16 %v757
        %v2694 = vunpack.c.l.b16 %v758
        %v2695 = vunpack.c.h.b16 %v758
        %v2696 = vunpack.c.l.b16 %v759
        %v2697 = vunpack.c.h.b16 %v759
        %v2698 = vunpack.c.l.b16 %v760
        %v2699 = vunpack.c.h.b16 %v760
        %v2700 = vunpack.c.l.b16 %v761
        %v2701 = vunpack.c.h.b16 %v761
        %v2702 = vunpack.c.l.b16 %v762
        %v2703 = vunpack.c.h.b16 %v762
        %v2704 = vunpack.c.l.b16 %v763
        %v2705 = vunpack.c.h.b16 %v763
        %v2706 = vunpack.c.l.b16 %v764
        %v2707 = vunpack.c.h.b16 %v764
        %v2708 = vunpack.c.l.b16 %v765
        %v2709 = vunpack.c.h.b16 %v765
        %v2710 = vunpack.c.l.b16 %v766
        %v2711 = vunpack.c.h.b16 %v766
        %v2712 = vunpack.c.l.b16 %v767
        %v2713 = vunpack.c.h.b16 %v767
        %v2714 = vunpack.c.l.b16 %v768
        %v2715 = vunpack.c.h.b16 %v768
        %v2716 = vunpack.c.l.b16 %v769
        %v2717 = vunpack.c.h.b16 %v769
        %v2718 = vunpack.c.l.b16 %v770
        %v2719 = vunpack.c.h.b16 %v770
        %v2720 = vunpack.c.l.b16 %v771
        %v2721 = vunpack.c.h.b16 %v771
        %v2722 = vunpack.c.l.b16 %v772
        %v2723 = vunpack.c.h.b16 %v772
        %v2724 = vunpack.c.l.b16 %v773
        %v2725 = vunpack.c.h.b16 %v773
        %v2726 = vunpack.c.l.b16 %v774
        %v2727 = vunpack.c.h.b16 %v774
        %v2728 = vunpack.c.l.b16 %v775
        %v2729 = vunpack.c.h.b16 %v775
        %v2730 = vunpack.c.l.b16 %v776
        %v2731 = vunpack.c.h.b16 %v776
        %v2732 = vunpack.c.l.b16 %v777
        %v2733 = vunpack.c.h.b16 %v777
        %v2734 = vunpack.c.l.b16 %v778
        %v2735 = vunpack.c.h.b16 %v778
        %v2736 = vunpack.c.l.b16 %v779
        %v2737 = vunpack.c.h.b16 %v779
        %v2738 = vunpack.c.l.b16 %v780
        %v2739 = vunpack.c.h.b16 %v780
        %v2740 = vunpack.c.l.b16 %v781
        %v2741 = vunpack.c.h.b16 %v781
        %v2742 = vunpack.c.l.b16 %v782
        %v2743 = vunpack.c.h.b16 %v782
        %v2744 = vunpack.c.l.b16 %v783
        %v2745 = vunpack.c.h.b16 %v783
        %v2746 = vunpack.c.l.b16 %v784
        %v2747 = vunpack.c.h.b16 %v784
        %v2748 = vunpack.c.l.b16 %v785
        %v2749 = vunpack.c.h.b16 %v785
        %v2750 = vunpack.c.l.b16 %v786
        %v2751 = vunpack.c.h.b16 %v786
        %v2752 = vunpack.c.l.b16 %v787
        %v2753 = vunpack.c.h.b16 %v787
        %v2754 = vunpack.c.l.b16 %v788
        %v2755 = vunpack.c.h.b16 %v788
        %v2756 = vunpack.c.l.b16 %v789
        %v2757 = vunpack.c.h.b16 %v789
        %v2758 = vunpack.c.l.b16 %v790
        %v2759 = vunpack.c.h.b16 %v790
        %v2760 = vunpack.c.l.b16 %v791
        %v2761 = vunpack.c.h.b16 %v791
        %v2762 = vunpack.c.l.b16 %v792
        %v2763 = vunpack.c.h.b16 %v792
        %v2764 = vunpack.c.l.b16 %v793
        %v2765 = vunpack.c.h.b16 %v793
        %v2766 = vunpack.c.l.b16 %v794
        %v2767 = vunpack.c.h.b16 %v794
        %v2768 = vunpack.c.l.b16 %v795
        %v2769 = vunpack.c.h.b16 %v795
        %v2770 = vunpack.c.l.b16 %v796
        %v2771 = vunpack.c.h.b16 %v796
        %v2772 = vunpack.c.l.b16 %v797
        %v2773 = vunpack.c.h.b16 %v797
        %v2774 = vunpack.c.l.b16 %v798
        %v2775 = vunpack.c.h.b16 %v798
        %v2776 = vunpack.c.l.b16 %v799
        %v2777 = vunpack.c.h.b16 %v799
        %v2778 = vunpack.c.l.b16 %v800
        %v2779 = vunpack.c.h.b16 %v800
        %v2780 = vunpack.c.l.b16 %v801
        %v2781 = vunpack.c.h.b16 %v801
        %v2782 = vunpack.c.l.b16 %v802
        %v2783 = vunpack.c.h.b16 %v802
        %v2784 = vunpack.c.l.b16 %v803
        %v2785 = vunpack.c.h.b16 %v803
        %v2786 = vunpack.c.l.b16 %v804
        %v2787 = vunpack.c.h.b16 %v804
        %v2788 = vunpack.c.l.b16 %v805
        %v2789 = vunpack.c.h.b16 %v805
        %v2790 = vunpack.c.l.b16 %v806
        %v2791 = vunpack.c.h.b16 %v806
        %v2792 = vunpack.c.l.b16 %v807
        %v2793 = vunpack.c.h.b16 %v807
        %v2794 = vunpack.c.l.b16 %v808
        %v2795 = vunpack.c.h.b16 %v808
        %v2796 = vunpack.c.l.b16 %v809
        %v2797 = vunpack.c.h.b16 %v809
        %v2798 = vunpack.c.l.b16 %v810
        %v2799 = vunpack.c.h.b16 %v810
        %v2800 = vunpack.c.l.b16 %v811
        %v2801 = vunpack.c.h.b16 %v811
        %v2802 = vunpack.c.l.b16 %v812
        %v2803 = vunpack.c.h.b16 %v812
        %v2804 = vunpack.c.l.b16 %v813
        %v2805 = vunpack.c.h.b16 %v813
        %v2806 = vunpack.c.l.b16 %v814
        %v2807 = vunpack.c.h.b16 %v814
        %v2808 = vunpack.c.l.b16 %v815
        %v2809 = vunpack.c.h.b16 %v815
        %v2810 = vunpack.c.l.b16 %v816
        %v2811 = vunpack.c.h.b16 %v816
        %v2812 = vunpack.c.l.b16 %v817
        %v2813 = vunpack.c.h.b16 %v817
        %v2814 = vunpack.c.l.b16 %v818
        %v2815 = vunpack.c.h.b16 %v818
        %v2816 = vunpack.c.l.b16 %v819
        %v2817 = vunpack.c.h.b16 %v819
        %v2818 = vunpack.c.l.b16 %v820
        %v2819 = vunpack.c.h.b16 %v820
        %v2820 = vunpack.c.l.b16 %v821
        %v2821 = vunpack.c.h.b16 %v821
        %v2822 = vunpack.c.l.b16 %v822
        %v2823 = vunpack.c.h.b16 %v822
        %v2824 = vunpack.c.l.b16 %v823
        %v2825 = vunpack.c.h.b16 %v823
        %v2826 = vunpack.c.l.b16 %v824
        %v2827 = vunpack.c.h.b16 %v824
        %v2828 = vunpack.c.l.b16 %v825
        %v2829 = vunpack.c.h.b16 %v825
        %v2830 = vunpack.c.l.b16 %v826
        %v2831 = vunpack.c.h.b16 %v826
        %v2832 = vunpack.c.l.b16 %v827
        %v2833 = vunpack.c.h.b16 %v827
        %v2834 = vunpack.c.l.b16 %v828
        %v2835 = vunpack.c.h.b16 %v828
        %v2836 = vunpack.c.l.b16 %v829
        %v2837 = vunpack.c.h.b16 %v829
        %v2838 = vunpack.c.l.b16 %v830
        %v2839 = vunpack.c.h.b16 %v830
        %v2840 = vunpack.c.l.b16 %v831
        %v2841 = vunpack.c.h.b16 %v831
        %v2842 = vunpack.c.l.b16 %v832
        %v2843 = vunpack.c.h.b16 %v832
        %v2844 = vunpack.c.l.b16 %v833
        %v2845 = vunpack.c.h.b16 %v833
        %v2846 = vunpack.c.l.b16 %v834
        %v2847 = vunpack.c.h.b16 %v834
        %v2848 = vunpack.c.l.b16 %v835
        %v2849 = vunpack.c.h.b16 %v835
        %v2850 = vunpack.c.l.b16 %v836
        %v2851 = vunpack.c.h.b16 %v836
        %v2852 = vunpack.c.l.b16 %v837
        %v2853 = vunpack.c.h.b16 %v837
        %v2854 = vunpack.c.l.b16 %v838
        %v2855 = vunpack.c.h.b16 %v838
        %v2856 = vunpack.c.l.b16 %v839
        %v2857 = vunpack.c.h.b16 %v839
        %v2858 = vunpack.c.l.b16 %v840
        %v2859 = vunpack.c.h.b16 %v840
        %v2860 = vunpack.c.l.b16 %v841
        %v2861 = vunpack.c.h.b16 %v841
        %v2862 = vunpack.c.l.b16 %v842
        %v2863 = vunpack.c.h.b16 %v842
        %v2864 = vunpack.c.l.b16 %v843
        %v2865 = vunpack.c.h.b16 %v843
        %v2866 = vunpack.c.l.b16 %v844
        %v2867 = vunpack.c.h.b16 %v844
        %v2868 = vunpack.c.l.b16 %v845
        %v2869 = vunpack.c.h.b16 %v845
        %v2870 = vunpack.c.l.b16 %v846
        %v2871 = vunpack.c.h.b16 %v846
        %v2872 = vunpack.c.l.b16 %v847
        %v2873 = vunpack.c.h.b16 %v847
        %v2874 = vunpack.c.l.b16 %v848
        %v2875 = vunpack.c.h.b16 %v848
        %v2876 = vunpack.c.l.b16 %v849
        %v2877 = vunpack.c.h.b16 %v849
        %v2878 = vunpack.c.l.b16 %v850
        %v2879 = vunpack.c.h.b16 %v850
        %v2880 = vunpack.c.l.b16 %v851
        %v2881 = vunpack.c.h.b16 %v851
        %v2882 = vunpack.c.l.b16 %v852
        %v2883 = vunpack.c.h.b16 %v852
        %v2884 = vunpack.c.l.b16 %v853
        %v2885 = vunpack.c.h.b16 %v853
        %v2886 = vunpack.c.l.b16 %v854
        %v2887 = vunpack.c.h.b16 %v854
        %v2888 = vunpack.c.l.b16 %v855
        %v2889 = vunpack.c.h.b16 %v855
        %v2890 = vunpack.c.l.b16 %v856
        %v2891 = vunpack.c.h.b16 %v856
        %v2892 = vunpack.c.l.b16 %v857
        %v2893 = vunpack.c.h.b16 %v857
        %v2894 = vunpack.c.l.b16 %v858
        %v2895 = vunpack.c.h.b16 %v858
        %v2896 = vunpack.c.l.b16 %v859
        %v2897 = vunpack.c.h.b16 %v859
        %v2898 = vunpack.c.l.b16 %v860
        %v2899 = vunpack.c.h.b16 %v860
        %v2900 = vunpack.c.l.b16 %v861
        %v2901 = vunpack.c.h.b16 %v861
        %v2902 = vunpack.c.l.b16 %v862
        %v2903 = vunpack.c.h.b16 %v862
        %v2904 = vunpack.c.l.b16 %v863
        %v2905 = vunpack.c.h.b16 %v863
        %v2906 = vunpack.c.l.b16 %v864
        %v2907 = vunpack.c.h.b16 %v864
        %v2908 = vunpack.c.l.b16 %v865
        %v2909 = vunpack.c.h.b16 %v865
        %v2910 = vunpack.c.l.b16 %v866
        %v2911 = vunpack.c.h.b16 %v866
        %v2912 = vunpack.c.l.b16 %v867
        %v2913 = vunpack.c.h.b16 %v867
        %v2914 = vunpack.c.l.b16 %v868
        %v2915 = vunpack.c.h.b16 %v868
        %v2916 = vunpack.c.l.b16 %v869
        %v2917 = vunpack.c.h.b16 %v869
        %v2918 = vunpack.c.l.b16 %v870
        %v2919 = vunpack.c.h.b16 %v870
        %v2920 = vunpack.c.l.b16 %v871
        %v2921 = vunpack.c.h.b16 %v871
        %v2922 = vunpack.c.l.b16 %v872
        %v2923 = vunpack.c.h.b16 %v872
        %v2924 = vunpack.c.l.b16 %v873
        %v2925 = vunpack.c.h.b16 %v873
        %v2926 = vunpack.c.l.b16 %v874
        %v2927 = vunpack.c.h.b16 %v874
        %v2928 = vunpack.c.l.b16 %v875
        %v2929 = vunpack.c.h.b16 %v875
        %v2930 = vunpack.c.l.b16 %v876
        %v2931 = vunpack.c.h.b16 %v876
        %v2932 = vunpack.c.l.b16 %v877
        %v2933 = vunpack.c.h.b16 %v877
        %v2934 = vunpack.c.l.b16 %v878
        %v2935 = vunpack.c.h.b16 %v878
        %v2936 = vunpack.c.l.b16 %v879
        %v2937 = vunpack.c.h.b16 %v879
        %v2938 = vunpack.c.l.b16 %v880
        %v2939 = vunpack.c.h.b16 %v880
        %v2940 = vunpack.c.l.b16 %v881
        %v2941 = vunpack.c.h.b16 %v881
        %v2942 = vunpack.c.l.b16 %v882
        %v2943 = vunpack.c.h.b16 %v882
        %v2944 = vunpack.c.l.b16 %v883
        %v2945 = vunpack.c.h.b16 %v883
        %v2946 = vunpack.c.l.b16 %v884
        %v2947 = vunpack.c.h.b16 %v884
        %v2948 = vunpack.c.l.b16 %v885
        %v2949 = vunpack.c.h.b16 %v885
        %v2950 = vunpack.c.l.b16 %v886
        %v2951 = vunpack.c.h.b16 %v886
        %v2952 = vunpack.c.l.b16 %v887
        %v2953 = vunpack.c.h.b16 %v887
        %v2954 = vunpack.c.l.b16 %v888
        %v2955 = vunpack.c.h.b16 %v888
        %v2956 = vunpack.c.l.b16 %v889
        %v2957 = vunpack.c.h.b16 %v889
        %v2958 = vunpack.c.l.b16 %v890
        %v2959 = vunpack.c.h.b16 %v890
        %v2960 = vunpack.c.l.b16 %v891
        %v2961 = vunpack.c.h.b16 %v891
        %v2962 = vunpack.c.l.b16 %v892
        %v2963 = vunpack.c.h.b16 %v892
        %v2964 = vunpack.c.l.b16 %v893
        %v2965 = vunpack.c.h.b16 %v893
        %v2966 = vunpack.c.l.b16 %v894
        %v2967 = vunpack.c.h.b16 %v894
        %v2968 = vunpack.c.l.b16 %v895
        %v2969 = vunpack.c.h.b16 %v895
        %v2970 = vunpack.c.l.b16 %v896
        %v2971 = vunpack.c.h.b16 %v896
        %v2972 = vunpack.c.l.b16 %v897
        %v2973 = vunpack.c.h.b16 %v897
        %v2974 = vunpack.c.l.b16 %v898
        %v2975 = vunpack.c.h.b16 %v898
        %v2976 = vunpack.c.l.b16 %v899
        %v2977 = vunpack.c.h.b16 %v899
        %v2978 = vunpack.c.l.b16 %v900
        %v2979 = vunpack.c.h.b16 %v900
        %v2980 = vunpack.c.l.b16 %v901
        %v2981 = vunpack.c.h.b16 %v901
        %v2982 = vunpack.c.l.b16 %v902
        %v2983 = vunpack.c.h.b16 %v902
        %v2984 = vunpack.c.l.b16 %v903
        %v2985 = vunpack.c.h.b16 %v903
        %v2986 = vunpack.c.l.b16 %v904
        %v2987 = vunpack.c.h.b16 %v904
        %v2988 = vunpack.c.l.b16 %v905
        %v2989 = vunpack.c.h.b16 %v905
        %v2990 = vunpack.c.l.b16 %v906
        %v2991 = vunpack.c.h.b16 %v906
        %v2992 = vunpack.c.l.b16 %v907
        %v2993 = vunpack.c.h.b16 %v907
        %v2994 = vunpack.c.l.b16 %v908
        %v2995 = vunpack.c.h.b16 %v908
        %v2996 = vunpack.c.l.b16 %v909
        %v2997 = vunpack.c.h.b16 %v909
        %v2998 = vunpack.c.l.b16 %v910
        %v2999 = vunpack.c.h.b16 %v910
        %v3000 = vunpack.c.l.b16 %v911
        %v3001 = vunpack.c.h.b16 %v911
        %v3002 = vunpack.c.l.b16 %v912
        %v3003 = vunpack.c.h.b16 %v912
        %v3004 = vunpack.c.l.b16 %v913
        %v3005 = vunpack.c.h.b16 %v913
        %v3006 = vunpack.c.l.b16 %v914
        %v3007 = vunpack.c.h.b16 %v914
        %v3008 = vunpack.c.l.b16 %v915
        %v3009 = vunpack.c.h.b16 %v915
        %v3010 = vunpack.c.l.b16 %v916
        %v3011 = vunpack.c.h.b16 %v916
        %v3012 = vunpack.c.l.b16 %v917
        %v3013 = vunpack.c.h.b16 %v917
        %v3014 = vunpack.c.l.b16 %v918
        %v3015 = vunpack.c.h.b16 %v918
        %v3016 = vunpack.c.l.b16 %v919
        %v3017 = vunpack.c.h.b16 %v919
        %v3018 = vunpack.c.l.b16 %v920
        %v3019 = vunpack.c.h.b16 %v920
        %v3020 = vunpack.c.l.b16 %v921
        %v3021 = vunpack.c.h.b16 %v921
        %v3022 = vunpack.c.l.b16 %v922
        %v3023 = vunpack.c.h.b16 %v922
        %v3024 = vunpack.c.l.b16 %v923
        %v3025 = vunpack.c.h.b16 %v923
        %v3026 = vunpack.c.l.b16 %v924
        %v3027 = vunpack.c.h.b16 %v924
        %v3028 = vunpack.c.l.b16 %v925
        %v3029 = vunpack.c.h.b16 %v925
        %v3030 = vunpack.c.l.b16 %v926
        %v3031 = vunpack.c.h.b16 %v926
        %v3032 = vunpack.c.l.b16 %v927
        %v3033 = vunpack.c.h.b16 %v927
        %v3034 = vunpack.c.l.b16 %v928
        %v3035 = vunpack.c.h.b16 %v928
        %v3036 = vunpack.c.l.b16 %v929
        %v3037 = vunpack.c.h.b16 %v929
        %v3038 = vunpack.c.l.b16 %v930
        %v3039 = vunpack.c.h.b16 %v930
        %v3040 = vunpack.c.l.b16 %v931
        %v3041 = vunpack.c.h.b16 %v931
        %v3042 = vunpack.c.l.b16 %v932
        %v3043 = vunpack.c.h.b16 %v932
        %v3044 = vunpack.c.l.b16 %v933
        %v3045 = vunpack.c.h.b16 %v933
        %v3046 = vunpack.c.l.b16 %v934
        %v3047 = vunpack.c.h.b16 %v934
        %v3048 = vunpack.c.l.b16 %v935
        %v3049 = vunpack.c.h.b16 %v935
        %v3050 = vunpack.c.l.b16 %v936
        %v3051 = vunpack.c.h.b16 %v936
        %v3052 = vunpack.c.l.b16 %v937
        %v3053 = vunpack.c.h.b16 %v937
        %v3054 = vunpack.c.l.b16 %v938
        %v3055 = vunpack.c.h.b16 %v938
        %v3056 = vunpack.c.l.b16 %v939
        %v3057 = vunpack.c.h.b16 %v939
        %v3058 = vunpack.c.l.b16 %v940
        %v3059 = vunpack.c.h.b16 %v940
        %v3060 = vunpack.c.l.b16 %v941
        %v3061 = vunpack.c.h.b16 %v941
        %v3062 = vunpack.c.l.b16 %v942
        %v3063 = vunpack.c.h.b16 %v942
        %v3064 = vunpack.c.l.b16 %v943
        %v3065 = vunpack.c.h.b16 %v943
        %v3066 = vunpack.c.l.b16 %v944
        %v3067 = vunpack.c.h.b16 %v944
        %v3068 = vunpack.c.l.b16 %v945
        %v3069 = vunpack.c.h.b16 %v945
        %v3070 = vunpack.c.l.b16 %v946
        %v3071 = vunpack.c.h.b16 %v946
        %v3072 = vunpack.c.l.b16 %v947
        %v3073 = vunpack.c.h.b16 %v947
        %v3074 = vunpack.c.l.b16 %v948
        %v3075 = vunpack.c.h.b16 %v948
        %v3076 = vunpack.c.l.b16 %v949
        %v3077 = vunpack.c.h.b16 %v949
        %v3078 = vunpack.c.l.b16 %v950
        %v3079 = vunpack.c.h.b16 %v950
        %v3080 = vunpack.c.l.b16 %v951
        %v3081 = vunpack.c.h.b16 %v951
        %v3082 = vunpack.c.l.b16 %v952
        %v3083 = vunpack.c.h.b16 %v952
        %v3084 = vunpack.c.l.b16 %v953
        %v3085 = vunpack.c.h.b16 %v953
        %v3086 = vunpack.c.l.b16 %v954
        %v3087 = vunpack.c.h.b16 %v954
        %v3088 = vunpack.c.l.b16 %v955
        %v3089 = vunpack.c.h.b16 %v955
        %v3090 = vunpack.c.l.b16 %v956
        %v3091 = vunpack.c.h.b16 %v956
        %v3092 = vunpack.c.l.b16 %v957
        %v3093 = vunpack.c.h.b16 %v957
        %v3094 = vunpack.c.l.b16 %v958
        %v3095 = vunpack.c.h.b16 %v958
        %v3096 = vunpack.c.l.b16 %v959
        %v3097 = vunpack.c.h.b16 %v959
        %v3098 = vunpack.c.l.b16 %v960
        %v3099 = vunpack.c.h.b16 %v960
        %v3100 = vunpack.c.l.b16 %v961
        %v3101 = vunpack.c.h.b16 %v961
        %v3102 = vunpack.c.l.b16 %v962
        %v3103 = vunpack.c.h.b16 %v962
        %v3104 = vunpack.c.l.b16 %v963
        %v3105 = vunpack.c.h.b16 %v963
        %v3106 = vunpack.c.l.b16 %v964
        %v3107 = vunpack.c.h.b16 %v964
        %v3108 = vunpack.c.l.b16 %v965
        %v3109 = vunpack.c.h.b16 %v965
        %v3110 = vunpack.c.l.b16 %v966
        %v3111 = vunpack.c.h.b16 %v966
        %v3112 = vunpack.c.l.b16 %v967
        %v3113 = vunpack.c.h.b16 %v967
        %v3114 = vunpack.c.l.b16 %v968
        %v3115 = vunpack.c.h.b16 %v968
        %v3116 = vunpack.c.l.b16 %v969
        %v3117 = vunpack.c.h.b16 %v969
        %v3118 = vunpack.c.l.b16 %v970
        %v3119 = vunpack.c.h.b16 %v970
        %v3120 = vunpack.c.l.b16 %v971
        %v3121 = vunpack.c.h.b16 %v971
        %v3122 = vunpack.c.l.b16 %v972
        %v3123 = vunpack.c.h.b16 %v972
        %v3124 = vunpack.c.l.b16 %v973
        %v3125 = vunpack.c.h.b16 %v973
        %v3126 = vunpack.c.l.b16 %v974
        %v3127 = vunpack.c.h.b16 %v974
        %v3128 = vunpack.c.l.b16 %v975
        %v3129 = vunpack.c.h.b16 %v975
        %v3130 = vunpack.c.l.b16 %v976
        %v3131 = vunpack.c.h.b16 %v976
        %v3132 = vunpack.c.l.b16 %v977
        %v3133 = vunpack.c.h.b16 %v977
        %v3134 = vunpack.c.l.b16 %v978
        %v3135 = vunpack.c.h.b16 %v978
        %v3136 = vunpack.c.l.b16 %v979
        %v3137 = vunpack.c.h.b16 %v979
        %v3138 = vunpack.c.l.b16 %v980
        %v3139 = vunpack.c.h.b16 %v980
        %v3140 = vunpack.c.l.b16 %v981
        %v3141 = vunpack.c.h.b16 %v981
        %v3142 = vunpack.c.l.b16 %v982
        %v3143 = vunpack.c.h.b16 %v982
        %v3144 = vunpack.c.l.b16 %v983
        %v3145 = vunpack.c.h.b16 %v983
        %v3146 = vunpack.c.l.b16 %v984
        %v3147 = vunpack.c.h.b16 %v984
        %v3148 = vunpack.c.l.b16 %v985
        %v3149 = vunpack.c.h.b16 %v985
        %v3150 = vunpack.c.l.b16 %v986
        %v3151 = vunpack.c.h.b16 %v986
        %v3152 = vunpack.c.l.b16 %v987
        %v3153 = vunpack.c.h.b16 %v987
        %v3154 = vunpack.c.l.b16 %v988
        %v3155 = vunpack.c.h.b16 %v988
        %v3156 = vunpack.c.l.b16 %v989
        %v3157 = vunpack.c.h.b16 %v989
        %v3158 = vunpack.c.l.b16 %v990
        %v3159 = vunpack.c.h.b16 %v990
        %v3160 = vunpack.c.l.b16 %v991
        %v3161 = vunpack.c.h.b16 %v991
        %v3162 = vunpack.c.l.b16 %v992
        %v3163 = vunpack.c.h.b16 %v992
        %v3164 = vunpack.c.l.b16 %v993
        %v3165 = vunpack.c.h.b16 %v993
        %v3166 = vunpack.c.l.b16 %v994
        %v3167 = vunpack.c.h.b16 %v994
        %v3168 = vunpack.c.l.b16 %v995
        %v3169 = vunpack.c.h.b16 %v995
        %v3170 = vunpack.c.l.b16 %v996
        %v3171 = vunpack.c.h.b16 %v996
        %v3172 = vunpack.c.l.b16 %v997
        %v3173 = vunpack.c.h.b16 %v997
        %v3174 = vunpack.c.l.b16 %v998
        %v3175 = vunpack.c.h.b16 %v998
        %v3176 = vunpack.c.l.b16 %v999
        %v3177 = vunpack.c.h.b16 %v999
        %v3178 = vunpack.c.l.b16 %v1000
        %v3179 = vunpack.c.h.b16 %v1000
        %v3180 = vunpack.c.l.b16 %v1001
        %v3181 = vunpack.c.h.b16 %v1001
        %v3182 = vunpack.c.l.b16 %v1002
        %v3183 = vunpack.c.h.b16 %v1002
        %v3184 = vunpack.c.l.b16 %v1003
        %v3185 = vunpack.c.h.b16 %v1003
        %v3186 = vunpack.c.l.b16 %v1004
        %v3187 = vunpack.c.h.b16 %v1004
        %v3188 = vunpack.c.l.b16 %v1005
        %v3189 = vunpack.c.h.b16 %v1005
        %v3190 = vunpack.c.l.b16 %v1006
        %v3191 = vunpack.c.h.b16 %v1006
        %v3192 = vunpack.c.l.b16 %v1007
        %v3193 = vunpack.c.h.b16 %v1007
        %v3194 = vunpack.c.l.b16 %v1008
        %v3195 = vunpack.c.h.b16 %v1008
        %v3196 = vunpack.c.l.b16 %v1009
        %v3197 = vunpack.c.h.b16 %v1009
        %v3198 = vunpack.c.l.b16 %v1010
        %v3199 = vunpack.c.h.b16 %v1010
        %v3200 = vunpack.c.l.b16 %v1011
        %v3201 = vunpack.c.h.b16 %v1011
        %v3202 = vunpack.c.l.b16 %v1012
        %v3203 = vunpack.c.h.b16 %v1012
        %v3204 = vunpack.c.l.b16 %v1013
        %v3205 = vunpack.c.h.b16 %v1013
        %v3206 = vunpack.c.l.b16 %v1014
        %v3207 = vunpack.c.h.b16 %v1014
        %v3208 = vunpack.c.l.b16 %v1015
        %v3209 = vunpack.c.h.b16 %v1015
        %v3210 = vunpack.c.l.b16 %v1016
        %v3211 = vunpack.c.h.b16 %v1016
        %v3212 = vunpack.c.l.b16 %v1017
        %v3213 = vunpack.c.h.b16 %v1017
        %v3214 = vunpack.c.l.b16 %v1018
        %v3215 = vunpack.c.h.b16 %v1018
        %v3216 = vunpack.c.l.b16 %v1019
        %v3217 = vunpack.c.h.b16 %v1019
        %v3218 = vunpack.c.l.b16 %v1020
        %v3219 = vunpack.c.h.b16 %v1020
        %v3220 = vunpack.c.l.b16 %v1021
        %v3221 = vunpack.c.h.b16 %v1021
        %v3222 = vunpack.c.l.b16 %v1022
        %v3223 = vunpack.c.h.b16 %v1022
        %v3224 = vunpack.c.l.b16 %v1023
        %v3225 = vunpack.c.h.b16 %v1023
        %v3226 = vunpack.c.l.b16 %v1024
        %v3227 = vunpack.c.h.b16 %v1024
        %v3228 = vunpack.c.l.b16 %v1025
        %v3229 = vunpack.c.h.b16 %v1025
        %v3230 = vunpack.c.l.b16 %v1026
        %v3231 = vunpack.c.h.b16 %v1026
        %v3232 = vunpack.c.l.b16 %v1027
        %v3233 = vunpack.c.h.b16 %v1027
        %v3234 = vunpack.c.l.b16 %v1028
        %v3235 = vunpack.c.h.b16 %v1028
        %v3236 = vunpack.c.l.b16 %v1029
        %v3237 = vunpack.c.h.b16 %v1029
        %v3238 = vunpack.c.l.b16 %v1030
        %v3239 = vunpack.c.h.b16 %v1030
        %v3240 = vunpack.c.l.b16 %v1031
        %v3241 = vunpack.c.h.b16 %v1031
        %v3242 = vunpack.c.l.b16 %v1032
        %v3243 = vunpack.c.h.b16 %v1032
        %v3244 = vunpack.c.l.b16 %v1033
        %v3245 = vunpack.c.h.b16 %v1033
        %v3246 = vunpack.c.l.b16 %v1034
        %v3247 = vunpack.c.h.b16 %v1034
        %v3248 = vunpack.c.l.b16 %v1035
        %v3249 = vunpack.c.h.b16 %v1035
        %v3250 = vunpack.c.l.b16 %v1036
        %v3251 = vunpack.c.h.b16 %v1036
        %v3252 = vunpack.c.l.b16 %v1037
        %v3253 = vunpack.c.h.b16 %v1037
        %v3254 = vunpack.c.l.b16 %v1038
        %v3255 = vunpack.c.h.b16 %v1038
        %v3256 = vunpack.c.l.b16 %v1039
        %v3257 = vunpack.c.h.b16 %v1039
        %v3258 = vunpack.c.l.b16 %v1040
        %v3259 = vunpack.c.h.b16 %v1040
        %v3260 = vunpack.c.l.b16 %v1041
        %v3261 = vunpack.c.h.b16 %v1041
        %v3262 = vunpack.c.l.b16 %v1042
        %v3263 = vunpack.c.h.b16 %v1042
        %v3264 = vunpack.c.l.b16 %v1043
        %v3265 = vunpack.c.h.b16 %v1043
        %v3266 = vunpack.c.l.b16 %v1044
        %v3267 = vunpack.c.h.b16 %v1044
        %v3268 = vunpack.c.l.b16 %v1045
        %v3269 = vunpack.c.h.b16 %v1045
        %v3270 = vunpack.c.l.b16 %v1046
        %v3271 = vunpack.c.h.b16 %v1046
        %v3272 = vunpack.c.l.b16 %v1047
        %v3273 = vunpack.c.h.b16 %v1047
        %v3274 = vunpack.c.l.b16 %v1048
        %v3275 = vunpack.c.h.b16 %v1048
        %v3276 = vunpack.c.l.b16 %v1049
        %v3277 = vunpack.c.h.b16 %v1049
        %v3278 = vunpack.c.l.b16 %v1050
        %v3279 = vunpack.c.h.b16 %v1050
        %v3280 = vunpack.c.l.b16 %v1051
        %v3281 = vunpack.c.h.b16 %v1051
        %v3282 = vunpack.c.l.b16 %v1052
        %v3283 = vunpack.c.h.b16 %v1052
        %v3284 = vunpack.c.l.b16 %v1053
        %v3285 = vunpack.c.h.b16 %v1053
        %v3286 = vunpack.c.l.b16 %v1054
        %v3287 = vunpack.c.h.b16 %v1054
        %v3288 = vunpack.c.l.b16 %v1055
        %v3289 = vunpack.c.h.b16 %v1055
        %v3290 = vunpack.c.l.b16 %v1056
        %v3291 = vunpack.c.h.b16 %v1056
        %v3292 = vunpack.c.l.b16 %v1057
        %v3293 = vunpack.c.h.b16 %v1057
        %v3294 = vunpack.c.l.b16 %v1058
        %v3295 = vunpack.c.h.b16 %v1058
        %v3296 = vunpack.c.l.b16 %v1059
        %v3297 = vunpack.c.h.b16 %v1059
        %v3298 = vunpack.c.l.b16 %v1060
        %v3299 = vunpack.c.h.b16 %v1060
        %v3300 = vunpack.c.l.b16 %v1061
        %v3301 = vunpack.c.h.b16 %v1061
        %v3302 = vunpack.c.l.b16 %v1062
        %v3303 = vunpack.c.h.b16 %v1062
        %v3304 = vunpack.c.l.b16 %v1063
        %v3305 = vunpack.c.h.b16 %v1063
        %v3306 = vunpack.c.l.b16 %v1064
        %v3307 = vunpack.c.h.b16 %v1064
        %v3308 = vunpack.c.l.b16 %v1065
        %v3309 = vunpack.c.h.b16 %v1065
        %v3310 = vunpack.c.l.b16 %v1066
        %v3311 = vunpack.c.h.b16 %v1066
        %v3312 = vunpack.c.l.b16 %v1067
        %v3313 = vunpack.c.h.b16 %v1067
        %v3314 = vunpack.c.l.b16 %v1068
        %v3315 = vunpack.c.h.b16 %v1068
        %v3316 = vunpack.c.l.b16 %v1069
        %v3317 = vunpack.c.h.b16 %v1069
        %v3318 = vunpack.c.l.b16 %v1070
        %v3319 = vunpack.c.h.b16 %v1070
        %v3320 = vunpack.c.l.b16 %v1071
        %v3321 = vunpack.c.h.b16 %v1071
        %v3322 = vunpack.c.l.b16 %v1072
        %v3323 = vunpack.c.h.b16 %v1072
        %v3324 = vunpack.c.l.b16 %v1073
        %v3325 = vunpack.c.h.b16 %v1073
        %v3326 = vunpack.c.l.b16 %v1074
        %v3327 = vunpack.c.h.b16 %v1074
        %v3328 = vunpack.c.l.b16 %v1075
        %v3329 = vunpack.c.h.b16 %v1075
        %v3330 = vunpack.c.l.b16 %v1076
        %v3331 = vunpack.c.h.b16 %v1076
        %v3332 = vunpack.c.l.b16 %v1077
        %v3333 = vunpack.c.h.b16 %v1077
        %v3334 = vunpack.c.l.b16 %v1078
        %v3335 = vunpack.c.h.b16 %v1078
        %v3336 = vunpack.c.l.b16 %v1079
        %v3337 = vunpack.c.h.b16 %v1079
        %v3338 = vunpack.c.l.b16 %v1080
        %v3339 = vunpack.c.h.b16 %v1080
        %v3340 = vunpack.c.l.b16 %v1081
        %v3341 = vunpack.c.h.b16 %v1081
        %v3342 = vunpack.c.l.b16 %v1082
        %v3343 = vunpack.c.h.b16 %v1082
        %v3344 = vunpack.c.l.b16 %v1083
        %v3345 = vunpack.c.h.b16 %v1083
        %v3346 = vunpack.c.l.b16 %v1084
        %v3347 = vunpack.c.h.b16 %v1084
        %v3348 = vunpack.c.l.b16 %v1085
        %v3349 = vunpack.c.h.b16 %v1085
        %v3350 = vunpack.c.l.b16 %v1086
        %v3351 = vunpack.c.h.b16 %v1086
        %v3352 = vunpack.c.l.b16 %v1087
        %v3353 = vunpack.c.h.b16 %v1087
        %v3354 = vunpack.c.l.b16 %v1088
        %v3355 = vunpack.c.h.b16 %v1088
        %v3356 = vunpack.c.l.b16 %v1089
        %v3357 = vunpack.c.h.b16 %v1089
        %v3358 = vunpack.c.l.b16 %v1090
        %v3359 = vunpack.c.h.b16 %v1090
        %v3360 = vunpack.c.l.b16 %v1091
        %v3361 = vunpack.c.h.b16 %v1091
        %v3362 = vunpack.c.l.b16 %v1092
        %v3363 = vunpack.c.h.b16 %v1092
        %v3364 = vunpack.c.l.b16 %v1093
        %v3365 = vunpack.c.h.b16 %v1093
        %v3366 = vunpack.c.l.b16 %v1094
        %v3367 = vunpack.c.h.b16 %v1094
        %v3368 = vunpack.c.l.b16 %v1095
        %v3369 = vunpack.c.h.b16 %v1095
        %v3370 = vunpack.c.l.b16 %v1096
        %v3371 = vunpack.c.h.b16 %v1096
        %v3372 = vunpack.c.l.b16 %v1097
        %v3373 = vunpack.c.h.b16 %v1097
        %v3374 = vunpack.c.l.b16 %v1098
        %v3375 = vunpack.c.h.b16 %v1098
        %v3376 = vunpack.c.l.b16 %v1099
        %v3377 = vunpack.c.h.b16 %v1099
        %v3378 = vunpack.c.l.b16 %v1100
        %v3379 = vunpack.c.h.b16 %v1100
        %v3380 = vunpack.c.l.b16 %v1101
        %v3381 = vunpack.c.h.b16 %v1101
        %v3382 = vunpack.c.l.b16 %v1102
        %v3383 = vunpack.c.h.b16 %v1102
        %v3384 = vunpack.c.l.b16 %v1103
        %v3385 = vunpack.c.h.b16 %v1103
        %v3386 = vunpack.c.l.b16 %v1104
        %v3387 = vunpack.c.h.b16 %v1104
        %v3388 = vunpack.c.l.b16 %v1105
        %v3389 = vunpack.c.h.b16 %v1105
        %v3390 = vunpack.c.l.b16 %v1106
        %v3391 = vunpack.c.h.b16 %v1106
        %v3392 = vunpack.c.l.b16 %v1107
        %v3393 = vunpack.c.h.b16 %v1107
        %v3394 = vunpack.c.l.b16 %v1108
        %v3395 = vunpack.c.h.b16 %v1108
        %v3396 = vunpack.c.l.b16 %v1109
        %v3397 = vunpack.c.h.b16 %v1109
        %v3398 = vunpack.c.l.b16 %v1110
        %v3399 = vunpack.c.h.b16 %v1110
        %v3400 = vunpack.c.l.b16 %v1111
        %v3401 = vunpack.c.h.b16 %v1111
        %v3402 = vunpack.c.l.b16 %v1112
        %v3403 = vunpack.c.h.b16 %v1112
        %v3404 = vunpack.c.l.b16 %v1113
        %v3405 = vunpack.c.h.b16 %v1113
        %v3406 = vunpack.c.l.b16 %v1114
        %v3407 = vunpack.c.h.b16 %v1114
        %v3408 = vunpack.c.l.b16 %v1115
        %v3409 = vunpack.c.h.b16 %v1115
        %v3410 = vunpack.c.l.b16 %v1116
        %v3411 = vunpack.c.h.b16 %v1116
        %v3412 = vunpack.c.l.b16 %v1117
        %v3413 = vunpack.c.h.b16 %v1117
        %v3414 = vunpack.c.l.b16 %v1118
        %v3415 = vunpack.c.h.b16 %v1118
        %v3416 = vunpack.c.l.b16 %v1119
        %v3417 = vunpack.c.h.b16 %v1119
        %v3418 = vunpack.c.l.b16 %v1120
        %v3419 = vunpack.c.h.b16 %v1120
        %v3420 = vunpack.c.l.b16 %v1121
        %v3421 = vunpack.c.h.b16 %v1121
        %v3422 = vunpack.c.l.b16 %v1122
        %v3423 = vunpack.c.h.b16 %v1122
        %v3424 = vunpack.c.l.b16 %v1123
        %v3425 = vunpack.c.h.b16 %v1123
        %v3426 = vunpack.c.l.b16 %v1124
        %v3427 = vunpack.c.h.b16 %v1124
        %v3428 = vunpack.c.l.b16 %v1125
        %v3429 = vunpack.c.h.b16 %v1125
        %v3430 = vunpack.c.l.b16 %v1126
        %v3431 = vunpack.c.h.b16 %v1126
        %v3432 = vunpack.c.l.b16 %v1127
        %v3433 = vunpack.c.h.b16 %v1127
        %v3434 = vunpack.c.l.b16 %v1128
        %v3435 = vunpack.c.h.b16 %v1128
        %v3436 = vunpack.c.l.b16 %v1129
        %v3437 = vunpack.c.h.b16 %v1129
        %v3438 = vunpack.c.l.b16 %v1130
        %v3439 = vunpack.c.h.b16 %v1130
        %v3440 = vunpack.c.l.b16 %v1131
        %v3441 = vunpack.c.h.b16 %v1131
        %v3442 = vunpack.c.l.b16 %v1132
        %v3443 = vunpack.c.h.b16 %v1132
        %v3444 = vunpack.c.l.b16 %v1133
        %v3445 = vunpack.c.h.b16 %v1133
        %v3446 = vunpack.c.l.b16 %v1134
        %v3447 = vunpack.c.h.b16 %v1134
        %v3448 = vunpack.c.l.b16 %v1135
        %v3449 = vunpack.c.h.b16 %v1135
        %v3450 = vunpack.c.l.b16 %v1136
        %v3451 = vunpack.c.h.b16 %v1136
        %v3452 = vunpack.c.l.b16 %v1137
        %v3453 = vunpack.c.h.b16 %v1137
        %v3454 = vunpack.c.l.b16 %v1138
        %v3455 = vunpack.c.h.b16 %v1138
        %v3456 = vunpack.c.l.b16 %v1139
        %v3457 = vunpack.c.h.b16 %v1139
        %v3458 = vunpack.c.l.b16 %v1140
        %v3459 = vunpack.c.h.b16 %v1140
        %v3460 = vunpack.c.l.b16 %v1141
        %v3461 = vunpack.c.h.b16 %v1141
        %v3462 = vunpack.c.l.b16 %v1142
        %v3463 = vunpack.c.h.b16 %v1142
        %v3464 = vunpack.c.l.b16 %v1143
        %v3465 = vunpack.c.h.b16 %v1143
        %v3466 = vunpack.c.l.b16 %v1144
        %v3467 = vunpack.c.h.b16 %v1144
        %v3468 = vunpack.c.l.b16 %v1145
        %v3469 = vunpack.c.h.b16 %v1145
        %v3470 = vunpack.c.l.b16 %v1146
        %v3471 = vunpack.c.h.b16 %v1146
        %v3472 = vunpack.c.l.b16 %v1147
        %v3473 = vunpack.c.h.b16 %v1147
        %v3474 = vunpack.c.l.b16 %v1148
        %v3475 = vunpack.c.h.b16 %v1148
        %v3476 = vunpack.c.l.b16 %v1149
        %v3477 = vunpack.c.h.b16 %v1149
        %v3478 = vunpack.c.l.b16 %v1150
        %v3479 = vunpack.c.h.b16 %v1150
        %v3480 = vunpack.c.l.b16 %v1151
        %v3481 = vunpack.c.h.b16 %v1151
        %v3482 = vunpack.c.l.b16 %v1152
        %v3483 = vunpack.c.h.b16 %v1152
        %v3484 = vunpack.c.l.b16 %v1153
        %v3485 = vunpack.c.h.b16 %v1153
        %v3486 = vunpack.c.l.b16 %v1154
        %v3487 = vunpack.c.h.b16 %v1154
        %v3488 = vunpack.c.l.b16 %v1155
        %v3489 = vunpack.c.h.b16 %v1155
        %v3490 = vunpack.c.l.b16 %v1156
        %v3491 = vunpack.c.h.b16 %v1156
        %v3492 = vunpack.c.l.b16 %v1157
        %v3493 = vunpack.c.h.b16 %v1157
        %v3494 = vunpack.c.l.b16 %v1158
        %v3495 = vunpack.c.h.b16 %v1158
        %v3496 = vunpack.c.l.b16 %v1159
        %v3497 = vunpack.c.h.b16 %v1159
        %v3498 = vunpack.c.l.b16 %v1160
        %v3499 = vunpack.c.h.b16 %v1160
        %v3500 = vunpack.c.l.b16 %v1161
        %v3501 = vunpack.c.h.b16 %v1161
        %v3502 = vunpack.c.l.b16 %v1162
        %v3503 = vunpack.c.h.b16 %v1162
        %v3504 = vunpack.c.l.b16 %v1163
        %v3505 = vunpack.c.h.b16 %v1163
        %v3506 = vunpack.c.l.b16 %v1164
        %v3507 = vunpack.c.h.b16 %v1164
        %v3508 = vunpack.c.l.b16 %v1165
        %v3509 = vunpack.c.h.b16 %v1165
        %v3510 = vunpack.c.l.b16 %v1166
        %v3511 = vunpack.c.h.b16 %v1166
        %v3512 = vunpack.c.l.b16 %v1167
        %v3513 = vunpack.c.h.b16 %v1167
        %v3514 = vunpack.c.l.b16 %v1168
        %v3515 = vunpack.c.h.b16 %v1168
        %v3516 = vunpack.c.l.b16 %v1169
        %v3517 = vunpack.c.h.b16 %v1169
        %v3518 = vunpack.c.l.b16 %v1170
        %v3519 = vunpack.c.h.b16 %v1170
        %v3520 = vunpack.c.l.b16 %v1171
        %v3521 = vunpack.c.h.b16 %v1171
        %v3522 = vunpack.c.l.b16 %v1172
        %v3523 = vunpack.c.h.b16 %v1172
        %v3524 = vunpack.c.l.b16 %v1173
        %v3525 = vunpack.c.h.b16 %v1173
        %v3526 = vunpack.c.l.b16 %v1174
        %v3527 = vunpack.c.h.b16 %v1174
        %v3528 = vunpack.c.l.b16 %v1175
        %v3529 = vunpack.c.h.b16 %v1175
        %v3530 = vunpack.c.l.b16 %v1176
        %v3531 = vunpack.c.h.b16 %v1176
        %v3532 = vunpack.c.l.b16 %v1177
        %v3533 = vunpack.c.h.b16 %v1177
        %v3534 = vunpack.c.l.b16 %v1178
        %v3535 = vunpack.c.h.b16 %v1178
        %v3536 = vunpack.c.l.b16 %v1179
        %v3537 = vunpack.c.h.b16 %v1179
        %v3538 = vunpack.c.l.b16 %v1180
        %v3539 = vunpack.c.h.b16 %v1180
        %v3540 = vunpack.c.l.b16 %v1181
        %v3541 = vunpack.c.h.b16 %v1181
        %v3542 = vunpack.c.l.b16 %v1182
        %v3543 = vunpack.c.h.b16 %v1182
        %v3544 = vunpack.c.l.b16 %v1183
        %v3545 = vunpack.c.h.b16 %v1183
        %v3546 = vunpack.c.l.b16 %v1184
        %v3547 = vunpack.c.h.b16 %v1184
        %v3548 = vunpack.c.l.b16 %v1185
        %v3549 = vunpack.c.h.b16 %v1185
        %v3550 = vpack.c.b16 %v2022, %v2014
        %v3551 = vpack.c.b16 %v2023, %v2015
        %v3552 = vpack.c.b16 %v2024, %v2016
        %v3553 = vpack.c.b16 %v2025, %v2017
        %v3554 = vpack.c.b16 %v2026, %v2018
        %v3555 = vpack.c.b16 %v2027, %v2019
        %v3556 = vpack.c.b16 %v2028, %v2020
        %v3557 = vpack.c.b16 %v2029, %v2021
        %v3558 = vpack.c.b16 %v2038, %v2030
        %v3559 = vpack.c.b16 %v2039, %v2031
        %v3560 = vpack.c.b16 %v2040, %v2032
        %v3561 = vpack.c.b16 %v2041, %v2033
        %v3562 = vpack.c.b16 %v2042, %v2034
        %v3563 = vpack.c.b16 %v2043, %v2035
        %v3564 = vpack.c.b16 %v2044, %v2036
        %v3565 = vpack.c.b16 %v2045, %v2037
        %v3566 = vpack.c.b16 %v2054, %v2046
        %v3567 = vpack.c.b16 %v2055, %v2047
        %v3568 = vpack.c.b16 %v2056, %v2048
        %v3569 = vpack.c.b16 %v2057, %v2049
        %v3570 = vpack.c.b16 %v2058, %v2050
        %v3571 = vpack.c.b16 %v2059, %v2051
        %v3572 = vpack.c.b16 %v2060, %v2052
        %v3573 = vpack.c.b16 %v2061, %v2053
        %v3574 = vpack.c.b16 %v2070, %v2062
        %v3575 = vpack.c.b16 %v2071, %v2063
        %v3576 = vpack.c.b16 %v2072, %v2064
        %v3577 = vpack.c.b16 %v2073, %v2065
        %v3578 = vpack.c.b16 %v2074, %v2066
        %v3579 = vpack.c.b16 %v2075, %v2067
        %v3580 = vpack.c.b16 %v2076, %v2068
        %v3581 = vpack.c.b16 %v2077, %v2069
        %v3582 = vpack.c.b16 %v2086, %v2078
        %v3583 = vpack.c.b16 %v2087, %v2079
        %v3584 = vpack.c.b16 %v2088, %v2080
        %v3585 = vpack.c.b16 %v2089, %v2081
        %v3586 = vpack.c.b16 %v2090, %v2082
        %v3587 = vpack.c.b16 %v2091, %v2083
        %v3588 = vpack.c.b16 %v2092, %v2084
        %v3589 = vpack.c.b16 %v2093, %v2085
        %v3590 = vpack.c.b16 %v2102, %v2094
        %v3591 = vpack.c.b16 %v2103, %v2095
        %v3592 = vpack.c.b16 %v2104, %v2096
        %v3593 = vpack.c.b16 %v2105, %v2097
        %v3594 = vpack.c.b16 %v2106, %v2098
        %v3595 = vpack.c.b16 %v2107, %v2099
        %v3596 = vpack.c.b16 %v2108, %v2100
        %v3597 = vpack.c.b16 %v2109, %v2101
        %v3598 = vpack.c.b16 %v2118, %v2110
        %v3599 = vpack.c.b16 %v2119, %v2111
        %v3600 = vpack.c.b16 %v2120, %v2112
        %v3601 = vpack.c.b16 %v2121, %v2113
        %v3602 = vpack.c.b16 %v2122, %v2114
        %v3603 = vpack.c.b16 %v2123, %v2115
        %v3604 = vpack.c.b16 %v2124, %v2116
        %v3605 = vpack.c.b16 %v2125, %v2117
        %v3606 = vpack.c.b16 %v2134, %v2126
        %v3607 = vpack.c.b16 %v2135, %v2127
        %v3608 = vpack.c.b16 %v2136, %v2128
        %v3609 = vpack.c.b16 %v2137, %v2129
        %v3610 = vpack.c.b16 %v2138, %v2130
        %v3611 = vpack.c.b16 %v2139, %v2131
        %v3612 = vpack.c.b16 %v2140, %v2132
        %v3613 = vpack.c.b16 %v2141, %v2133
        %v3614 = vpack.c.b16 %v2150, %v2142
        %v3615 = vpack.c.b16 %v2151, %v2143
        %v3616 = vpack.c.b16 %v2152, %v2144
        %v3617 = vpack.c.b16 %v2153, %v2145
        %v3618 = vpack.c.b16 %v2154, %v2146
        %v3619 = vpack.c.b16 %v2155, %v2147
        %v3620 = vpack.c.b16 %v2156, %v2148
        %v3621 = vpack.c.b16 %v2157, %v2149
        %v3622 = vpack.c.b16 %v2166, %v2158
        %v3623 = vpack.c.b16 %v2167, %v2159
        %v3624 = vpack.c.b16 %v2168, %v2160
        %v3625 = vpack.c.b16 %v2169, %v2161
        %v3626 = vpack.c.b16 %v2170, %v2162
        %v3627 = vpack.c.b16 %v2171, %v2163
        %v3628 = vpack.c.b16 %v2172, %v2164
        %v3629 = vpack.c.b16 %v2173, %v2165
        %v3630 = vpack.c.b16 %v2182, %v2174
        %v3631 = vpack.c.b16 %v2183, %v2175
        %v3632 = vpack.c.b16 %v2184, %v2176
        %v3633 = vpack.c.b16 %v2185, %v2177
        %v3634 = vpack.c.b16 %v2186, %v2178
        %v3635 = vpack.c.b16 %v2187, %v2179
        %v3636 = vpack.c.b16 %v2188, %v2180
        %v3637 = vpack.c.b16 %v2189, %v2181
        %v3638 = vpack.c.b16 %v2198, %v2190
        %v3639 = vpack.c.b16 %v2199, %v2191
        %v3640 = vpack.c.b16 %v2200, %v2192
        %v3641 = vpack.c.b16 %v2201, %v2193
        %v3642 = vpack.c.b16 %v2202, %v2194
        %v3643 = vpack.c.b16 %v2203, %v2195
        %v3644 = vpack.c.b16 %v2204, %v2196
        %v3645 = vpack.c.b16 %v2205, %v2197
        %v3646 = vpack.c.b16 %v2214, %v2206
        %v3647 = vpack.c.b16 %v2215, %v2207
        %v3648 = vpack.c.b16 %v2216, %v2208
        %v3649 = vpack.c.b16 %v2217, %v2209
        %v3650 = vpack.c.b16 %v2218, %v2210
        %v3651 = vpack.c.b16 %v2219, %v2211
        %v3652 = vpack.c.b16 %v2220, %v2212
        %v3653 = vpack.c.b16 %v2221, %v2213
        %v3654 = vpack.c.b16 %v2230, %v2222
        %v3655 = vpack.c.b16 %v2231, %v2223
        %v3656 = vpack.c.b16 %v2232, %v2224
        %v3657 = vpack.c.b16 %v2233, %v2225
        %v3658 = vpack.c.b16 %v2234, %v2226
        %v3659 = vpack.c.b16 %v2235, %v2227
        %v3660 = vpack.c.b16 %v2236, %v2228
        %v3661 = vpack.c.b16 %v2237, %v2229
        %v3662 = vpack.c.b16 %v2246, %v2238
        %v3663 = vpack.c.b16 %v2247, %v2239
        %v3664 = vpack.c.b16 %v2248, %v2240
        %v3665 = vpack.c.b16 %v2249, %v2241
        %v3666 = vpack.c.b16 %v2250, %v2242
        %v3667 = vpack.c.b16 %v2251, %v2243
        %v3668 = vpack.c.b16 %v2252, %v2244
        %v3669 = vpack.c.b16 %v2253, %v2245
        %v3670 = vpack.c.b16 %v2262, %v2254
        %v3671 = vpack.c.b16 %v2263, %v2255
        %v3672 = vpack.c.b16 %v2264, %v2256
        %v3673 = vpack.c.b16 %v2265, %v2257
        %v3674 = vpack.c.b16 %v2266, %v2258
        %v3675 = vpack.c.b16 %v2267, %v2259
        %v3676 = vpack.c.b16 %v2268, %v2260
        %v3677 = vpack.c.b16 %v2269, %v2261
        %v3678 = vpack.c.b16 %v2278, %v2270
        %v3679 = vpack.c.b16 %v2279, %v2271
        %v3680 = vpack.c.b16 %v2280, %v2272
        %v3681 = vpack.c.b16 %v2281, %v2273
        %v3682 = vpack.c.b16 %v2282, %v2274
        %v3683 = vpack.c.b16 %v2283, %v2275
        %v3684 = vpack.c.b16 %v2284, %v2276
        %v3685 = vpack.c.b16 %v2285, %v2277
        %v3686 = vpack.c.b16 %v2294, %v2286
        %v3687 = vpack.c.b16 %v2295, %v2287
        %v3688 = vpack.c.b16 %v2296, %v2288
        %v3689 = vpack.c.b16 %v2297, %v2289
        %v3690 = vpack.c.b16 %v2298, %v2290
        %v3691 = vpack.c.b16 %v2299, %v2291
        %v3692 = vpack.c.b16 %v2300, %v2292
        %v3693 = vpack.c.b16 %v2301, %v2293
        %v3694 = vpack.c.b16 %v2310, %v2302
        %v3695 = vpack.c.b16 %v2311, %v2303
        %v3696 = vpack.c.b16 %v2312, %v2304
        %v3697 = vpack.c.b16 %v2313, %v2305
        %v3698 = vpack.c.b16 %v2314, %v2306
        %v3699 = vpack.c.b16 %v2315, %v2307
        %v3700 = vpack.c.b16 %v2316, %v2308
        %v3701 = vpack.c.b16 %v2317, %v2309
        %v3702 = vpack.c.b16 %v2326, %v2318
        %v3703 = vpack.c.b16 %v2327, %v2319
        %v3704 = vpack.c.b16 %v2328, %v2320
        %v3705 = vpack.c.b16 %v2329, %v2321
        %v3706 = vpack.c.b16 %v2330, %v2322
        %v3707 = vpack.c.b16 %v2331, %v2323
        %v3708 = vpack.c.b16 %v2332, %v2324
        %v3709 = vpack.c.b16 %v2333, %v2325
        %v3710 = vpack.c.b16 %v2342, %v2334
        %v3711 = vpack.c.b16 %v2343, %v2335
        %v3712 = vpack.c.b16 %v2344, %v2336
        %v3713 = vpack.c.b16 %v2345, %v2337
        %v3714 = vpack.c.b16 %v2346, %v2338
        %v3715 = vpack.c.b16 %v2347, %v2339
        %v3716 = vpack.c.b16 %v2348, %v2340
        %v3717 = vpack.c.b16 %v2349, %v2341
        %v3718 = vpack.c.b16 %v2358, %v2350
        %v3719 = vpack.c.b16 %v2359, %v2351
        %v3720 = vpack.c.b16 %v2360, %v2352
        %v3721 = vpack.c.b16 %v2361, %v2353
        %v3722 = vpack.c.b16 %v2362, %v2354
        %v3723 = vpack.c.b16 %v2363, %v2355
        %v3724 = vpack.c.b16 %v2364, %v2356
        %v3725 = vpack.c.b16 %v2365, %v2357
        %v3726 = vpack.c.b16 %v2374, %v2366
        %v3727 = vpack.c.b16 %v2375, %v2367
        %v3728 = vpack.c.b16 %v2376, %v2368
        %v3729 = vpack.c.b16 %v2377, %v2369
        %v3730 = vpack.c.b16 %v2378, %v2370
        %v3731 = vpack.c.b16 %v2379, %v2371
        %v3732 = vpack.c.b16 %v2380, %v2372
        %v3733 = vpack.c.b16 %v2381, %v2373
        %v3734 = vpack.c.b16 %v2390, %v2382
        %v3735 = vpack.c.b16 %v2391, %v2383
        %v3736 = vpack.c.b16 %v2392, %v2384
        %v3737 = vpack.c.b16 %v2393, %v2385
        %v3738 = vpack.c.b16 %v2394, %v2386
        %v3739 = vpack.c.b16 %v2395, %v2387
        %v3740 = vpack.c.b16 %v2396, %v2388
        %v3741 = vpack.c.b16 %v2397, %v2389
        %v3742 = vpack.c.b16 %v2406, %v2398
        %v3743 = vpack.c.b16 %v2407, %v2399
        %v3744 = vpack.c.b16 %v2408, %v2400
        %v3745 = vpack.c.b16 %v2409, %v2401
        %v3746 = vpack.c.b16 %v2410, %v2402
        %v3747 = vpack.c.b16 %v2411, %v2403
        %v3748 = vpack.c.b16 %v2412, %v2404
        %v3749 = vpack.c.b16 %v2413, %v2405
        %v3750 = vpack.c.b16 %v2422, %v2414
        %v3751 = vpack.c.b16 %v2423, %v2415
        %v3752 = vpack.c.b16 %v2424, %v2416
        %v3753 = vpack.c.b16 %v2425, %v2417
        %v3754 = vpack.c.b16 %v2426, %v2418
        %v3755 = vpack.c.b16 %v2427, %v2419
        %v3756 = vpack.c.b16 %v2428, %v2420
        %v3757 = vpack.c.b16 %v2429, %v2421
        %v3758 = vpack.c.b16 %v2438, %v2430
        %v3759 = vpack.c.b16 %v2439, %v2431
        %v3760 = vpack.c.b16 %v2440, %v2432
        %v3761 = vpack.c.b16 %v2441, %v2433
        %v3762 = vpack.c.b16 %v2442, %v2434
        %v3763 = vpack.c.b16 %v2443, %v2435
        %v3764 = vpack.c.b16 %v2444, %v2436
        %v3765 = vpack.c.b16 %v2445, %v2437
        %v3766 = vpack.c.b16 %v2454, %v2446
        %v3767 = vpack.c.b16 %v2455, %v2447
        %v3768 = vpack.c.b16 %v2456, %v2448
        %v3769 = vpack.c.b16 %v2457, %v2449
        %v3770 = vpack.c.b16 %v2458, %v2450
        %v3771 = vpack.c.b16 %v2459, %v2451
        %v3772 = vpack.c.b16 %v2460, %v2452
        %v3773 = vpack.c.b16 %v2461, %v2453
        %v3774 = vpack.c.b16 %v2470, %v2462
        %v3775 = vpack.c.b16 %v2471, %v2463
        %v3776 = vpack.c.b16 %v2472, %v2464
        %v3777 = vpack.c.b16 %v2473, %v2465
        %v3778 = vpack.c.b16 %v2474, %v2466
        %v3779 = vpack.c.b16 %v2475, %v2467
        %v3780 = vpack.c.b16 %v2476, %v2468
        %v3781 = vpack.c.b16 %v2477, %v2469
        %v3782 = vpack.c.b16 %v2486, %v2478
        %v3783 = vpack.c.b16 %v2487, %v2479
        %v3784 = vpack.c.b16 %v2488, %v2480
        %v3785 = vpack.c.b16 %v2489, %v2481
        %v3786 = vpack.c.b16 %v2490, %v2482
        %v3787 = vpack.c.b16 %v2491, %v2483
        %v3788 = vpack.c.b16 %v2492, %v2484
        %v3789 = vpack.c.b16 %v2493, %v2485
        %v3790 = vpack.c.b16 %v2502, %v2494
        %v3791 = vpack.c.b16 %v2503, %v2495
        %v3792 = vpack.c.b16 %v2504, %v2496
        %v3793 = vpack.c.b16 %v2505, %v2497
        %v3794 = vpack.c.b16 %v2506, %v2498
        %v3795 = vpack.c.b16 %v2507, %v2499
        %v3796 = vpack.c.b16 %v2508, %v2500
        %v3797 = vpack.c.b16 %v2509, %v2501
        %v3798 = vpack.c.b16 %v2518, %v2510
        %v3799 = vpack.c.b16 %v2519, %v2511
        %v3800 = vpack.c.b16 %v2520, %v2512
        %v3801 = vpack.c.b16 %v2521, %v2513
        %v3802 = vpack.c.b16 %v2522, %v2514
        %v3803 = vpack.c.b16 %v2523, %v2515
        %v3804 = vpack.c.b16 %v2524, %v2516
        %v3805 = vpack.c.b16 %v2525, %v2517
        %v3806 = vpack.c.b16 %v2534, %v2526
        %v3807 = vpack.c.b16 %v2535, %v2527
        %v3808 = vpack.c.b16 %v2536, %v2528
        %v3809 = vpack.c.b16 %v2537, %v2529
        %v3810 = vpack.c.b16 %v2538, %v2530
        %v3811 = vpack.c.b16 %v2539, %v2531
        %v3812 = vpack.c.b16 %v2540, %v2532
        %v3813 = vpack.c.b16 %v2541, %v2533
        %v3814 = vpack.c.b16 %v2550, %v2542
        %v3815 = vpack.c.b16 %v2551, %v2543
        %v3816 = vpack.c.b16 %v2552, %v2544
        %v3817 = vpack.c.b16 %v2553, %v2545
        %v3818 = vpack.c.b16 %v2554, %v2546
        %v3819 = vpack.c.b16 %v2555, %v2547
        %v3820 = vpack.c.b16 %v2556, %v2548
        %v3821 = vpack.c.b16 %v2557, %v2549
        %v3822 = vpack.c.b16 %v2566, %v2558
        %v3823 = vpack.c.b16 %v2567, %v2559
        %v3824 = vpack.c.b16 %v2568, %v2560
        %v3825 = vpack.c.b16 %v2569, %v2561
        %v3826 = vpack.c.b16 %v2570, %v2562
        %v3827 = vpack.c.b16 %v2571, %v2563
        %v3828 = vpack.c.b16 %v2572, %v2564
        %v3829 = vpack.c.b16 %v2573, %v2565
        %v3830 = vpack.c.b16 %v2582, %v2574
        %v3831 = vpack.c.b16 %v2583, %v2575
        %v3832 = vpack.c.b16 %v2584, %v2576
        %v3833 = vpack.c.b16 %v2585, %v2577
        %v3834 = vpack.c.b16 %v2586, %v2578
        %v3835 = vpack.c.b16 %v2587, %v2579
        %v3836 = vpack.c.b16 %v2588, %v2580
        %v3837 = vpack.c.b16 %v2589, %v2581
        %v3838 = vpack.c.b16 %v2598, %v2590
        %v3839 = vpack.c.b16 %v2599, %v2591
        %v3840 = vpack.c.b16 %v2600, %v2592
        %v3841 = vpack.c.b16 %v2601, %v2593
        %v3842 = vpack.c.b16 %v2602, %v2594
        %v3843 = vpack.c.b16 %v2603, %v2595
        %v3844 = vpack.c.b16 %v2604, %v2596
        %v3845 = vpack.c.b16 %v2605, %v2597
        %v3846 = vpack.c.b16 %v2614, %v2606
        %v3847 = vpack.c.b16 %v2615, %v2607
        %v3848 = vpack.c.b16 %v2616, %v2608
        %v3849 = vpack.c.b16 %v2617, %v2609
        %v3850 = vpack.c.b16 %v2618, %v2610
        %v3851 = vpack.c.b16 %v2619, %v2611
        %v3852 = vpack.c.b16 %v2620, %v2612
        %v3853 = vpack.c.b16 %v2621, %v2613
        %v3854 = vpack.c.b16 %v2630, %v2622
        %v3855 = vpack.c.b16 %v2631, %v2623
        %v3856 = vpack.c.b16 %v2632, %v2624
        %v3857 = vpack.c.b16 %v2633, %v2625
        %v3858 = vpack.c.b16 %v2634, %v2626
        %v3859 = vpack.c.b16 %v2635, %v2627
        %v3860 = vpack.c.b16 %v2636, %v2628
        %v3861 = vpack.c.b16 %v2637, %v2629
        %v3862 = vpack.c.b16 %v2646, %v2638
        %v3863 = vpack.c.b16 %v2647, %v2639
        %v3864 = vpack.c.b16 %v2648, %v2640
        %v3865 = vpack.c.b16 %v2649, %v2641
        %v3866 = vpack.c.b16 %v2650, %v2642
        %v3867 = vpack.c.b16 %v2651, %v2643
        %v3868 = vpack.c.b16 %v2652, %v2644
        %v3869 = vpack.c.b16 %v2653, %v2645
        %v3870 = vpack.c.b16 %v2662, %v2654
        %v3871 = vpack.c.b16 %v2663, %v2655
        %v3872 = vpack.c.b16 %v2664, %v2656
        %v3873 = vpack.c.b16 %v2665, %v2657
        %v3874 = vpack.c.b16 %v2666, %v2658
        %v3875 = vpack.c.b16 %v2667, %v2659
        %v3876 = vpack.c.b16 %v2668, %v2660
        %v3877 = vpack.c.b16 %v2669, %v2661
        %v3878 = vpack.c.b16 %v2678, %v2670
        %v3879 = vpack.c.b16 %v2679, %v2671
        %v3880 = vpack.c.b16 %v2680, %v2672
        %v3881 = vpack.c.b16 %v2681, %v2673
        %v3882 = vpack.c.b16 %v2682, %v2674
        %v3883 = vpack.c.b16 %v2683, %v2675
        %v3884 = vpack.c.b16 %v2684, %v2676
        %v3885 = vpack.c.b16 %v2685, %v2677
        %v3886 = vpack.c.b16 %v2694, %v2686
        %v3887 = vpack.c.b16 %v2695, %v2687
        %v3888 = vpack.c.b16 %v2696, %v2688
        %v3889 = vpack.c.b16 %v2697, %v2689
        %v3890 = vpack.c.b16 %v2698, %v2690
        %v3891 = vpack.c.b16 %v2699, %v2691
        %v3892 = vpack.c.b16 %v2700, %v2692
        %v3893 = vpack.c.b16 %v2701, %v2693
        %v3894 = vpack.c.b16 %v2710, %v2702
        %v3895 = vpack.c.b16 %v2711, %v2703
        %v3896 = vpack.c.b16 %v2712, %v2704
        %v3897 = vpack.c.b16 %v2713, %v2705
        %v3898 = vpack.c.b16 %v2714, %v2706
        %v3899 = vpack.c.b16 %v2715, %v2707
        %v3900 = vpack.c.b16 %v2716, %v2708
        %v3901 = vpack.c.b16 %v2717, %v2709
        %v3902 = vpack.c.b16 %v2726, %v2718
        %v3903 = vpack.c.b16 %v2727, %v2719
        %v3904 = vpack.c.b16 %v2728, %v2720
        %v3905 = vpack.c.b16 %v2729, %v2721
        %v3906 = vpack.c.b16 %v2730, %v2722
        %v3907 = vpack.c.b16 %v2731, %v2723
        %v3908 = vpack.c.b16 %v2732, %v2724
        %v3909 = vpack.c.b16 %v2733, %v2725
        %v3910 = vpack.c.b16 %v2742, %v2734
        %v3911 = vpack.c.b16 %v2743, %v2735
        %v3912 = vpack.c.b16 %v2744, %v2736
        %v3913 = vpack.c.b16 %v2745, %v2737
        %v3914 = vpack.c.b16 %v2746, %v2738
        %v3915 = vpack.c.b16 %v2747, %v2739
        %v3916 = vpack.c.b16 %v2748, %v2740
        %v3917 = vpack.c.b16 %v2749, %v2741
        %v3918 = vpack.c.b16 %v2758, %v2750
        %v3919 = vpack.c.b16 %v2759, %v2751
        %v3920 = vpack.c.b16 %v2760, %v2752
        %v3921 = vpack.c.b16 %v2761, %v2753
        %v3922 = vpack.c.b16 %v2762, %v2754
        %v3923 = vpack.c.b16 %v2763, %v2755
        %v3924 = vpack.c.b16 %v2764, %v2756
        %v3925 = vpack.c.b16 %v2765, %v2757
        %v3926 = vpack.c.b16 %v2774, %v2766
        %v3927 = vpack.c.b16 %v2775, %v2767
        %v3928 = vpack.c.b16 %v2776, %v2768
        %v3929 = vpack.c.b16 %v2777, %v2769
        %v3930 = vpack.c.b16 %v2778, %v2770
        %v3931 = vpack.c.b16 %v2779, %v2771
        %v3932 = vpack.c.b16 %v2780, %v2772
        %v3933 = vpack.c.b16 %v2781, %v2773
        %v3934 = vpack.c.b16 %v2790, %v2782
        %v3935 = vpack.c.b16 %v2791, %v2783
        %v3936 = vpack.c.b16 %v2792, %v2784
        %v3937 = vpack.c.b16 %v2793, %v2785
        %v3938 = vpack.c.b16 %v2794, %v2786
        %v3939 = vpack.c.b16 %v2795, %v2787
        %v3940 = vpack.c.b16 %v2796, %v2788
        %v3941 = vpack.c.b16 %v2797, %v2789
        %v3942 = vpack.c.b16 %v2806, %v2798
        %v3943 = vpack.c.b16 %v2807, %v2799
        %v3944 = vpack.c.b16 %v2808, %v2800
        %v3945 = vpack.c.b16 %v2809, %v2801
        %v3946 = vpack.c.b16 %v2810, %v2802
        %v3947 = vpack.c.b16 %v2811, %v2803
        %v3948 = vpack.c.b16 %v2812, %v2804
        %v3949 = vpack.c.b16 %v2813, %v2805
        %v3950 = vpack.c.b16 %v2822, %v2814
        %v3951 = vpack.c.b16 %v2823, %v2815
        %v3952 = vpack.c.b16 %v2824, %v2816
        %v3953 = vpack.c.b16 %v2825, %v2817
        %v3954 = vpack.c.b16 %v2826, %v2818
        %v3955 = vpack.c.b16 %v2827, %v2819
        %v3956 = vpack.c.b16 %v2828, %v2820
        %v3957 = vpack.c.b16 %v2829, %v2821
        %v3958 = vpack.c.b16 %v2838, %v2830
        %v3959 = vpack.c.b16 %v2839, %v2831
        %v3960 = vpack.c.b16 %v2840, %v2832
        %v3961 = vpack.c.b16 %v2841, %v2833
        %v3962 = vpack.c.b16 %v2842, %v2834
        %v3963 = vpack.c.b16 %v2843, %v2835
        %v3964 = vpack.c.b16 %v2844, %v2836
        %v3965 = vpack.c.b16 %v2845, %v2837
        %v3966 = vpack.c.b16 %v2854, %v2846
        %v3967 = vpack.c.b16 %v2855, %v2847
        %v3968 = vpack.c.b16 %v2856, %v2848
        %v3969 = vpack.c.b16 %v2857, %v2849
        %v3970 = vpack.c.b16 %v2858, %v2850
        %v3971 = vpack.c.b16 %v2859, %v2851
        %v3972 = vpack.c.b16 %v2860, %v2852
        %v3973 = vpack.c.b16 %v2861, %v2853
        %v3974 = vpack.c.b16 %v2870, %v2862
        %v3975 = vpack.c.b16 %v2871, %v2863
        %v3976 = vpack.c.b16 %v2872, %v2864
        %v3977 = vpack.c.b16 %v2873, %v2865
        %v3978 = vpack.c.b16 %v2874, %v2866
        %v3979 = vpack.c.b16 %v2875, %v2867
        %v3980 = vpack.c.b16 %v2876, %v2868
        %v3981 = vpack.c.b16 %v2877, %v2869
        %v3982 = vpack.c.b16 %v2886, %v2878
        %v3983 = vpack.c.b16 %v2887, %v2879
        %v3984 = vpack.c.b16 %v2888, %v2880
        %v3985 = vpack.c.b16 %v2889, %v2881
        %v3986 = vpack.c.b16 %v2890, %v2882
        %v3987 = vpack.c.b16 %v2891, %v2883
        %v3988 = vpack.c.b16 %v2892, %v2884
        %v3989 = vpack.c.b16 %v2893, %v2885
        %v3990 = vpack.c.b16 %v2902, %v2894
        %v3991 = vpack.c.b16 %v2903, %v2895
        %v3992 = vpack.c.b16 %v2904, %v2896
        %v3993 = vpack.c.b16 %v2905, %v2897
        %v3994 = vpack.c.b16 %v2906, %v2898
        %v3995 = vpack.c.b16 %v2907, %v2899
        %v3996 = vpack.c.b16 %v2908, %v2900
        %v3997 = vpack.c.b16 %v2909, %v2901
        %v3998 = vpack.c.b16 %v2918, %v2910
        %v3999 = vpack.c.b16 %v2919, %v2911
        %v4000 = vpack.c.b16 %v2920, %v2912
        %v4001 = vpack.c.b16 %v2921, %v2913
        %v4002 = vpack.c.b16 %v2922, %v2914
        %v4003 = vpack.c.b16 %v2923, %v2915
        %v4004 = vpack.c.b16 %v2924, %v2916
        %v4005 = vpack.c.b16 %v2925, %v2917
        %v4006 = vpack.c.b16 %v2934, %v2926
        %v4007 = vpack.c.b16 %v2935, %v2927
        %v4008 = vpack.c.b16 %v2936, %v2928
        %v4009 = vpack.c.b16 %v2937, %v2929
        %v4010 = vpack.c.b16 %v2938, %v2930
        %v4011 = vpack.c.b16 %v2939, %v2931
        %v4012 = vpack.c.b16 %v2940, %v2932
        %v4013 = vpack.c.b16 %v2941, %v2933
        %v4014 = vpack.c.b16 %v2950, %v2942
        %v4015 = vpack.c.b16 %v2951, %v2943
        %v4016 = vpack.c.b16 %v2952, %v2944
        %v4017 = vpack.c.b16 %v2953, %v2945
        %v4018 = vpack.c.b16 %v2954, %v2946
        %v4019 = vpack.c.b16 %v2955, %v2947
        %v4020 = vpack.c.b16 %v2956, %v2948
        %v4021 = vpack.c.b16 %v2957, %v2949
        %v4022 = vpack.c.b16 %v2966, %v2958
        %v4023 = vpack.c.b16 %v2967, %v2959
        %v4024 = vpack.c.b16 %v2968, %v2960
        %v4025 = vpack.c.b16 %v2969, %v2961
        %v4026 = vpack.c.b16 %v2970, %v2962
        %v4027 = vpack.c.b16 %v2971, %v2963
        %v4028 = vpack.c.b16 %v2972, %v2964
        %v4029 = vpack.c.b16 %v2973, %v2965
        %v4030 = vpack.c.b16 %v2982, %v2974
        %v4031 = vpack.c.b16 %v2983, %v2975
        %v4032 = vpack.c.b16 %v2984, %v2976
        %v4033 = vpack.c.b16 %v2985, %v2977
        %v4034 = vpack.c.b16 %v2986, %v2978
        %v4035 = vpack.c.b16 %v2987, %v2979
        %v4036 = vpack.c.b16 %v2988, %v2980
        %v4037 = vpack.c.b16 %v2989, %v2981
        %v4038 = vpack.c.b16 %v2998, %v2990
        %v4039 = vpack.c.b16 %v2999, %v2991
        %v4040 = vpack.c.b16 %v3000, %v2992
        %v4041 = vpack.c.b16 %v3001, %v2993
        %v4042 = vpack.c.b16 %v3002, %v2994
        %v4043 = vpack.c.b16 %v3003, %v2995
        %v4044 = vpack.c.b16 %v3004, %v2996
        %v4045 = vpack.c.b16 %v3005, %v2997
        %v4046 = vpack.c.b16 %v3014, %v3006
        %v4047 = vpack.c.b16 %v3015, %v3007
        %v4048 = vpack.c.b16 %v3016, %v3008
        %v4049 = vpack.c.b16 %v3017, %v3009
        %v4050 = vpack.c.b16 %v3018, %v3010
        %v4051 = vpack.c.b16 %v3019, %v3011
        %v4052 = vpack.c.b16 %v3020, %v3012
        %v4053 = vpack.c.b16 %v3021, %v3013
        %v4054 = vpack.c.b16 %v3030, %v3022
        %v4055 = vpack.c.b16 %v3031, %v3023
        %v4056 = vpack.c.b16 %v3032, %v3024
        %v4057 = vpack.c.b16 %v3033, %v3025
        %v4058 = vpack.c.b16 %v3034, %v3026
        %v4059 = vpack.c.b16 %v3035, %v3027
        %v4060 = vpack.c.b16 %v3036, %v3028
        %v4061 = vpack.c.b16 %v3037, %v3029
        %v4062 = vpack.c.b16 %v3046, %v3038
        %v4063 = vpack.c.b16 %v3047, %v3039
        %v4064 = vpack.c.b16 %v3048, %v3040
        %v4065 = vpack.c.b16 %v3049, %v3041
        %v4066 = vpack.c.b16 %v3050, %v3042
        %v4067 = vpack.c.b16 %v3051, %v3043
        %v4068 = vpack.c.b16 %v3052, %v3044
        %v4069 = vpack.c.b16 %v3053, %v3045
        %v4070 = vpack.c.b16 %v3062, %v3054
        %v4071 = vpack.c.b16 %v3063, %v3055
        %v4072 = vpack.c.b16 %v3064, %v3056
        %v4073 = vpack.c.b16 %v3065, %v3057
        %v4074 = vpack.c.b16 %v3066, %v3058
        %v4075 = vpack.c.b16 %v3067, %v3059
        %v4076 = vpack.c.b16 %v3068, %v3060
        %v4077 = vpack.c.b16 %v3069, %v3061
        %v4078 = vpack.c.b16 %v3078, %v3070
        %v4079 = vpack.c.b16 %v3079, %v3071
        %v4080 = vpack.c.b16 %v3080, %v3072
        %v4081 = vpack.c.b16 %v3081, %v3073
        %v4082 = vpack.c.b16 %v3082, %v3074
        %v4083 = vpack.c.b16 %v3083, %v3075
        %v4084 = vpack.c.b16 %v3084, %v3076
        %v4085 = vpack.c.b16 %v3085, %v3077
        %v4086 = vpack.c.b16 %v3094, %v3086
        %v4087 = vpack.c.b16 %v3095, %v3087
        %v4088 = vpack.c.b16 %v3096, %v3088
        %v4089 = vpack.c.b16 %v3097, %v3089
        %v4090 = vpack.c.b16 %v3098, %v3090
        %v4091 = vpack.c.b16 %v3099, %v3091
        %v4092 = vpack.c.b16 %v3100, %v3092
        %v4093 = vpack.c.b16 %v3101, %v3093
        %v4094 = vpack.c.b16 %v3110, %v3102
        %v4095 = vpack.c.b16 %v3111, %v3103
        %v4096 = vpack.c.b16 %v3112, %v3104
        %v4097 = vpack.c.b16 %v3113, %v3105
        %v4098 = vpack.c.b16 %v3114, %v3106
        %v4099 = vpack.c.b16 %v3115, %v3107
        %v4100 = vpack.c.b16 %v3116, %v3108
        %v4101 = vpack.c.b16 %v3117, %v3109
        %v4102 = vpack.c.b16 %v3126, %v3118
        %v4103 = vpack.c.b16 %v3127, %v3119
        %v4104 = vpack.c.b16 %v3128, %v3120
        %v4105 = vpack.c.b16 %v3129, %v3121
        %v4106 = vpack.c.b16 %v3130, %v3122
        %v4107 = vpack.c.b16 %v3131, %v3123
        %v4108 = vpack.c.b16 %v3132, %v3124
        %v4109 = vpack.c.b16 %v3133, %v3125
        %v4110 = vpack.c.b16 %v3142, %v3134
        %v4111 = vpack.c.b16 %v3143, %v3135
        %v4112 = vpack.c.b16 %v3144, %v3136
        %v4113 = vpack.c.b16 %v3145, %v3137
        %v4114 = vpack.c.b16 %v3146, %v3138
        %v4115 = vpack.c.b16 %v3147, %v3139
        %v4116 = vpack.c.b16 %v3148, %v3140
        %v4117 = vpack.c.b16 %v3149, %v3141
        %v4118 = vpack.c.b16 %v3158, %v3150
        %v4119 = vpack.c.b16 %v3159, %v3151
        %v4120 = vpack.c.b16 %v3160, %v3152
        %v4121 = vpack.c.b16 %v3161, %v3153
        %v4122 = vpack.c.b16 %v3162, %v3154
        %v4123 = vpack.c.b16 %v3163, %v3155
        %v4124 = vpack.c.b16 %v3164, %v3156
        %v4125 = vpack.c.b16 %v3165, %v3157
        %v4126 = vpack.c.b16 %v3174, %v3166
        %v4127 = vpack.c.b16 %v3175, %v3167
        %v4128 = vpack.c.b16 %v3176, %v3168
        %v4129 = vpack.c.b16 %v3177, %v3169
        %v4130 = vpack.c.b16 %v3178, %v3170
        %v4131 = vpack.c.b16 %v3179, %v3171
        %v4132 = vpack.c.b16 %v3180, %v3172
        %v4133 = vpack.c.b16 %v3181, %v3173
        %v4134 = vpack.c.b16 %v3190, %v3182
        %v4135 = vpack.c.b16 %v3191, %v3183
        %v4136 = vpack.c.b16 %v3192, %v3184
        %v4137 = vpack.c.b16 %v3193, %v3185
        %v4138 = vpack.c.b16 %v3194, %v3186
        %v4139 = vpack.c.b16 %v3195, %v3187
        %v4140 = vpack.c.b16 %v3196, %v3188
        %v4141 = vpack.c.b16 %v3197, %v3189
        %v4142 = vpack.c.b16 %v3206, %v3198
        %v4143 = vpack.c.b16 %v3207, %v3199
        %v4144 = vpack.c.b16 %v3208, %v3200
        %v4145 = vpack.c.b16 %v3209, %v3201
        %v4146 = vpack.c.b16 %v3210, %v3202
        %v4147 = vpack.c.b16 %v3211, %v3203
        %v4148 = vpack.c.b16 %v3212, %v3204
        %v4149 = vpack.c.b16 %v3213, %v3205
        %v4150 = vpack.c.b16 %v3222, %v3214
        %v4151 = vpack.c.b16 %v3223, %v3215
        %v4152 = vpack.c.b16 %v3224, %v3216
        %v4153 = vpack.c.b16 %v3225, %v3217
        %v4154 = vpack.c.b16 %v3226, %v3218
        %v4155 = vpack.c.b16 %v3227, %v3219
        %v4156 = vpack.c.b16 %v3228, %v3220
        %v4157 = vpack.c.b16 %v3229, %v3221
        %v4158 = vpack.c.b16 %v3238, %v3230
        %v4159 = vpack.c.b16 %v3239, %v3231
        %v4160 = vpack.c.b16 %v3240, %v3232
        %v4161 = vpack.c.b16 %v3241, %v3233
        %v4162 = vpack.c.b16 %v3242, %v3234
        %v4163 = vpack.c.b16 %v3243, %v3235
        %v4164 = vpack.c.b16 %v3244, %v3236
        %v4165 = vpack.c.b16 %v3245, %v3237
        %v4166 = vpack.c.b16 %v3254, %v3246
        %v4167 = vpack.c.b16 %v3255, %v3247
        %v4168 = vpack.c.b16 %v3256, %v3248
        %v4169 = vpack.c.b16 %v3257, %v3249
        %v4170 = vpack.c.b16 %v3258, %v3250
        %v4171 = vpack.c.b16 %v3259, %v3251
        %v4172 = vpack.c.b16 %v3260, %v3252
        %v4173 = vpack.c.b16 %v3261, %v3253
        %v4174 = vpack.c.b16 %v3270, %v3262
        %v4175 = vpack.c.b16 %v3271, %v3263
        %v4176 = vpack.c.b16 %v3272, %v3264
        %v4177 = vpack.c.b16 %v3273, %v3265
        %v4178 = vpack.c.b16 %v3274, %v3266
        %v4179 = vpack.c.b16 %v3275, %v3267
        %v4180 = vpack.c.b16 %v3276, %v3268
        %v4181 = vpack.c.b16 %v3277, %v3269
        %v4182 = vpack.c.b16 %v3286, %v3278
        %v4183 = vpack.c.b16 %v3287, %v3279
        %v4184 = vpack.c.b16 %v3288, %v3280
        %v4185 = vpack.c.b16 %v3289, %v3281
        %v4186 = vpack.c.b16 %v3290, %v3282
        %v4187 = vpack.c.b16 %v3291, %v3283
        %v4188 = vpack.c.b16 %v3292, %v3284
        %v4189 = vpack.c.b16 %v3293, %v3285
        %v4190 = vpack.c.b16 %v3302, %v3294
        %v4191 = vpack.c.b16 %v3303, %v3295
        %v4192 = vpack.c.b16 %v3304, %v3296
        %v4193 = vpack.c.b16 %v3305, %v3297
        %v4194 = vpack.c.b16 %v3306, %v3298
        %v4195 = vpack.c.b16 %v3307, %v3299
        %v4196 = vpack.c.b16 %v3308, %v3300
        %v4197 = vpack.c.b16 %v3309, %v3301
        %v4198 = vpack.c.b16 %v3318, %v3310
        %v4199 = vpack.c.b16 %v3319, %v3311
        %v4200 = vpack.c.b16 %v3320, %v3312
        %v4201 = vpack.c.b16 %v3321, %v3313
        %v4202 = vpack.c.b16 %v3322, %v3314
        %v4203 = vpack.c.b16 %v3323, %v3315
        %v4204 = vpack.c.b16 %v3324, %v3316
        %v4205 = vpack.c.b16 %v3325, %v3317
        %v4206 = vpack.c.b16 %v3334, %v3326
        %v4207 = vpack.c.b16 %v3335, %v3327
        %v4208 = vpack.c.b16 %v3336, %v3328
        %v4209 = vpack.c.b16 %v3337, %v3329
        %v4210 = vpack.c.b16 %v3338, %v3330
        %v4211 = vpack.c.b16 %v3339, %v3331
        %v4212 = vpack.c.b16 %v3340, %v3332
        %v4213 = vpack.c.b16 %v3341, %v3333
        %v4214 = vpack.c.b16 %v3350, %v3342
        %v4215 = vpack.c.b16 %v3351, %v3343
        %v4216 = vpack.c.b16 %v3352, %v3344
        %v4217 = vpack.c.b16 %v3353, %v3345
        %v4218 = vpack.c.b16 %v3354, %v3346
        %v4219 = vpack.c.b16 %v3355, %v3347
        %v4220 = vpack.c.b16 %v3356, %v3348
        %v4221 = vpack.c.b16 %v3357, %v3349
        %v4222 = vpack.c.b16 %v3366, %v3358
        %v4223 = vpack.c.b16 %v3367, %v3359
        %v4224 = vpack.c.b16 %v3368, %v3360
        %v4225 = vpack.c.b16 %v3369, %v3361
        %v4226 = vpack.c.b16 %v3370, %v3362
        %v4227 = vpack.c.b16 %v3371, %v3363
        %v4228 = vpack.c.b16 %v3372, %v3364
        %v4229 = vpack.c.b16 %v3373, %v3365
        %v4230 = vpack.c.b16 %v3382, %v3374
        %v4231 = vpack.c.b16 %v3383, %v3375
        %v4232 = vpack.c.b16 %v3384, %v3376
        %v4233 = vpack.c.b16 %v3385, %v3377
        %v4234 = vpack.c.b16 %v3386, %v3378
        %v4235 = vpack.c.b16 %v3387, %v3379
        %v4236 = vpack.c.b16 %v3388, %v3380
        %v4237 = vpack.c.b16 %v3389, %v3381
        %v4238 = vpack.c.b16 %v3398, %v3390
        %v4239 = vpack.c.b16 %v3399, %v3391
        %v4240 = vpack.c.b16 %v3400, %v3392
        %v4241 = vpack.c.b16 %v3401, %v3393
        %v4242 = vpack.c.b16 %v3402, %v3394
        %v4243 = vpack.c.b16 %v3403, %v3395
        %v4244 = vpack.c.b16 %v3404, %v3396
        %v4245 = vpack.c.b16 %v3405, %v3397
        %v4246 = vpack.c.b16 %v3414, %v3406
        %v4247 = vpack.c.b16 %v3415, %v3407
        %v4248 = vpack.c.b16 %v3416, %v3408
        %v4249 = vpack.c.b16 %v3417, %v3409
        %v4250 = vpack.c.b16 %v3418, %v3410
        %v4251 = vpack.c.b16 %v3419, %v3411
        %v4252 = vpack.c.b16 %v3420, %v3412
        %v4253 = vpack.c.b16 %v3421, %v3413
        %v4254 = vpack.c.b16 %v3430, %v3422
        %v4255 = vpack.c.b16 %v3431, %v3423
        %v4256 = vpack.c.b16 %v3432, %v3424
        %v4257 = vpack.c.b16 %v3433, %v3425
        %v4258 = vpack.c.b16 %v3434, %v3426
        %v4259 = vpack.c.b16 %v3435, %v3427
        %v4260 = vpack.c.b16 %v3436, %v3428
        %v4261 = vpack.c.b16 %v3437, %v3429
        %v4262 = vpack.c.b16 %v3446, %v3438
        %v4263 = vpack.c.b16 %v3447, %v3439
        %v4264 = vpack.c.b16 %v3448, %v3440
        %v4265 = vpack.c.b16 %v3449, %v3441
        %v4266 = vpack.c.b16 %v3450, %v3442
        %v4267 = vpack.c.b16 %v3451, %v3443
        %v4268 = vpack.c.b16 %v3452, %v3444
        %v4269 = vpack.c.b16 %v3453, %v3445
        %v4270 = vpack.c.b16 %v3462, %v3454
        %v4271 = vpack.c.b16 %v3463, %v3455
        %v4272 = vpack.c.b16 %v3464, %v3456
        %v4273 = vpack.c.b16 %v3465, %v3457
        %v4274 = vpack.c.b16 %v3466, %v3458
        %v4275 = vpack.c.b16 %v3467, %v3459
        %v4276 = vpack.c.b16 %v3468, %v3460
        %v4277 = vpack.c.b16 %v3469, %v3461
        %v4278 = vpack.c.b16 %v3478, %v3470
        %v4279 = vpack.c.b16 %v3479, %v3471
        %v4280 = vpack.c.b16 %v3480, %v3472
        %v4281 = vpack.c.b16 %v3481, %v3473
        %v4282 = vpack.c.b16 %v3482, %v3474
        %v4283 = vpack.c.b16 %v3483, %v3475
        %v4284 = vpack.c.b16 %v3484, %v3476
        %v4285 = vpack.c.b16 %v3485, %v3477
        %v4286 = vpack.c.b16 %v3494, %v3486
        %v4287 = vpack.c.b16 %v3495, %v3487
        %v4288 = vpack.c.b16 %v3496, %v3488
        %v4289 = vpack.c.b16 %v3497, %v3489
        %v4290 = vpack.c.b16 %v3498, %v3490
        %v4291 = vpack.c.b16 %v3499, %v3491
        %v4292 = vpack.c.b16 %v3500, %v3492
        %v4293 = vpack.c.b16 %v3501, %v3493
        %v4294 = vpack.c.b16 %v3510, %v3502
        %v4295 = vpack.c.b16 %v3511, %v3503
        %v4296 = vpack.c.b16 %v3512, %v3504
        %v4297 = vpack.c.b16 %v3513, %v3505
        %v4298 = vpack.c.b16 %v3514, %v3506
        %v4299 = vpack.c.b16 %v3515, %v3507
        %v4300 = vpack.c.b16 %v3516, %v3508
        %v4301 = vpack.c.b16 %v3517, %v3509
        %v4302 = vpack.c.b16 %v3526, %v3518
        %v4303 = vpack.c.b16 %v3527, %v3519
        %v4304 = vpack.c.b16 %v3528, %v3520
        %v4305 = vpack.c.b16 %v3529, %v3521
        %v4306 = vpack.c.b16 %v3530, %v3522
        %v4307 = vpack.c.b16 %v3531, %v3523
        %v4308 = vpack.c.b16 %v3532, %v3524
        %v4309 = vpack.c.b16 %v3533, %v3525
        %v4310 = vpack.c.b16 %v3542, %v3534
        %v4311 = vpack.c.b16 %v3543, %v3535
        %v4312 = vpack.c.b16 %v3544, %v3536
        %v4313 = vpack.c.b16 %v3545, %v3537
        %v4314 = vpack.c.b16 %v3546, %v3538
        %v4315 = vpack.c.b16 %v3547, %v3539
        %v4316 = vpack.c.b16 %v3548, %v3540
        %v4317 = vpack.c.b16 %v3549, %v3541
        %5086 = vmatprep.subr.bf16.mxu0 %v3551
        %5087 = vmatpush1.bf16.msra.mxu0 %v3550
        %5088 = vmatprep.subr.bf16.mxu0 %v3559
        %5089 = vmatpush1.bf16.msra.mxu0 %v3558
        %5090 = vmatprep.subr.bf16.mxu0 %v3567
        %5091 = vmatpush1.bf16.msra.mxu0 %v3566
        %5092 = vmatprep.subr.bf16.mxu0 %v3575
        %5093 = vmatpush1.bf16.msra.mxu0 %v3574
        %5094 = vmatprep.subr.bf16.mxu0 %v3583
        %5095 = vmatpush1.bf16.msra.mxu0 %v3582
        %5096 = vmatprep.subr.bf16.mxu0 %v3591
        %5097 = vmatpush1.bf16.msra.mxu0 %v3590
        %5098 = vmatprep.subr.bf16.mxu0 %v3599
        %5099 = vmatpush1.bf16.msra.mxu0 %v3598
        %5100 = vmatprep.subr.bf16.mxu0 %v3607
        %5101 = vmatpush1.bf16.msra.mxu0 %v3606
        %5102 = vmatprep.subr.bf16.mxu0 %v3615
        %5103 = vmatpush1.bf16.msra.mxu0 %v3614
        %5104 = vmatprep.subr.bf16.mxu0 %v3623
        %5105 = vmatpush1.bf16.msra.mxu0 %v3622
        %5106 = vmatprep.subr.bf16.mxu0 %v3631
        %5107 = vmatpush1.bf16.msra.mxu0 %v3630
        %5108 = vmatprep.subr.bf16.mxu0 %v3639
        %5109 = vmatpush1.bf16.msra.mxu0 %v3638
        %5110 = vmatprep.subr.bf16.mxu0 %v3647
        %5111 = vmatpush1.bf16.msra.mxu0 %v3646
        %5112 = vmatprep.subr.bf16.mxu0 %v3655
        %5113 = vmatpush1.bf16.msra.mxu0 %v3654
        %5114 = vmatprep.subr.bf16.mxu0 %v3663
        %5115 = vmatpush1.bf16.msra.mxu0 %v3662
        %5116 = vmatprep.subr.bf16.mxu0 %v3671
        %5117 = vmatpush1.bf16.msra.mxu0 %v3670
        %5118 = vmatprep.mubr.bf16.mxu0 %v1223
        %5119 = vmatmul.mubr.bf16.gmra.mrb[0].mxu0 %v1222
        %v5120 = vpop.f32.mrb[0].mxu0
        %v5121 = vadd.f32 0.0, %v5120
        %v5122 = vpop.f32.mrb[0].mxu0
        %v5123 = vadd.f32 0.0, %v5122
        %v5124 = vpop.f32.mrb[0].mxu0
        %v5125 = vadd.f32 0.0, %v5124
        %v5126 = vpop.f32.mrb[0].mxu0
        %v5127 = vadd.f32 0.0, %v5126
        %5128 = vdwg.mxu0
        %5129 = vmatprep.subr.bf16.mxu0 %v3679
        %5130 = vmatpush1.bf16.msra.mxu0 %v3678
        %5131 = vmatprep.subr.bf16.mxu0 %v3687
        %5132 = vmatpush1.bf16.msra.mxu0 %v3686
        %5133 = vmatprep.subr.bf16.mxu0 %v3695
        %5134 = vmatpush1.bf16.msra.mxu0 %v3694
        %5135 = vmatprep.subr.bf16.mxu0 %v3703
        %5136 = vmatpush1.bf16.msra.mxu0 %v3702
        %5137 = vmatprep.subr.bf16.mxu0 %v3711
        %5138 = vmatpush1.bf16.msra.mxu0 %v3710
        %5139 = vmatprep.subr.bf16.mxu0 %v3719
        %5140 = vmatpush1.bf16.msra.mxu0 %v3718
        %5141 = vmatprep.subr.bf16.mxu0 %v3727
        %5142 = vmatpush1.bf16.msra.mxu0 %v3726
        %5143 = vmatprep.subr.bf16.mxu0 %v3735
        %5144 = vmatpush1.bf16.msra.mxu0 %v3734
        %5145 = vmatprep.subr.bf16.mxu0 %v3743
        %5146 = vmatpush1.bf16.msra.mxu0 %v3742
        %5147 = vmatprep.subr.bf16.mxu0 %v3751
        %5148 = vmatpush1.bf16.msra.mxu0 %v3750
        %5149 = vmatprep.subr.bf16.mxu0 %v3759
        %5150 = vmatpush1.bf16.msra.mxu0 %v3758
        %5151 = vmatprep.subr.bf16.mxu0 %v3767
        %5152 = vmatpush1.bf16.msra.mxu0 %v3766
        %5153 = vmatprep.subr.bf16.mxu0 %v3775
        %5154 = vmatpush1.bf16.msra.mxu0 %v3774
        %5155 = vmatprep.subr.bf16.mxu0 %v3783
        %5156 = vmatpush1.bf16.msra.mxu0 %v3782
        %5157 = vmatprep.subr.bf16.mxu0 %v3791
        %5158 = vmatpush1.bf16.msra.mxu0 %v3790
        %5159 = vmatprep.subr.bf16.mxu0 %v3799
        %5160 = vmatpush1.bf16.msra.mxu0 %v3798
        %5161 = vmatprep.mubr.bf16.mxu0 %v1225
        %5162 = vmatmul.mubr.bf16.gmra.mrb[0].mxu0 %v1224
        %v5163 = vpop.f32.mrb[0].mxu0
        %v5164 = vadd.f32 %v5121, %v5163
        %v5165 = vpop.f32.mrb[0].mxu0
        %v5166 = vadd.f32 %v5123, %v5165
        %v5167 = vpop.f32.mrb[0].mxu0
        %v5168 = vadd.f32 %v5125, %v5167
        %v5169 = vpop.f32.mrb[0].mxu0
        %v5170 = vadd.f32 %v5127, %v5169
        %5171 = vdwg.mxu0
        %5172 = vmatprep.subr.bf16.mxu0 %v3807
        %5173 = vmatpush1.bf16.msra.mxu0 %v3806
        %5174 = vmatprep.subr.bf16.mxu0 %v3815
        %5175 = vmatpush1.bf16.msra.mxu0 %v3814
        %5176 = vmatprep.subr.bf16.mxu0 %v3823
        %5177 = vmatpush1.bf16.msra.mxu0 %v3822
        %5178 = vmatprep.subr.bf16.mxu0 %v3831
        %5179 = vmatpush1.bf16.msra.mxu0 %v3830
        %5180 = vmatprep.subr.bf16.mxu0 %v3839
        %5181 = vmatpush1.bf16.msra.mxu0 %v3838
        %5182 = vmatprep.subr.bf16.mxu0 %v3847
        %5183 = vmatpush1.bf16.msra.mxu0 %v3846
        %5184 = vmatprep.subr.bf16.mxu0 %v3855
        %5185 = vmatpush1.bf16.msra.mxu0 %v3854
        %5186 = vmatprep.subr.bf16.mxu0 %v3863
        %5187 = vmatpush1.bf16.msra.mxu0 %v3862
        %5188 = vmatprep.subr.bf16.mxu0 %v3871
        %5189 = vmatpush1.bf16.msra.mxu0 %v3870
        %5190 = vmatprep.subr.bf16.mxu0 %v3879
        %5191 = vmatpush1.bf16.msra.mxu0 %v3878
        %5192 = vmatprep.subr.bf16.mxu0 %v3887
        %5193 = vmatpush1.bf16.msra.mxu0 %v3886
        %5194 = vmatprep.subr.bf16.mxu0 %v3895
        %5195 = vmatpush1.bf16.msra.mxu0 %v3894
        %5196 = vmatprep.subr.bf16.mxu0 %v3903
        %5197 = vmatpush1.bf16.msra.mxu0 %v3902
        %5198 = vmatprep.subr.bf16.mxu0 %v3911
        %5199 = vmatpush1.bf16.msra.mxu0 %v3910
        %5200 = vmatprep.subr.bf16.mxu0 %v3919
        %5201 = vmatpush1.bf16.msra.mxu0 %v3918
        %5202 = vmatprep.subr.bf16.mxu0 %v3927
        %5203 = vmatpush1.bf16.msra.mxu0 %v3926
        %5204 = vmatprep.mubr.bf16.mxu0 %v1227
        %5205 = vmatmul.mubr.bf16.gmra.mrb[0].mxu0 %v1226
        %v5206 = vpop.f32.mrb[0].mxu0
        %v5207 = vadd.f32 %v5164, %v5206
        %v5208 = vpop.f32.mrb[0].mxu0
        %v5209 = vadd.f32 %v5166, %v5208
        %v5210 = vpop.f32.mrb[0].mxu0
        %v5211 = vadd.f32 %v5168, %v5210
        %v5212 = vpop.f32.mrb[0].mxu0
        %v5213 = vadd.f32 %v5170, %v5212
        %5214 = vdwg.mxu0
        %5215 = vmatprep.subr.bf16.mxu0 %v3935
        %5216 = vmatpush1.bf16.msra.mxu0 %v3934
        %5217 = vmatprep.subr.bf16.mxu0 %v3943
        %5218 = vmatpush1.bf16.msra.mxu0 %v3942
        %5219 = vmatprep.subr.bf16.mxu0 %v3951
        %5220 = vmatpush1.bf16.msra.mxu0 %v3950
        %5221 = vmatprep.subr.bf16.mxu0 %v3959
        %5222 = vmatpush1.bf16.msra.mxu0 %v3958
        %5223 = vmatprep.subr.bf16.mxu0 %v3967
        %5224 = vmatpush1.bf16.msra.mxu0 %v3966
        %5225 = vmatprep.subr.bf16.mxu0 %v3975
        %5226 = vmatpush1.bf16.msra.mxu0 %v3974
        %5227 = vmatprep.subr.bf16.mxu0 %v3983
        %5228 = vmatpush1.bf16.msra.mxu0 %v3982
        %5229 = vmatprep.subr.bf16.mxu0 %v3991
        %5230 = vmatpush1.bf16.msra.mxu0 %v3990
        %5231 = vmatprep.subr.bf16.mxu0 %v3999
        %5232 = vmatpush1.bf16.msra.mxu0 %v3998
        %5233 = vmatprep.subr.bf16.mxu0 %v4007
        %5234 = vmatpush1.bf16.msra.mxu0 %v4006
        %5235 = vmatprep.subr.bf16.mxu0 %v4015
        %5236 = vmatpush1.bf16.msra.mxu0 %v4014
        %5237 = vmatprep.subr.bf16.mxu0 %v4023
        %5238 = vmatpush1.bf16.msra.mxu0 %v4022
        %5239 = vmatprep.subr.bf16.mxu0 %v4031
        %5240 = vmatpush1.bf16.msra.mxu0 %v4030
        %5241 = vmatprep.subr.bf16.mxu0 %v4039
        %5242 = vmatpush1.bf16.msra.mxu0 %v4038
        %5243 = vmatprep.subr.bf16.mxu0 %v4047
        %5244 = vmatpush1.bf16.msra.mxu0 %v4046
        %5245 = vmatprep.subr.bf16.mxu0 %v4055
        %5246 = vmatpush1.bf16.msra.mxu0 %v4054
        %5247 = vmatprep.mubr.bf16.mxu0 %v1229
        %5248 = vmatmul.mubr.bf16.gmra.mrb[0].mxu0 %v1228
        %v5249 = vpop.f32.mrb[0].mxu0
        %v5250 = vadd.f32 %v5207, %v5249
        %v5251 = vpop.f32.mrb[0].mxu0
        %v5252 = vadd.f32 %v5209, %v5251
        %v5253 = vpop.f32.mrb[0].mxu0
        %v5254 = vadd.f32 %v5211, %v5253
        %v5255 = vpop.f32.mrb[0].mxu0
        %v5256 = vadd.f32 %v5213, %v5255
        %5257 = vdwg.mxu0
        %5258 = vmatprep.subr.bf16.mxu0 %v4063
        %5259 = vmatpush1.bf16.msra.mxu0 %v4062
        %5260 = vmatprep.subr.bf16.mxu0 %v4071
        %5261 = vmatpush1.bf16.msra.mxu0 %v4070
        %5262 = vmatprep.subr.bf16.mxu0 %v4079
        %5263 = vmatpush1.bf16.msra.mxu0 %v4078
        %5264 = vmatprep.subr.bf16.mxu0 %v4087
        %5265 = vmatpush1.bf16.msra.mxu0 %v4086
        %5266 = vmatprep.subr.bf16.mxu0 %v4095
        %5267 = vmatpush1.bf16.msra.mxu0 %v4094
        %5268 = vmatprep.subr.bf16.mxu0 %v4103
        %5269 = vmatpush1.bf16.msra.mxu0 %v4102
        %5270 = vmatprep.subr.bf16.mxu0 %v4111
        %5271 = vmatpush1.bf16.msra.mxu0 %v4110
        %5272 = vmatprep.subr.bf16.mxu0 %v4119
        %5273 = vmatpush1.bf16.msra.mxu0 %v4118
        %5274 = vmatprep.subr.bf16.mxu0 %v4127
        %5275 = vmatpush1.bf16.msra.mxu0 %v4126
        %5276 = vmatprep.subr.bf16.mxu0 %v4135
        %5277 = vmatpush1.bf16.msra.mxu0 %v4134
        %5278 = vmatprep.subr.bf16.mxu0 %v4143
        %5279 = vmatpush1.bf16.msra.mxu0 %v4142
        %5280 = vmatprep.subr.bf16.mxu0 %v4151
        %5281 = vmatpush1.bf16.msra.mxu0 %v4150
        %5282 = vmatprep.subr.bf16.mxu0 %v4159
        %5283 = vmatpush1.bf16.msra.mxu0 %v4158
        %5284 = vmatprep.subr.bf16.mxu0 %v4167
        %5285 = vmatpush1.bf16.msra.mxu0 %v4166
        %5286 = vmatprep.subr.bf16.mxu0 %v4175
        %5287 = vmatpush1.bf16.msra.mxu0 %v4174
        %5288 = vmatprep.subr.bf16.mxu0 %v4183
        %5289 = vmatpush1.bf16.msra.mxu0 %v4182
        %5290 = vmatprep.mubr.bf16.mxu0 %v1231
        %5291 = vmatmul.mubr.bf16.gmra.mrb[0].mxu0 %v1230
        %v5292 = vpop.f32.mrb[0].mxu0
        %v5293 = vadd.f32 %v5250, %v5292
        %v5294 = vpop.f32.mrb[0].mxu0
        %v5295 = vadd.f32 %v5252, %v5294
        %v5296 = vpop.f32.mrb[0].mxu0
        %v5297 = vadd.f32 %v5254, %v5296
        %v5298 = vpop.f32.mrb[0].mxu0
        %v5299 = vadd.f32 %v5256, %v5298
        %5300 = vdwg.mxu0
        %5301 = vmatprep.subr.bf16.mxu0 %v4191
        %5302 = vmatpush1.bf16.msra.mxu0 %v4190
        %5303 = vmatprep.subr.bf16.mxu0 %v4199
        %5304 = vmatpush1.bf16.msra.mxu0 %v4198
        %5305 = vmatprep.subr.bf16.mxu0 %v4207
        %5306 = vmatpush1.bf16.msra.mxu0 %v4206
        %5307 = vmatprep.subr.bf16.mxu0 %v4215
        %5308 = vmatpush1.bf16.msra.mxu0 %v4214
        %5309 = vmatprep.subr.bf16.mxu0 %v4223
        %5310 = vmatpush1.bf16.msra.mxu0 %v4222
        %5311 = vmatprep.subr.bf16.mxu0 %v4231
        %5312 = vmatpush1.bf16.msra.mxu0 %v4230
        %5313 = vmatprep.subr.bf16.mxu0 %v4239
        %5314 = vmatpush1.bf16.msra.mxu0 %v4238
        %5315 = vmatprep.subr.bf16.mxu0 %v4247
        %5316 = vmatpush1.bf16.msra.mxu0 %v4246
        %5317 = vmatprep.subr.bf16.mxu0 %v4255
        %5318 = vmatpush1.bf16.msra.mxu0 %v4254
        %5319 = vmatprep.subr.bf16.mxu0 %v4263
        %5320 = vmatpush1.bf16.msra.mxu0 %v4262
        %5321 = vmatprep.subr.bf16.mxu0 %v4271
        %5322 = vmatpush1.bf16.msra.mxu0 %v4270
        %5323 = vmatprep.subr.bf16.mxu0 %v4279
        %5324 = vmatpush1.bf16.msra.mxu0 %v4278
        %5325 = vmatprep.subr.bf16.mxu0 %v4287
        %5326 = vmatpush1.bf16.msra.mxu0 %v4286
        %5327 = vmatprep.subr.bf16.mxu0 %v4295
        %5328 = vmatpush1.bf16.msra.mxu0 %v4294
        %5329 = vmatprep.subr.bf16.mxu0 %v4303
        %5330 = vmatpush1.bf16.msra.mxu0 %v4302
        %5331 = vmatprep.subr.bf16.mxu0 %v4311
        %5332 = vmatpush1.bf16.msra.mxu0 %v4310
        %5333 = vmatprep.mubr.bf16.mxu0 %v1233
        %5334 = vmatmul.mubr.bf16.gmra.mrb[0].mxu0 %v1232
        %v5335 = vpop.f32.mrb[0].mxu0
        %v5336 = vadd.f32 %v5293, %v5335
        %v5337 = vpop.f32.mrb[0].mxu0
        %v5338 = vadd.f32 %v5295, %v5337
        %v5339 = vpop.f32.mrb[0].mxu0
        %v5340 = vadd.f32 %v5297, %v5339
        %v5341 = vpop.f32.mrb[0].mxu0
        %v5342 = vadd.f32 %v5299, %v5341
        %5343 = vdwg.mxu0
        %5344 = vmatprep.subr.bf16.mxu0 %v3553
        %5345 = vmatpush1.bf16.msra.mxu0 %v3552
        %5346 = vmatprep.subr.bf16.mxu0 %v3561
        %5347 = vmatpush1.bf16.msra.mxu0 %v3560
        %5348 = vmatprep.subr.bf16.mxu0 %v3569
        %5349 = vmatpush1.bf16.msra.mxu0 %v3568
        %5350 = vmatprep.subr.bf16.mxu0 %v3577
        %5351 = vmatpush1.bf16.msra.mxu0 %v3576
        %5352 = vmatprep.subr.bf16.mxu0 %v3585
        %5353 = vmatpush1.bf16.msra.mxu0 %v3584
        %5354 = vmatprep.subr.bf16.mxu0 %v3593
        %5355 = vmatpush1.bf16.msra.mxu0 %v3592
        %5356 = vmatprep.subr.bf16.mxu0 %v3601
        %5357 = vmatpush1.bf16.msra.mxu0 %v3600
        %5358 = vmatprep.subr.bf16.mxu0 %v3609
        %5359 = vmatpush1.bf16.msra.mxu0 %v3608
        %5360 = vmatprep.subr.bf16.mxu0 %v3617
        %5361 = vmatpush1.bf16.msra.mxu0 %v3616
        %5362 = vmatprep.subr.bf16.mxu0 %v3625
        %5363 = vmatpush1.bf16.msra.mxu0 %v3624
        %5364 = vmatprep.subr.bf16.mxu0 %v3633
        %5365 = vmatpush1.bf16.msra.mxu0 %v3632
        %5366 = vmatprep.subr.bf16.mxu0 %v3641
        %5367 = vmatpush1.bf16.msra.mxu0 %v3640
        %5368 = vmatprep.subr.bf16.mxu0 %v3649
        %5369 = vmatpush1.bf16.msra.mxu0 %v3648
        %5370 = vmatprep.subr.bf16.mxu0 %v3657
        %5371 = vmatpush1.bf16.msra.mxu0 %v3656
        %5372 = vmatprep.subr.bf16.mxu0 %v3665
        %5373 = vmatpush1.bf16.msra.mxu0 %v3664
        %5374 = vmatprep.subr.bf16.mxu0 %v3673
        %5375 = vmatpush1.bf16.msra.mxu0 %v3672
        %5376 = vmatprep.mubr.bf16.mxu0 %v1223
        %5377 = vmatmul.mubr.bf16.gmra.mrb[0].mxu0 %v1222
        %v5378 = vpop.f32.mrb[0].mxu0
        %v5379 = vadd.f32 0.0, %v5378
        %v5380 = vpop.f32.mrb[0].mxu0
        %v5381 = vadd.f32 0.0, %v5380
        %v5382 = vpop.f32.mrb[0].mxu0
        %v5383 = vadd.f32 0.0, %v5382
        %v5384 = vpop.f32.mrb[0].mxu0
        %v5385 = vadd.f32 0.0, %v5384
        %5386 = vdwg.mxu0
        %5387 = vmatprep.subr.bf16.mxu0 %v3681
        %5388 = vmatpush1.bf16.msra.mxu0 %v3680
        %5389 = vmatprep.subr.bf16.mxu0 %v3689
        %5390 = vmatpush1.bf16.msra.mxu0 %v3688
        %5391 = vmatprep.subr.bf16.mxu0 %v3697
        %5392 = vmatpush1.bf16.msra.mxu0 %v3696
        %5393 = vmatprep.subr.bf16.mxu0 %v3705
        %5394 = vmatpush1.bf16.msra.mxu0 %v3704
        %5395 = vmatprep.subr.bf16.mxu0 %v3713
        %5396 = vmatpush1.bf16.msra.mxu0 %v3712
        %5397 = vmatprep.subr.bf16.mxu0 %v3721
        %5398 = vmatpush1.bf16.msra.mxu0 %v3720
        %5399 = vmatprep.subr.bf16.mxu0 %v3729
        %5400 = vmatpush1.bf16.msra.mxu0 %v3728
        %5401 = vmatprep.subr.bf16.mxu0 %v3737
        %5402 = vmatpush1.bf16.msra.mxu0 %v3736
        %5403 = vmatprep.subr.bf16.mxu0 %v3745
        %5404 = vmatpush1.bf16.msra.mxu0 %v3744
        %5405 = vmatprep.subr.bf16.mxu0 %v3753
        %5406 = vmatpush1.bf16.msra.mxu0 %v3752
        %5407 = vmatprep.subr.bf16.mxu0 %v3761
        %5408 = vmatpush1.bf16.msra.mxu0 %v3760
        %5409 = vmatprep.subr.bf16.mxu0 %v3769
        %5410 = vmatpush1.bf16.msra.mxu0 %v3768
        %5411 = vmatprep.subr.bf16.mxu0 %v3777
        %5412 = vmatpush1.bf16.msra.mxu0 %v3776
        %5413 = vmatprep.subr.bf16.mxu0 %v3785
        %5414 = vmatpush1.bf16.msra.mxu0 %v3784
        %5415 = vmatprep.subr.bf16.mxu0 %v3793
        %5416 = vmatpush1.bf16.msra.mxu0 %v3792
        %5417 = vmatprep.subr.bf16.mxu0 %v3801
        %5418 = vmatpush1.bf16.msra.mxu0 %v3800
        %5419 = vmatprep.mubr.bf16.mxu0 %v1225
        %5420 = vmatmul.mubr.bf16.gmra.mrb[0].mxu0 %v1224
        %v5421 = vpop.f32.mrb[0].mxu0
        %v5422 = vadd.f32 %v5379, %v5421
        %v5423 = vpop.f32.mrb[0].mxu0
        %v5424 = vadd.f32 %v5381, %v5423
        %v5425 = vpop.f32.mrb[0].mxu0
        %v5426 = vadd.f32 %v5383, %v5425
        %v5427 = vpop.f32.mrb[0].mxu0
        %v5428 = vadd.f32 %v5385, %v5427
        %5429 = vdwg.mxu0
        %5430 = vmatprep.subr.bf16.mxu0 %v3809
        %5431 = vmatpush1.bf16.msra.mxu0 %v3808
        %5432 = vmatprep.subr.bf16.mxu0 %v3817
        %5433 = vmatpush1.bf16.msra.mxu0 %v3816
        %5434 = vmatprep.subr.bf16.mxu0 %v3825
        %5435 = vmatpush1.bf16.msra.mxu0 %v3824
        %5436 = vmatprep.subr.bf16.mxu0 %v3833
        %5437 = vmatpush1.bf16.msra.mxu0 %v3832
        %5438 = vmatprep.subr.bf16.mxu0 %v3841
        %5439 = vmatpush1.bf16.msra.mxu0 %v3840
        %5440 = vmatprep.subr.bf16.mxu0 %v3849
        %5441 = vmatpush1.bf16.msra.mxu0 %v3848
        %5442 = vmatprep.subr.bf16.mxu0 %v3857
        %5443 = vmatpush1.bf16.msra.mxu0 %v3856
        %5444 = vmatprep.subr.bf16.mxu0 %v3865
        %5445 = vmatpush1.bf16.msra.mxu0 %v3864
        %5446 = vmatprep.subr.bf16.mxu0 %v3873
        %5447 = vmatpush1.bf16.msra.mxu0 %v3872
        %5448 = vmatprep.subr.bf16.mxu0 %v3881
        %5449 = vmatpush1.bf16.msra.mxu0 %v3880
        %5450 = vmatprep.subr.bf16.mxu0 %v3889
        %5451 = vmatpush1.bf16.msra.mxu0 %v3888
        %5452 = vmatprep.subr.bf16.mxu0 %v3897
        %5453 = vmatpush1.bf16.msra.mxu0 %v3896
        %5454 = vmatprep.subr.bf16.mxu0 %v3905
        %5455 = vmatpush1.bf16.msra.mxu0 %v3904
        %5456 = vmatprep.subr.bf16.mxu0 %v3913
        %5457 = vmatpush1.bf16.msra.mxu0 %v3912
        %5458 = vmatprep.subr.bf16.mxu0 %v3921
        %5459 = vmatpush1.bf16.msra.mxu0 %v3920
        %5460 = vmatprep.subr.bf16.mxu0 %v3929
        %5461 = vmatpush1.bf16.msra.mxu0 %v3928
        %5462 = vmatprep.mubr.bf16.mxu0 %v1227
        %5463 = vmatmul.mubr.bf16.gmra.mrb[0].mxu0 %v1226
        %v5464 = vpop.f32.mrb[0].mxu0
        %v5465 = vadd.f32 %v5422, %v5464
        %v5466 = vpop.f32.mrb[0].mxu0
        %v5467 = vadd.f32 %v5424, %v5466
        %v5468 = vpop.f32.mrb[0].mxu0
        %v5469 = vadd.f32 %v5426, %v5468
        %v5470 = vpop.f32.mrb[0].mxu0
        %v5471 = vadd.f32 %v5428, %v5470
        %5472 = vdwg.mxu0
        %5473 = vmatprep.subr.bf16.mxu0 %v3937
        %5474 = vmatpush1.bf16.msra.mxu0 %v3936
        %5475 = vmatprep.subr.bf16.mxu0 %v3945
        %5476 = vmatpush1.bf16.msra.mxu0 %v3944
        %5477 = vmatprep.subr.bf16.mxu0 %v3953
        %5478 = vmatpush1.bf16.msra.mxu0 %v3952
        %5479 = vmatprep.subr.bf16.mxu0 %v3961
        %5480 = vmatpush1.bf16.msra.mxu0 %v3960
        %5481 = vmatprep.subr.bf16.mxu0 %v3969
        %5482 = vmatpush1.bf16.msra.mxu0 %v3968
        %5483 = vmatprep.subr.bf16.mxu0 %v3977
        %5484 = vmatpush1.bf16.msra.mxu0 %v3976
        %5485 = vmatprep.subr.bf16.mxu0 %v3985
        %5486 = vmatpush1.bf16.msra.mxu0 %v3984
        %5487 = vmatprep.subr.bf16.mxu0 %v3993
        %5488 = vmatpush1.bf16.msra.mxu0 %v3992
        %5489 = vmatprep.subr.bf16.mxu0 %v4001
        %5490 = vmatpush1.bf16.msra.mxu0 %v4000
        %5491 = vmatprep.subr.bf16.mxu0 %v4009
        %5492 = vmatpush1.bf16.msra.mxu0 %v4008
        %5493 = vmatprep.subr.bf16.mxu0 %v4017
        %5494 = vmatpush1.bf16.msra.mxu0 %v4016
        %5495 = vmatprep.subr.bf16.mxu0 %v4025
        %5496 = vmatpush1.bf16.msra.mxu0 %v4024
        %5497 = vmatprep.subr.bf16.mxu0 %v4033
        %5498 = vmatpush1.bf16.msra.mxu0 %v4032
        %5499 = vmatprep.subr.bf16.mxu0 %v4041
        %5500 = vmatpush1.bf16.msra.mxu0 %v4040
        %5501 = vmatprep.subr.bf16.mxu0 %v4049
        %5502 = vmatpush1.bf16.msra.mxu0 %v4048
        %5503 = vmatprep.subr.bf16.mxu0 %v4057
        %5504 = vmatpush1.bf16.msra.mxu0 %v4056
        %5505 = vmatprep.mubr.bf16.mxu0 %v1229
        %5506 = vmatmul.mubr.bf16.gmra.mrb[0].mxu0 %v1228
        %v5507 = vpop.f32.mrb[0].mxu0
        %v5508 = vadd.f32 %v5465, %v5507
        %v5509 = vpop.f32.mrb[0].mxu0
        %v5510 = vadd.f32 %v5467, %v5509
        %v5511 = vpop.f32.mrb[0].mxu0
        %v5512 = vadd.f32 %v5469, %v5511
        %v5513 = vpop.f32.mrb[0].mxu0
        %v5514 = vadd.f32 %v5471, %v5513
        %5515 = vdwg.mxu0
        %5516 = vmatprep.subr.bf16.mxu0 %v4065
        %5517 = vmatpush1.bf16.msra.mxu0 %v4064
        %5518 = vmatprep.subr.bf16.mxu0 %v4073
        %5519 = vmatpush1.bf16.msra.mxu0 %v4072
        %5520 = vmatprep.subr.bf16.mxu0 %v4081
        %5521 = vmatpush1.bf16.msra.mxu0 %v4080
        %5522 = vmatprep.subr.bf16.mxu0 %v4089
        %5523 = vmatpush1.bf16.msra.mxu0 %v4088
        %5524 = vmatprep.subr.bf16.mxu0 %v4097
        %5525 = vmatpush1.bf16.msra.mxu0 %v4096
        %5526 = vmatprep.subr.bf16.mxu0 %v4105
        %5527 = vmatpush1.bf16.msra.mxu0 %v4104
        %5528 = vmatprep.subr.bf16.mxu0 %v4113
        %5529 = vmatpush1.bf16.msra.mxu0 %v4112
        %5530 = vmatprep.subr.bf16.mxu0 %v4121
        %5531 = vmatpush1.bf16.msra.mxu0 %v4120
        %5532 = vmatprep.subr.bf16.mxu0 %v4129
        %5533 = vmatpush1.bf16.msra.mxu0 %v4128
        %5534 = vmatprep.subr.bf16.mxu0 %v4137
        %5535 = vmatpush1.bf16.msra.mxu0 %v4136
        %5536 = vmatprep.subr.bf16.mxu0 %v4145
        %5537 = vmatpush1.bf16.msra.mxu0 %v4144
        %5538 = vmatprep.subr.bf16.mxu0 %v4153
        %5539 = vmatpush1.bf16.msra.mxu0 %v4152
        %5540 = vmatprep.subr.bf16.mxu0 %v4161
        %5541 = vmatpush1.bf16.msra.mxu0 %v4160
        %5542 = vmatprep.subr.bf16.mxu0 %v4169
        %5543 = vmatpush1.bf16.msra.mxu0 %v4168
        %5544 = vmatprep.subr.bf16.mxu0 %v4177
        %5545 = vmatpush1.bf16.msra.mxu0 %v4176
        %5546 = vmatprep.subr.bf16.mxu0 %v4185
        %5547 = vmatpush1.bf16.msra.mxu0 %v4184
        %5548 = vmatprep.mubr.bf16.mxu0 %v1231
        %5549 = vmatmul.mubr.bf16.gmra.mrb[0].mxu0 %v1230
        %v5550 = vpop.f32.mrb[0].mxu0
        %v5551 = vadd.f32 %v5508, %v5550
        %v5552 = vpop.f32.mrb[0].mxu0
        %v5553 = vadd.f32 %v5510, %v5552
        %v5554 = vpop.f32.mrb[0].mxu0
        %v5555 = vadd.f32 %v5512, %v5554
        %v5556 = vpop.f32.mrb[0].mxu0
        %v5557 = vadd.f32 %v5514, %v5556
        %5558 = vdwg.mxu0
        %5559 = vmatprep.subr.bf16.mxu0 %v4193
        %5560 = vmatpush1.bf16.msra.mxu0 %v4192
        %5561 = vmatprep.subr.bf16.mxu0 %v4201
        %5562 = vmatpush1.bf16.msra.mxu0 %v4200
        %5563 = vmatprep.subr.bf16.mxu0 %v4209
        %5564 = vmatpush1.bf16.msra.mxu0 %v4208
        %5565 = vmatprep.subr.bf16.mxu0 %v4217
        %5566 = vmatpush1.bf16.msra.mxu0 %v4216
        %5567 = vmatprep.subr.bf16.mxu0 %v4225
        %5568 = vmatpush1.bf16.msra.mxu0 %v4224
        %5569 = vmatprep.subr.bf16.mxu0 %v4233
        %5570 = vmatpush1.bf16.msra.mxu0 %v4232
        %5571 = vmatprep.subr.bf16.mxu0 %v4241
        %5572 = vmatpush1.bf16.msra.mxu0 %v4240
        %5573 = vmatprep.subr.bf16.mxu0 %v4249
        %5574 = vmatpush1.bf16.msra.mxu0 %v4248
        %5575 = vmatprep.subr.bf16.mxu0 %v4257
        %5576 = vmatpush1.bf16.msra.mxu0 %v4256
        %5577 = vmatprep.subr.bf16.mxu0 %v4265
        %5578 = vmatpush1.bf16.msra.mxu0 %v4264
        %5579 = vmatprep.subr.bf16.mxu0 %v4273
        %5580 = vmatpush1.bf16.msra.mxu0 %v4272
        %5581 = vmatprep.subr.bf16.mxu0 %v4281
        %5582 = vmatpush1.bf16.msra.mxu0 %v4280
        %5583 = vmatprep.subr.bf16.mxu0 %v4289
        %5584 = vmatpush1.bf16.msra.mxu0 %v4288
        %5585 = vmatprep.subr.bf16.mxu0 %v4297
        %5586 = vmatpush1.bf16.msra.mxu0 %v4296
        %5587 = vmatprep.subr.bf16.mxu0 %v4305
        %5588 = vmatpush1.bf16.msra.mxu0 %v4304
        %5589 = vmatprep.subr.bf16.mxu0 %v4313
        %5590 = vmatpush1.bf16.msra.mxu0 %v4312
        %5591 = vmatprep.mubr.bf16.mxu0 %v1233
        %5592 = vmatmul.mubr.bf16.gmra.mrb[0].mxu0 %v1232
        %v5593 = vpop.f32.mrb[0].mxu0
        %v5594 = vadd.f32 %v5551, %v5593
        %v5595 = vpop.f32.mrb[0].mxu0
        %v5596 = vadd.f32 %v5553, %v5595
        %v5597 = vpop.f32.mrb[0].mxu0
        %v5598 = vadd.f32 %v5555, %v5597
        %v5599 = vpop.f32.mrb[0].mxu0
        %v5600 = vadd.f32 %v5557, %v5599
        %5601 = vdwg.mxu0
        %5602 = vmatprep.subr.bf16.mxu0 %v3555
        %5603 = vmatpush1.bf16.msra.mxu0 %v3554
        %5604 = vmatprep.subr.bf16.mxu0 %v3563
        %5605 = vmatpush1.bf16.msra.mxu0 %v3562
        %5606 = vmatprep.subr.bf16.mxu0 %v3571
        %5607 = vmatpush1.bf16.msra.mxu0 %v3570
        %5608 = vmatprep.subr.bf16.mxu0 %v3579
        %5609 = vmatpush1.bf16.msra.mxu0 %v3578
        %5610 = vmatprep.subr.bf16.mxu0 %v3587
        %5611 = vmatpush1.bf16.msra.mxu0 %v3586
        %5612 = vmatprep.subr.bf16.mxu0 %v3595
        %5613 = vmatpush1.bf16.msra.mxu0 %v3594
        %5614 = vmatprep.subr.bf16.mxu0 %v3603
        %5615 = vmatpush1.bf16.msra.mxu0 %v3602
        %5616 = vmatprep.subr.bf16.mxu0 %v3611
        %5617 = vmatpush1.bf16.msra.mxu0 %v3610
        %5618 = vmatprep.subr.bf16.mxu0 %v3619
        %5619 = vmatpush1.bf16.msra.mxu0 %v3618
        %5620 = vmatprep.subr.bf16.mxu0 %v3627
        %5621 = vmatpush1.bf16.msra.mxu0 %v3626
        %5622 = vmatprep.subr.bf16.mxu0 %v3635
        %5623 = vmatpush1.bf16.msra.mxu0 %v3634
        %5624 = vmatprep.subr.bf16.mxu0 %v3643
        %5625 = vmatpush1.bf16.msra.mxu0 %v3642
        %5626 = vmatprep.subr.bf16.mxu0 %v3651
        %5627 = vmatpush1.bf16.msra.mxu0 %v3650
        %5628 = vmatprep.subr.bf16.mxu0 %v3659
        %5629 = vmatpush1.bf16.msra.mxu0 %v3658
        %5630 = vmatprep.subr.bf16.mxu0 %v3667
        %5631 = vmatpush1.bf16.msra.mxu0 %v3666
        %5632 = vmatprep.subr.bf16.mxu0 %v3675
        %5633 = vmatpush1.bf16.msra.mxu0 %v3674
        %5634 = vmatprep.mubr.bf16.mxu0 %v1223
        %5635 = vmatmul.mubr.bf16.gmra.mrb[0].mxu0 %v1222
        %v5636 = vpop.f32.mrb[0].mxu0
        %v5637 = vadd.f32 0.0, %v5636
        %v5638 = vpop.f32.mrb[0].mxu0
        %v5639 = vadd.f32 0.0, %v5638
        %v5640 = vpop.f32.mrb[0].mxu0
        %v5641 = vadd.f32 0.0, %v5640
        %v5642 = vpop.f32.mrb[0].mxu0
        %v5643 = vadd.f32 0.0, %v5642
        %5644 = vdwg.mxu0
        %5645 = vmatprep.subr.bf16.mxu0 %v3683
        %5646 = vmatpush1.bf16.msra.mxu0 %v3682
        %5647 = vmatprep.subr.bf16.mxu0 %v3691
        %5648 = vmatpush1.bf16.msra.mxu0 %v3690
        %5649 = vmatprep.subr.bf16.mxu0 %v3699
        %5650 = vmatpush1.bf16.msra.mxu0 %v3698
        %5651 = vmatprep.subr.bf16.mxu0 %v3707
        %5652 = vmatpush1.bf16.msra.mxu0 %v3706
        %5653 = vmatprep.subr.bf16.mxu0 %v3715
        %5654 = vmatpush1.bf16.msra.mxu0 %v3714
        %5655 = vmatprep.subr.bf16.mxu0 %v3723
        %5656 = vmatpush1.bf16.msra.mxu0 %v3722
        %5657 = vmatprep.subr.bf16.mxu0 %v3731
        %5658 = vmatpush1.bf16.msra.mxu0 %v3730
        %5659 = vmatprep.subr.bf16.mxu0 %v3739
        %5660 = vmatpush1.bf16.msra.mxu0 %v3738
        %5661 = vmatprep.subr.bf16.mxu0 %v3747
        %5662 = vmatpush1.bf16.msra.mxu0 %v3746
        %5663 = vmatprep.subr.bf16.mxu0 %v3755
        %5664 = vmatpush1.bf16.msra.mxu0 %v3754
        %5665 = vmatprep.subr.bf16.mxu0 %v3763
        %5666 = vmatpush1.bf16.msra.mxu0 %v3762
        %5667 = vmatprep.subr.bf16.mxu0 %v3771
        %5668 = vmatpush1.bf16.msra.mxu0 %v3770
        %5669 = vmatprep.subr.bf16.mxu0 %v3779
        %5670 = vmatpush1.bf16.msra.mxu0 %v3778
        %5671 = vmatprep.subr.bf16.mxu0 %v3787
        %5672 = vmatpush1.bf16.msra.mxu0 %v3786
        %5673 = vmatprep.subr.bf16.mxu0 %v3795
        %5674 = vmatpush1.bf16.msra.mxu0 %v3794
        %5675 = vmatprep.subr.bf16.mxu0 %v3803
        %5676 = vmatpush1.bf16.msra.mxu0 %v3802
        %5677 = vmatprep.mubr.bf16.mxu0 %v1225
        %5678 = vmatmul.mubr.bf16.gmra.mrb[0].mxu0 %v1224
        %v5679 = vpop.f32.mrb[0].mxu0
        %v5680 = vadd.f32 %v5637, %v5679
        %v5681 = vpop.f32.mrb[0].mxu0
        %v5682 = vadd.f32 %v5639, %v5681
        %v5683 = vpop.f32.mrb[0].mxu0
        %v5684 = vadd.f32 %v5641, %v5683
        %v5685 = vpop.f32.mrb[0].mxu0
        %v5686 = vadd.f32 %v5643, %v5685
        %5687 = vdwg.mxu0
        %5688 = vmatprep.subr.bf16.mxu0 %v3811
        %5689 = vmatpush1.bf16.msra.mxu0 %v3810
        %5690 = vmatprep.subr.bf16.mxu0 %v3819
        %5691 = vmatpush1.bf16.msra.mxu0 %v3818
        %5692 = vmatprep.subr.bf16.mxu0 %v3827
        %5693 = vmatpush1.bf16.msra.mxu0 %v3826
        %5694 = vmatprep.subr.bf16.mxu0 %v3835
        %5695 = vmatpush1.bf16.msra.mxu0 %v3834
        %5696 = vmatprep.subr.bf16.mxu0 %v3843
        %5697 = vmatpush1.bf16.msra.mxu0 %v3842
        %5698 = vmatprep.subr.bf16.mxu0 %v3851
        %5699 = vmatpush1.bf16.msra.mxu0 %v3850
        %5700 = vmatprep.subr.bf16.mxu0 %v3859
        %5701 = vmatpush1.bf16.msra.mxu0 %v3858
        %5702 = vmatprep.subr.bf16.mxu0 %v3867
        %5703 = vmatpush1.bf16.msra.mxu0 %v3866
        %5704 = vmatprep.subr.bf16.mxu0 %v3875
        %5705 = vmatpush1.bf16.msra.mxu0 %v3874
        %5706 = vmatprep.subr.bf16.mxu0 %v3883
        %5707 = vmatpush1.bf16.msra.mxu0 %v3882
        %5708 = vmatprep.subr.bf16.mxu0 %v3891
        %5709 = vmatpush1.bf16.msra.mxu0 %v3890
        %5710 = vmatprep.subr.bf16.mxu0 %v3899
        %5711 = vmatpush1.bf16.msra.mxu0 %v3898
        %5712 = vmatprep.subr.bf16.mxu0 %v3907
        %5713 = vmatpush1.bf16.msra.mxu0 %v3906
        %5714 = vmatprep.subr.bf16.mxu0 %v3915
        %5715 = vmatpush1.bf16.msra.mxu0 %v3914
        %5716 = vmatprep.subr.bf16.mxu0 %v3923
        %5717 = vmatpush1.bf16.msra.mxu0 %v3922
        %5718 = vmatprep.subr.bf16.mxu0 %v3931
        %5719 = vmatpush1.bf16.msra.mxu0 %v3930
        %5720 = vmatprep.mubr.bf16.mxu0 %v1227
        %5721 = vmatmul.mubr.bf16.gmra.mrb[0].mxu0 %v1226
        %v5722 = vpop.f32.mrb[0].mxu0
        %v5723 = vadd.f32 %v5680, %v5722
        %v5724 = vpop.f32.mrb[0].mxu0
        %v5725 = vadd.f32 %v5682, %v5724
        %v5726 = vpop.f32.mrb[0].mxu0
        %v5727 = vadd.f32 %v5684, %v5726
        %v5728 = vpop.f32.mrb[0].mxu0
        %v5729 = vadd.f32 %v5686, %v5728
        %5730 = vdwg.mxu0
        %5731 = vmatprep.subr.bf16.mxu0 %v3939
        %5732 = vmatpush1.bf16.msra.mxu0 %v3938
        %5733 = vmatprep.subr.bf16.mxu0 %v3947
        %5734 = vmatpush1.bf16.msra.mxu0 %v3946
        %5735 = vmatprep.subr.bf16.mxu0 %v3955
        %5736 = vmatpush1.bf16.msra.mxu0 %v3954
        %5737 = vmatprep.subr.bf16.mxu0 %v3963
        %5738 = vmatpush1.bf16.msra.mxu0 %v3962
        %5739 = vmatprep.subr.bf16.mxu0 %v3971
        %5740 = vmatpush1.bf16.msra.mxu0 %v3970
        %5741 = vmatprep.subr.bf16.mxu0 %v3979
        %5742 = vmatpush1.bf16.msra.mxu0 %v3978
        %5743 = vmatprep.subr.bf16.mxu0 %v3987
        %5744 = vmatpush1.bf16.msra.mxu0 %v3986
        %5745 = vmatprep.subr.bf16.mxu0 %v3995
        %5746 = vmatpush1.bf16.msra.mxu0 %v3994
        %5747 = vmatprep.subr.bf16.mxu0 %v4003
        %5748 = vmatpush1.bf16.msra.mxu0 %v4002
        %5749 = vmatprep.subr.bf16.mxu0 %v4011
        %5750 = vmatpush1.bf16.msra.mxu0 %v4010
        %5751 = vmatprep.subr.bf16.mxu0 %v4019
        %5752 = vmatpush1.bf16.msra.mxu0 %v4018
        %5753 = vmatprep.subr.bf16.mxu0 %v4027
        %5754 = vmatpush1.bf16.msra.mxu0 %v4026
        %5755 = vmatprep.subr.bf16.mxu0 %v4035
        %5756 = vmatpush1.bf16.msra.mxu0 %v4034
        %5757 = vmatprep.subr.bf16.mxu0 %v4043
        %5758 = vmatpush1.bf16.msra.mxu0 %v4042
        %5759 = vmatprep.subr.bf16.mxu0 %v4051
        %5760 = vmatpush1.bf16.msra.mxu0 %v4050
        %5761 = vmatprep.subr.bf16.mxu0 %v4059
        %5762 = vmatpush1.bf16.msra.mxu0 %v4058
        %5763 = vmatprep.mubr.bf16.mxu0 %v1229
        %5764 = vmatmul.mubr.bf16.gmra.mrb[0].mxu0 %v1228
        %v5765 = vpop.f32.mrb[0].mxu0
        %v5766 = vadd.f32 %v5723, %v5765
        %v5767 = vpop.f32.mrb[0].mxu0
        %v5768 = vadd.f32 %v5725, %v5767
        %v5769 = vpop.f32.mrb[0].mxu0
        %v5770 = vadd.f32 %v5727, %v5769
        %v5771 = vpop.f32.mrb[0].mxu0
        %v5772 = vadd.f32 %v5729, %v5771
        %5773 = vdwg.mxu0
        %5774 = vmatprep.subr.bf16.mxu0 %v4067
        %5775 = vmatpush1.bf16.msra.mxu0 %v4066
        %5776 = vmatprep.subr.bf16.mxu0 %v4075
        %5777 = vmatpush1.bf16.msra.mxu0 %v4074
        %5778 = vmatprep.subr.bf16.mxu0 %v4083
        %5779 = vmatpush1.bf16.msra.mxu0 %v4082
        %5780 = vmatprep.subr.bf16.mxu0 %v4091
        %5781 = vmatpush1.bf16.msra.mxu0 %v4090
        %5782 = vmatprep.subr.bf16.mxu0 %v4099
        %5783 = vmatpush1.bf16.msra.mxu0 %v4098
        %5784 = vmatprep.subr.bf16.mxu0 %v4107
        %5785 = vmatpush1.bf16.msra.mxu0 %v4106
        %5786 = vmatprep.subr.bf16.mxu0 %v4115
        %5787 = vmatpush1.bf16.msra.mxu0 %v4114
        %5788 = vmatprep.subr.bf16.mxu0 %v4123
        %5789 = vmatpush1.bf16.msra.mxu0 %v4122
        %5790 = vmatprep.subr.bf16.mxu0 %v4131
        %5791 = vmatpush1.bf16.msra.mxu0 %v4130
        %5792 = vmatprep.subr.bf16.mxu0 %v4139
        %5793 = vmatpush1.bf16.msra.mxu0 %v4138
        %5794 = vmatprep.subr.bf16.mxu0 %v4147
        %5795 = vmatpush1.bf16.msra.mxu0 %v4146
        %5796 = vmatprep.subr.bf16.mxu0 %v4155
        %5797 = vmatpush1.bf16.msra.mxu0 %v4154
        %5798 = vmatprep.subr.bf16.mxu0 %v4163
        %5799 = vmatpush1.bf16.msra.mxu0 %v4162
        %5800 = vmatprep.subr.bf16.mxu0 %v4171
        %5801 = vmatpush1.bf16.msra.mxu0 %v4170
        %5802 = vmatprep.subr.bf16.mxu0 %v4179
        %5803 = vmatpush1.bf16.msra.mxu0 %v4178
        %5804 = vmatprep.subr.bf16.mxu0 %v4187
        %5805 = vmatpush1.bf16.msra.mxu0 %v4186
        %5806 = vmatprep.mubr.bf16.mxu0 %v1231
        %5807 = vmatmul.mubr.bf16.gmra.mrb[0].mxu0 %v1230
        %v5808 = vpop.f32.mrb[0].mxu0
        %v5809 = vadd.f32 %v5766, %v5808
        %v5810 = vpop.f32.mrb[0].mxu0
        %v5811 = vadd.f32 %v5768, %v5810
        %v5812 = vpop.f32.mrb[0].mxu0
        %v5813 = vadd.f32 %v5770, %v5812
        %v5814 = vpop.f32.mrb[0].mxu0
        %v5815 = vadd.f32 %v5772, %v5814
        %5816 = vdwg.mxu0
        %5817 = vmatprep.subr.bf16.mxu0 %v4195
        %5818 = vmatpush1.bf16.msra.mxu0 %v4194
        %5819 = vmatprep.subr.bf16.mxu0 %v4203
        %5820 = vmatpush1.bf16.msra.mxu0 %v4202
        %5821 = vmatprep.subr.bf16.mxu0 %v4211
        %5822 = vmatpush1.bf16.msra.mxu0 %v4210
        %5823 = vmatprep.subr.bf16.mxu0 %v4219
        %5824 = vmatpush1.bf16.msra.mxu0 %v4218
        %5825 = vmatprep.subr.bf16.mxu0 %v4227
        %5826 = vmatpush1.bf16.msra.mxu0 %v4226
        %5827 = vmatprep.subr.bf16.mxu0 %v4235
        %5828 = vmatpush1.bf16.msra.mxu0 %v4234
        %5829 = vmatprep.subr.bf16.mxu0 %v4243
        %5830 = vmatpush1.bf16.msra.mxu0 %v4242
        %5831 = vmatprep.subr.bf16.mxu0 %v4251
        %5832 = vmatpush1.bf16.msra.mxu0 %v4250
        %5833 = vmatprep.subr.bf16.mxu0 %v4259
        %5834 = vmatpush1.bf16.msra.mxu0 %v4258
        %5835 = vmatprep.subr.bf16.mxu0 %v4267
        %5836 = vmatpush1.bf16.msra.mxu0 %v4266
        %5837 = vmatprep.subr.bf16.mxu0 %v4275
        %5838 = vmatpush1.bf16.msra.mxu0 %v4274
        %5839 = vmatprep.subr.bf16.mxu0 %v4283
        %5840 = vmatpush1.bf16.msra.mxu0 %v4282
        %5841 = vmatprep.subr.bf16.mxu0 %v4291
        %5842 = vmatpush1.bf16.msra.mxu0 %v4290
        %5843 = vmatprep.subr.bf16.mxu0 %v4299
        %5844 = vmatpush1.bf16.msra.mxu0 %v4298
        %5845 = vmatprep.subr.bf16.mxu0 %v4307
        %5846 = vmatpush1.bf16.msra.mxu0 %v4306
        %5847 = vmatprep.subr.bf16.mxu0 %v4315
        %5848 = vmatpush1.bf16.msra.mxu0 %v4314
        %5849 = vmatprep.mubr.bf16.mxu0 %v1233
        %5850 = vmatmul.mubr.bf16.gmra.mrb[0].mxu0 %v1232
        %v5851 = vpop.f32.mrb[0].mxu0
        %v5852 = vadd.f32 %v5809, %v5851
        %v5853 = vpop.f32.mrb[0].mxu0
        %v5854 = vadd.f32 %v5811, %v5853
        %v5855 = vpop.f32.mrb[0].mxu0
        %v5856 = vadd.f32 %v5813, %v5855
        %v5857 = vpop.f32.mrb[0].mxu0
        %v5858 = vadd.f32 %v5815, %v5857
        %5859 = vdwg.mxu0
        %5860 = vmatprep.subr.bf16.mxu0 %v3557
        %5861 = vmatpush1.bf16.msra.mxu0 %v3556
        %5862 = vmatprep.subr.bf16.mxu0 %v3565
        %5863 = vmatpush1.bf16.msra.mxu0 %v3564
        %5864 = vmatprep.subr.bf16.mxu0 %v3573
        %5865 = vmatpush1.bf16.msra.mxu0 %v3572
        %5866 = vmatprep.subr.bf16.mxu0 %v3581
        %5867 = vmatpush1.bf16.msra.mxu0 %v3580
        %5868 = vmatprep.subr.bf16.mxu0 %v3589
        %5869 = vmatpush1.bf16.msra.mxu0 %v3588
        %5870 = vmatprep.subr.bf16.mxu0 %v3597
        %5871 = vmatpush1.bf16.msra.mxu0 %v3596
        %5872 = vmatprep.subr.bf16.mxu0 %v3605
        %5873 = vmatpush1.bf16.msra.mxu0 %v3604
        %5874 = vmatprep.subr.bf16.mxu0 %v3613
        %5875 = vmatpush1.bf16.msra.mxu0 %v3612
        %5876 = vmatprep.subr.bf16.mxu0 %v3621
        %5877 = vmatpush1.bf16.msra.mxu0 %v3620
        %5878 = vmatprep.subr.bf16.mxu0 %v3629
        %5879 = vmatpush1.bf16.msra.mxu0 %v3628
        %5880 = vmatprep.subr.bf16.mxu0 %v3637
        %5881 = vmatpush1.bf16.msra.mxu0 %v3636
        %5882 = vmatprep.subr.bf16.mxu0 %v3645
        %5883 = vmatpush1.bf16.msra.mxu0 %v3644
        %5884 = vmatprep.subr.bf16.mxu0 %v3653
        %5885 = vmatpush1.bf16.msra.mxu0 %v3652
        %5886 = vmatprep.subr.bf16.mxu0 %v3661
        %5887 = vmatpush1.bf16.msra.mxu0 %v3660
        %5888 = vmatprep.subr.bf16.mxu0 %v3669
        %5889 = vmatpush1.bf16.msra.mxu0 %v3668
        %5890 = vmatprep.subr.bf16.mxu0 %v3677
        %5891 = vmatpush1.bf16.msra.mxu0 %v3676
        %5892 = vmatprep.mubr.bf16.mxu0 %v1223
        %5893 = vmatmul.mubr.bf16.gmra.mrb[0].mxu0 %v1222
        %v5894 = vpop.f32.mrb[0].mxu0
        %v5895 = vadd.f32 0.0, %v5894
        %v5896 = vpop.f32.mrb[0].mxu0
        %v5897 = vadd.f32 0.0, %v5896
        %v5898 = vpop.f32.mrb[0].mxu0
        %v5899 = vadd.f32 0.0, %v5898
        %v5900 = vpop.f32.mrb[0].mxu0
        %v5901 = vadd.f32 0.0, %v5900
        %5902 = vdwg.mxu0
        %5903 = vmatprep.subr.bf16.mxu0 %v3685
        %5904 = vmatpush1.bf16.msra.mxu0 %v3684
        %5905 = vmatprep.subr.bf16.mxu0 %v3693
        %5906 = vmatpush1.bf16.msra.mxu0 %v3692
        %5907 = vmatprep.subr.bf16.mxu0 %v3701
        %5908 = vmatpush1.bf16.msra.mxu0 %v3700
        %5909 = vmatprep.subr.bf16.mxu0 %v3709
        %5910 = vmatpush1.bf16.msra.mxu0 %v3708
        %5911 = vmatprep.subr.bf16.mxu0 %v3717
        %5912 = vmatpush1.bf16.msra.mxu0 %v3716
        %5913 = vmatprep.subr.bf16.mxu0 %v3725
        %5914 = vmatpush1.bf16.msra.mxu0 %v3724
        %5915 = vmatprep.subr.bf16.mxu0 %v3733
        %5916 = vmatpush1.bf16.msra.mxu0 %v3732
        %5917 = vmatprep.subr.bf16.mxu0 %v3741
        %5918 = vmatpush1.bf16.msra.mxu0 %v3740
        %5919 = vmatprep.subr.bf16.mxu0 %v3749
        %5920 = vmatpush1.bf16.msra.mxu0 %v3748
        %5921 = vmatprep.subr.bf16.mxu0 %v3757
        %5922 = vmatpush1.bf16.msra.mxu0 %v3756
        %5923 = vmatprep.subr.bf16.mxu0 %v3765
        %5924 = vmatpush1.bf16.msra.mxu0 %v3764
        %5925 = vmatprep.subr.bf16.mxu0 %v3773
        %5926 = vmatpush1.bf16.msra.mxu0 %v3772
        %5927 = vmatprep.subr.bf16.mxu0 %v3781
        %5928 = vmatpush1.bf16.msra.mxu0 %v3780
        %5929 = vmatprep.subr.bf16.mxu0 %v3789
        %5930 = vmatpush1.bf16.msra.mxu0 %v3788
        %5931 = vmatprep.subr.bf16.mxu0 %v3797
        %5932 = vmatpush1.bf16.msra.mxu0 %v3796
        %5933 = vmatprep.subr.bf16.mxu0 %v3805
        %5934 = vmatpush1.bf16.msra.mxu0 %v3804
        %5935 = vmatprep.mubr.bf16.mxu0 %v1225
        %5936 = vmatmul.mubr.bf16.gmra.mrb[0].mxu0 %v1224
        %v5937 = vpop.f32.mrb[0].mxu0
        %v5938 = vadd.f32 %v5895, %v5937
        %v5939 = vpop.f32.mrb[0].mxu0
        %v5940 = vadd.f32 %v5897, %v5939
        %v5941 = vpop.f32.mrb[0].mxu0
        %v5942 = vadd.f32 %v5899, %v5941
        %v5943 = vpop.f32.mrb[0].mxu0
        %v5944 = vadd.f32 %v5901, %v5943
        %5945 = vdwg.mxu0
        %5946 = vmatprep.subr.bf16.mxu0 %v3813
        %5947 = vmatpush1.bf16.msra.mxu0 %v3812
        %5948 = vmatprep.subr.bf16.mxu0 %v3821
        %5949 = vmatpush1.bf16.msra.mxu0 %v3820
        %5950 = vmatprep.subr.bf16.mxu0 %v3829
        %5951 = vmatpush1.bf16.msra.mxu0 %v3828
        %5952 = vmatprep.subr.bf16.mxu0 %v3837
        %5953 = vmatpush1.bf16.msra.mxu0 %v3836
        %5954 = vmatprep.subr.bf16.mxu0 %v3845
        %5955 = vmatpush1.bf16.msra.mxu0 %v3844
        %5956 = vmatprep.subr.bf16.mxu0 %v3853
        %5957 = vmatpush1.bf16.msra.mxu0 %v3852
        %5958 = vmatprep.subr.bf16.mxu0 %v3861
        %5959 = vmatpush1.bf16.msra.mxu0 %v3860
        %5960 = vmatprep.subr.bf16.mxu0 %v3869
        %5961 = vmatpush1.bf16.msra.mxu0 %v3868
        %5962 = vmatprep.subr.bf16.mxu0 %v3877
        %5963 = vmatpush1.bf16.msra.mxu0 %v3876
        %5964 = vmatprep.subr.bf16.mxu0 %v3885
        %5965 = vmatpush1.bf16.msra.mxu0 %v3884
        %5966 = vmatprep.subr.bf16.mxu0 %v3893
        %5967 = vmatpush1.bf16.msra.mxu0 %v3892
        %5968 = vmatprep.subr.bf16.mxu0 %v3901
        %5969 = vmatpush1.bf16.msra.mxu0 %v3900
        %5970 = vmatprep.subr.bf16.mxu0 %v3909
        %5971 = vmatpush1.bf16.msra.mxu0 %v3908
        %5972 = vmatprep.subr.bf16.mxu0 %v3917
        %5973 = vmatpush1.bf16.msra.mxu0 %v3916
        %5974 = vmatprep.subr.bf16.mxu0 %v3925
        %5975 = vmatpush1.bf16.msra.mxu0 %v3924
        %5976 = vmatprep.subr.bf16.mxu0 %v3933
        %5977 = vmatpush1.bf16.msra.mxu0 %v3932
        %5978 = vmatprep.mubr.bf16.mxu0 %v1227
        %5979 = vmatmul.mubr.bf16.gmra.mrb[0].mxu0 %v1226
        %v5980 = vpop.f32.mrb[0].mxu0
        %v5981 = vadd.f32 %v5938, %v5980
        %v5982 = vpop.f32.mrb[0].mxu0
        %v5983 = vadd.f32 %v5940, %v5982
        %v5984 = vpop.f32.mrb[0].mxu0
        %v5985 = vadd.f32 %v5942, %v5984
        %v5986 = vpop.f32.mrb[0].mxu0
        %v5987 = vadd.f32 %v5944, %v5986
        %5988 = vdwg.mxu0
        %5989 = vmatprep.subr.bf16.mxu0 %v3941
        %5990 = vmatpush1.bf16.msra.mxu0 %v3940
        %5991 = vmatprep.subr.bf16.mxu0 %v3949
        %5992 = vmatpush1.bf16.msra.mxu0 %v3948
        %5993 = vmatprep.subr.bf16.mxu0 %v3957
        %5994 = vmatpush1.bf16.msra.mxu0 %v3956
        %5995 = vmatprep.subr.bf16.mxu0 %v3965
        %5996 = vmatpush1.bf16.msra.mxu0 %v3964
        %5997 = vmatprep.subr.bf16.mxu0 %v3973
        %5998 = vmatpush1.bf16.msra.mxu0 %v3972
        %5999 = vmatprep.subr.bf16.mxu0 %v3981
        %6000 = vmatpush1.bf16.msra.mxu0 %v3980
        %6001 = vmatprep.subr.bf16.mxu0 %v3989
        %6002 = vmatpush1.bf16.msra.mxu0 %v3988
        %6003 = vmatprep.subr.bf16.mxu0 %v3997
        %6004 = vmatpush1.bf16.msra.mxu0 %v3996
        %6005 = vmatprep.subr.bf16.mxu0 %v4005
        %6006 = vmatpush1.bf16.msra.mxu0 %v4004
        %6007 = vmatprep.subr.bf16.mxu0 %v4013
        %6008 = vmatpush1.bf16.msra.mxu0 %v4012
        %6009 = vmatprep.subr.bf16.mxu0 %v4021
        %6010 = vmatpush1.bf16.msra.mxu0 %v4020
        %6011 = vmatprep.subr.bf16.mxu0 %v4029
        %6012 = vmatpush1.bf16.msra.mxu0 %v4028
        %6013 = vmatprep.subr.bf16.mxu0 %v4037
        %6014 = vmatpush1.bf16.msra.mxu0 %v4036
        %6015 = vmatprep.subr.bf16.mxu0 %v4045
        %6016 = vmatpush1.bf16.msra.mxu0 %v4044
        %6017 = vmatprep.subr.bf16.mxu0 %v4053
        %6018 = vmatpush1.bf16.msra.mxu0 %v4052
        %6019 = vmatprep.subr.bf16.mxu0 %v4061
        %6020 = vmatpush1.bf16.msra.mxu0 %v4060
        %6021 = vmatprep.mubr.bf16.mxu0 %v1229
        %6022 = vmatmul.mubr.bf16.gmra.mrb[0].mxu0 %v1228
        %v6023 = vpop.f32.mrb[0].mxu0
        %v6024 = vadd.f32 %v5981, %v6023
        %v6025 = vpop.f32.mrb[0].mxu0
        %v6026 = vadd.f32 %v5983, %v6025
        %v6027 = vpop.f32.mrb[0].mxu0
        %v6028 = vadd.f32 %v5985, %v6027
        %v6029 = vpop.f32.mrb[0].mxu0
        %v6030 = vadd.f32 %v5987, %v6029
        %6031 = vdwg.mxu0
        %6032 = vmatprep.subr.bf16.mxu0 %v4069
        %6033 = vmatpush1.bf16.msra.mxu0 %v4068
        %6034 = vmatprep.subr.bf16.mxu0 %v4077
        %6035 = vmatpush1.bf16.msra.mxu0 %v4076
        %6036 = vmatprep.subr.bf16.mxu0 %v4085
        %6037 = vmatpush1.bf16.msra.mxu0 %v4084
        %6038 = vmatprep.subr.bf16.mxu0 %v4093
        %6039 = vmatpush1.bf16.msra.mxu0 %v4092
        %6040 = vmatprep.subr.bf16.mxu0 %v4101
        %6041 = vmatpush1.bf16.msra.mxu0 %v4100
        %6042 = vmatprep.subr.bf16.mxu0 %v4109
        %6043 = vmatpush1.bf16.msra.mxu0 %v4108
        %6044 = vmatprep.subr.bf16.mxu0 %v4117
        %6045 = vmatpush1.bf16.msra.mxu0 %v4116
        %6046 = vmatprep.subr.bf16.mxu0 %v4125
        %6047 = vmatpush1.bf16.msra.mxu0 %v4124
        %6048 = vmatprep.subr.bf16.mxu0 %v4133
        %6049 = vmatpush1.bf16.msra.mxu0 %v4132
        %6050 = vmatprep.subr.bf16.mxu0 %v4141
        %6051 = vmatpush1.bf16.msra.mxu0 %v4140
        %6052 = vmatprep.subr.bf16.mxu0 %v4149
        %6053 = vmatpush1.bf16.msra.mxu0 %v4148
        %6054 = vmatprep.subr.bf16.mxu0 %v4157
        %6055 = vmatpush1.bf16.msra.mxu0 %v4156
        %6056 = vmatprep.subr.bf16.mxu0 %v4165
        %6057 = vmatpush1.bf16.msra.mxu0 %v4164
        %6058 = vmatprep.subr.bf16.mxu0 %v4173
        %6059 = vmatpush1.bf16.msra.mxu0 %v4172
        %6060 = vmatprep.subr.bf16.mxu0 %v4181
        %6061 = vmatpush1.bf16.msra.mxu0 %v4180
        %6062 = vmatprep.subr.bf16.mxu0 %v4189
        %6063 = vmatpush1.bf16.msra.mxu0 %v4188
        %6064 = vmatprep.mubr.bf16.mxu0 %v1231
        %6065 = vmatmul.mubr.bf16.gmra.mrb[0].mxu0 %v1230
        %v6066 = vpop.f32.mrb[0].mxu0
        %v6067 = vadd.f32 %v6024, %v6066
        %v6068 = vpop.f32.mrb[0].mxu0
        %v6069 = vadd.f32 %v6026, %v6068
        %v6070 = vpop.f32.mrb[0].mxu0
        %v6071 = vadd.f32 %v6028, %v6070
        %v6072 = vpop.f32.mrb[0].mxu0
        %v6073 = vadd.f32 %v6030, %v6072
        %6074 = vdwg.mxu0
        %6075 = vmatprep.subr.bf16.mxu0 %v4197
        %6076 = vmatpush1.bf16.msra.mxu0 %v4196
        %6077 = vmatprep.subr.bf16.mxu0 %v4205
        %6078 = vmatpush1.bf16.msra.mxu0 %v4204
        %6079 = vmatprep.subr.bf16.mxu0 %v4213
        %6080 = vmatpush1.bf16.msra.mxu0 %v4212
        %6081 = vmatprep.subr.bf16.mxu0 %v4221
        %6082 = vmatpush1.bf16.msra.mxu0 %v4220
        %6083 = vmatprep.subr.bf16.mxu0 %v4229
        %6084 = vmatpush1.bf16.msra.mxu0 %v4228
        %6085 = vmatprep.subr.bf16.mxu0 %v4237
        %6086 = vmatpush1.bf16.msra.mxu0 %v4236
        %6087 = vmatprep.subr.bf16.mxu0 %v4245
        %6088 = vmatpush1.bf16.msra.mxu0 %v4244
        %6089 = vmatprep.subr.bf16.mxu0 %v4253
        %6090 = vmatpush1.bf16.msra.mxu0 %v4252
        %6091 = vmatprep.subr.bf16.mxu0 %v4261
        %6092 = vmatpush1.bf16.msra.mxu0 %v4260
        %6093 = vmatprep.subr.bf16.mxu0 %v4269
        %6094 = vmatpush1.bf16.msra.mxu0 %v4268
        %6095 = vmatprep.subr.bf16.mxu0 %v4277
        %6096 = vmatpush1.bf16.msra.mxu0 %v4276
        %6097 = vmatprep.subr.bf16.mxu0 %v4285
        %6098 = vmatpush1.bf16.msra.mxu0 %v4284
        %6099 = vmatprep.subr.bf16.mxu0 %v4293
        %6100 = vmatpush1.bf16.msra.mxu0 %v4292
        %6101 = vmatprep.subr.bf16.mxu0 %v4301
        %6102 = vmatpush1.bf16.msra.mxu0 %v4300
        %6103 = vmatprep.subr.bf16.mxu0 %v4309
        %6104 = vmatpush1.bf16.msra.mxu0 %v4308
        %6105 = vmatprep.subr.bf16.mxu0 %v4317
        %6106 = vmatpush1.bf16.msra.mxu0 %v4316
        %6107 = vmatprep.mubr.bf16.mxu0 %v1233
        %6108 = vmatmul.mubr.bf16.gmra.mrb[0].mxu0 %v1232
        %v6109 = vpop.f32.mrb[0].mxu0
        %v6110 = vadd.f32 %v6067, %v6109
        %v6111 = vpop.f32.mrb[0].mxu0
        %v6112 = vadd.f32 %v6069, %v6111
        %v6113 = vpop.f32.mrb[0].mxu0
        %v6114 = vadd.f32 %v6071, %v6113
        %v6115 = vpop.f32.mrb[0].mxu0
        %v6116 = vadd.f32 %v6073, %v6115
        %6117 = vdwg.mxu0
        %v6118 = vadd.f32 %v390, %v5336
        %v6119 = vadd.f32 %v391, %v5338
        %v6120 = vadd.f32 %v392, %v5594
        %v6121 = vadd.f32 %v393, %v5596
        %v6122 = vadd.f32 %v394, %v5852
        %v6123 = vadd.f32 %v395, %v5854
        %v6124 = vadd.f32 %v396, %v6110
        %v6125 = vadd.f32 %v397, %v6112
        %v6126 = vadd.f32 %v398, %v5340
        %v6127 = vadd.f32 %v399, %v5342
        %v6128 = vadd.f32 %v400, %v5598
        %v6129 = vadd.f32 %v401, %v5600
        %v6130 = vadd.f32 %v402, %v5856
        %v6131 = vadd.f32 %v403, %v5858
        %v6132 = vadd.f32 %v404, %v6114
        %v6133 = vadd.f32 %v405, %v6116
        %6134 = vst [vmem:[#allocation2] sm:$0xff] %v6118
        %6135 = vst [vmem:[#allocation2 + $0x8] sm:$0xff] %v6119
        %6136 = vst [vmem:[#allocation2 + $0x10] sm:$0xff] %v6120
        %6137 = vst [vmem:[#allocation2 + $0x18] sm:$0xff] %v6121
        %6138 = vst [vmem:[#allocation2 + $0x20] sm:$0xff] %v6122
        %6139 = vst [vmem:[#allocation2 + $0x28] sm:$0xff] %v6123
        %6140 = vst [vmem:[#allocation2 + $0x30] sm:$0xff] %v6124
        %6141 = vst [vmem:[#allocation2 + $0x38] sm:$0xff] %v6125
        %6142 = vst [vmem:[#allocation2 + $0x40] sm:$0xff] %v6126
        %6143 = vst [vmem:[#allocation2 + $0x48] sm:$0xff] %v6127
        %6144 = vst [vmem:[#allocation2 + $0x50] sm:$0xff] %v6128
        %6145 = vst [vmem:[#allocation2 + $0x58] sm:$0xff] %v6129
        %6146 = vst [vmem:[#allocation2 + $0x60] sm:$0xff] %v6130
        %6147 = vst [vmem:[#allocation2 + $0x68] sm:$0xff] %v6131
        %6148 = vst [vmem:[#allocation2 + $0x70] sm:$0xff] %v6132
        %6149 = vst [vmem:[#allocation2 + $0x78] sm:$0xff] %v6133
        %p6150 = scmp.eq.s32.totalorder %s26, 1
        // Predicated region
        $region84: #{ffnn_forward.1} parent=58 // pred_check
          %p6151 = pneg %p6150
        $region85: #{ffnn_forward.1} parent=58 // pred_check_branch
          %6153 = sbr.rel (%p6151) target = $region87
        $region86: #{ffnn_forward.1} parent=58 // pred_region
          %v6154 = vld [vmem:[#allocation2] sm:$0xff]
          %v6155 = vld [vmem:[#allocation2 + $0x8] sm:$0xff]
          %v6156 = vld [vmem:[#allocation2 + $0x10] sm:$0xff]
          %v6157 = vld [vmem:[#allocation2 + $0x18] sm:$0xff]
          %v6158 = vld [vmem:[#allocation2 + $0x20] sm:$0xff]
          %v6159 = vld [vmem:[#allocation2 + $0x28] sm:$0xff]
          %v6160 = vld [vmem:[#allocation2 + $0x30] sm:$0xff]
          %v6161 = vld [vmem:[#allocation2 + $0x38] sm:$0xff]
          %v6162 = vld [vmem:[#allocation2 + $0x40] sm:$0xff]
          %v6163 = vld [vmem:[#allocation2 + $0x48] sm:$0xff]
          %v6164 = vld [vmem:[#allocation2 + $0x50] sm:$0xff]
          %v6165 = vld [vmem:[#allocation2 + $0x58] sm:$0xff]
          %v6166 = vld [vmem:[#allocation2 + $0x60] sm:$0xff]
          %v6167 = vld [vmem:[#allocation2 + $0x68] sm:$0xff]
          %v6168 = vld [vmem:[#allocation2 + $0x70] sm:$0xff]
          %v6169 = vld [vmem:[#allocation2 + $0x78] sm:$0xff]
          %v6170 = vld [vmem:[#allocation6] sm:$0xff]
          %v6172 = vlaneseq
          %v6173 = vshrl.u32 %v6172, 7
          %v6174 = vsub.s32 0, %v6173
          %v6175 = vrot.slane %v6170, %v6174
          %v6176 = vlaneseq
          %v6177 = vshrl.u32 %v6176, 7
          %v6178 = vsub.s32 1, %v6177
          %v6179 = vrot.slane %v6170, %v6178
          %v6180 = vlaneseq
          %v6181 = vshrl.u32 %v6180, 7
          %v6182 = vsub.s32 2, %v6181
          %v6183 = vrot.slane %v6170, %v6182
          %v6184 = vlaneseq
          %v6185 = vshrl.u32 %v6184, 7
          %v6186 = vsub.s32 3, %v6185
          %v6187 = vrot.slane %v6170, %v6186
          %v6188 = vlaneseq
          %v6189 = vshrl.u32 %v6188, 7
          %v6190 = vsub.s32 4, %v6189
          %v6191 = vrot.slane %v6170, %v6190
          %v6192 = vlaneseq
          %v6193 = vshrl.u32 %v6192, 7
          %v6194 = vsub.s32 5, %v6193
          %v6195 = vrot.slane %v6170, %v6194
          %v6196 = vlaneseq
          %v6197 = vshrl.u32 %v6196, 7
          %v6198 = vsub.s32 6, %v6197
          %v6199 = vrot.slane %v6170, %v6198
          %v6200 = vlaneseq
          %v6201 = vshrl.u32 %v6200, 7
          %v6202 = vsub.s32 7, %v6201
          %v6203 = vrot.slane %v6170, %v6202
          %v6212 = vadd.f32 %v6154, %v6175
          %v6213 = vadd.f32 %v6155, %v6179
          %v6214 = vadd.f32 %v6156, %v6183
          %v6215 = vadd.f32 %v6157, %v6187
          %v6216 = vadd.f32 %v6158, %v6191
          %v6217 = vadd.f32 %v6159, %v6195
          %v6218 = vadd.f32 %v6160, %v6199
          %v6219 = vadd.f32 %v6161, %v6203
          %v6220 = vadd.f32 %v6162, %v6175
          %v6221 = vadd.f32 %v6163, %v6179
          %v6222 = vadd.f32 %v6164, %v6183
          %v6223 = vadd.f32 %v6165, %v6187
          %v6224 = vadd.f32 %v6166, %v6191
          %v6225 = vadd.f32 %v6167, %v6195
          %v6226 = vadd.f32 %v6168, %v6199
          %v6227 = vadd.f32 %v6169, %v6203
          %v6228 = vmax.f32 %v6212, 0.0
          %v6229 = vmax.f32 %v6213, 0.0
          %v6230 = vmax.f32 %v6214, 0.0
          %v6231 = vmax.f32 %v6215, 0.0
          %v6232 = vmax.f32 %v6216, 0.0
          %v6233 = vmax.f32 %v6217, 0.0
          %v6234 = vmax.f32 %v6218, 0.0
          %v6235 = vmax.f32 %v6219, 0.0
          %v6236 = vmax.f32 %v6220, 0.0
          %v6237 = vmax.f32 %v6221, 0.0
          %v6238 = vmax.f32 %v6222, 0.0
          %v6239 = vmax.f32 %v6223, 0.0
          %v6240 = vmax.f32 %v6224, 0.0
          %v6241 = vmax.f32 %v6225, 0.0
          %v6242 = vmax.f32 %v6226, 0.0
          %v6243 = vmax.f32 %v6227, 0.0
          %v6244 = vpack.c.bf16 %v6236, %v6228
          %v6245 = vpack.c.bf16 %v6237, %v6229
          %v6246 = vpack.c.bf16 %v6238, %v6230
          %v6247 = vpack.c.bf16 %v6239, %v6231
          %v6248 = vpack.c.bf16 %v6240, %v6232
          %v6249 = vpack.c.bf16 %v6241, %v6233
          %v6250 = vpack.c.bf16 %v6242, %v6234
          %v6251 = vpack.c.bf16 %v6243, %v6235
          %v6252 = vld [vmem:[#allocation8] sm:$0xf]
          %v6253 = vld [vmem:[#allocation8 + $0x4] sm:$0xf]
          %v6254 = vld [vmem:[#allocation8 + $0x8] sm:$0xf]
          %v6255 = vld [vmem:[#allocation8 + $0xc] sm:$0xf]
          %v6256 = vld [vmem:[#allocation8 + $0x10] sm:$0xf]
          %v6257 = vld [vmem:[#allocation8 + $0x14] sm:$0xf]
          %v6258 = vld [vmem:[#allocation8 + $0x18] sm:$0xf]
          %v6259 = vld [vmem:[#allocation8 + $0x1c] sm:$0xf]
          %v6260 = vld [vmem:[#allocation8 + $0x20] sm:$0xf]
          %v6261 = vld [vmem:[#allocation8 + $0x24] sm:$0xf]
          %v6262 = vld [vmem:[#allocation8 + $0x28] sm:$0xf]
          %v6263 = vld [vmem:[#allocation8 + $0x2c] sm:$0xf]
          %v6264 = vld [vmem:[#allocation8 + $0x30] sm:$0xf]
          %v6265 = vld [vmem:[#allocation8 + $0x34] sm:$0xf]
          %v6266 = vld [vmem:[#allocation8 + $0x38] sm:$0xf]
          %v6267 = vld [vmem:[#allocation8 + $0x3c] sm:$0xf]
          %v6268 = vld [vmem:[#allocation8 + $0x40] sm:$0xf]
          %v6269 = vld [vmem:[#allocation8 + $0x44] sm:$0xf]
          %v6270 = vld [vmem:[#allocation8 + $0x48] sm:$0xf]
          %v6271 = vld [vmem:[#allocation8 + $0x4c] sm:$0xf]
          %v6272 = vld [vmem:[#allocation8 + $0x50] sm:$0xf]
          %v6273 = vld [vmem:[#allocation8 + $0x54] sm:$0xf]
          %v6274 = vld [vmem:[#allocation8 + $0x58] sm:$0xf]
          %v6275 = vld [vmem:[#allocation8 + $0x5c] sm:$0xf]
          %v6276 = vld [vmem:[#allocation8 + $0x60] sm:$0xf]
          %v6277 = vld [vmem:[#allocation8 + $0x64] sm:$0xf]
          %v6278 = vld [vmem:[#allocation8 + $0x68] sm:$0xf]
          %v6279 = vld [vmem:[#allocation8 + $0x6c] sm:$0xf]
          %v6280 = vld [vmem:[#allocation8 + $0x70] sm:$0xf]
          %v6281 = vld [vmem:[#allocation8 + $0x74] sm:$0xf]
          %v6282 = vld [vmem:[#allocation8 + $0x78] sm:$0xf]
          %v6283 = vld [vmem:[#allocation8 + $0x7c] sm:$0xf]
          %v6284 = vld [vmem:[#allocation8 + $0x80] sm:$0xf]
          %v6285 = vld [vmem:[#allocation8 + $0x84] sm:$0xf]
          %v6286 = vld [vmem:[#allocation8 + $0x88] sm:$0xf]
          %v6287 = vld [vmem:[#allocation8 + $0x8c] sm:$0xf]
          %v6288 = vld [vmem:[#allocation8 + $0x90] sm:$0xf]
          %v6289 = vld [vmem:[#allocation8 + $0x94] sm:$0xf]
          %v6290 = vld [vmem:[#allocation8 + $0x98] sm:$0xf]
          %v6291 = vld [vmem:[#allocation8 + $0x9c] sm:$0xf]
          %v6292 = vld [vmem:[#allocation8 + $0xa0] sm:$0xf]
          %v6293 = vld [vmem:[#allocation8 + $0xa4] sm:$0xf]
          %v6294 = vld [vmem:[#allocation8 + $0xa8] sm:$0xf]
          %v6295 = vld [vmem:[#allocation8 + $0xac] sm:$0xf]
          %v6296 = vld [vmem:[#allocation8 + $0xb0] sm:$0xf]
          %v6297 = vld [vmem:[#allocation8 + $0xb4] sm:$0xf]
          %v6298 = vld [vmem:[#allocation8 + $0xb8] sm:$0xf]
          %v6299 = vld [vmem:[#allocation8 + $0xbc] sm:$0xf]
          %v6300 = vld [vmem:[#allocation8 + $0xc0] sm:$0xf]
          %v6301 = vld [vmem:[#allocation8 + $0xc4] sm:$0xf]
          %v6302 = vld [vmem:[#allocation8 + $0xc8] sm:$0xf]
          %v6303 = vld [vmem:[#allocation8 + $0xcc] sm:$0xf]
          %v6304 = vld [vmem:[#allocation8 + $0xd0] sm:$0xf]
          %v6305 = vld [vmem:[#allocation8 + $0xd4] sm:$0xf]
          %v6306 = vld [vmem:[#allocation8 + $0xd8] sm:$0xf]
          %v6307 = vld [vmem:[#allocation8 + $0xdc] sm:$0xf]
          %v6308 = vld [vmem:[#allocation8 + $0xe0] sm:$0xf]
          %v6309 = vld [vmem:[#allocation8 + $0xe4] sm:$0xf]
          %v6310 = vld [vmem:[#allocation8 + $0xe8] sm:$0xf]
          %v6311 = vld [vmem:[#allocation8 + $0xec] sm:$0xf]
          %v6312 = vld [vmem:[#allocation8 + $0xf0] sm:$0xf]
          %v6313 = vld [vmem:[#allocation8 + $0xf4] sm:$0xf]
          %v6314 = vld [vmem:[#allocation8 + $0xf8] sm:$0xf]
          %v6315 = vld [vmem:[#allocation8 + $0xfc] sm:$0xf]
          %v6316 = vld [vmem:[#allocation8 + $0x100] sm:$0xf]
          %v6317 = vld [vmem:[#allocation8 + $0x104] sm:$0xf]
          %v6318 = vld [vmem:[#allocation8 + $0x108] sm:$0xf]
          %v6319 = vld [vmem:[#allocation8 + $0x10c] sm:$0xf]
          %v6320 = vld [vmem:[#allocation8 + $0x110] sm:$0xf]
          %v6321 = vld [vmem:[#allocation8 + $0x114] sm:$0xf]
          %v6322 = vld [vmem:[#allocation8 + $0x118] sm:$0xf]
          %v6323 = vld [vmem:[#allocation8 + $0x11c] sm:$0xf]
          %v6324 = vld [vmem:[#allocation8 + $0x120] sm:$0xf]
          %v6325 = vld [vmem:[#allocation8 + $0x124] sm:$0xf]
          %v6326 = vld [vmem:[#allocation8 + $0x128] sm:$0xf]
          %v6327 = vld [vmem:[#allocation8 + $0x12c] sm:$0xf]
          %v6328 = vld [vmem:[#allocation8 + $0x130] sm:$0xf]
          %v6329 = vld [vmem:[#allocation8 + $0x134] sm:$0xf]
          %v6330 = vld [vmem:[#allocation8 + $0x138] sm:$0xf]
          %v6331 = vld [vmem:[#allocation8 + $0x13c] sm:$0xf]
          %v6332 = vld [vmem:[#allocation8 + $0x140] sm:$0xf]
          %v6333 = vld [vmem:[#allocation8 + $0x144] sm:$0xf]
          %v6334 = vld [vmem:[#allocation8 + $0x148] sm:$0xf]
          %v6335 = vld [vmem:[#allocation8 + $0x14c] sm:$0xf]
          %v6336 = vld [vmem:[#allocation8 + $0x150] sm:$0xf]
          %v6337 = vld [vmem:[#allocation8 + $0x154] sm:$0xf]
          %v6338 = vld [vmem:[#allocation8 + $0x158] sm:$0xf]
          %v6339 = vld [vmem:[#allocation8 + $0x15c] sm:$0xf]
          %v6340 = vld [vmem:[#allocation8 + $0x160] sm:$0xf]
          %v6341 = vld [vmem:[#allocation8 + $0x164] sm:$0xf]
          %v6342 = vld [vmem:[#allocation8 + $0x168] sm:$0xf]
          %v6343 = vld [vmem:[#allocation8 + $0x16c] sm:$0xf]
          %v6344 = vld [vmem:[#allocation8 + $0x170] sm:$0xf]
          %v6345 = vld [vmem:[#allocation8 + $0x174] sm:$0xf]
          %v6346 = vld [vmem:[#allocation8 + $0x178] sm:$0xf]
          %v6347 = vld [vmem:[#allocation8 + $0x17c] sm:$0xf]
          %v6348 = vld [vmem:[#allocation8 + $0x180] sm:$0xf]
          %v6349 = vld [vmem:[#allocation8 + $0x184] sm:$0xf]
          %v6350 = vld [vmem:[#allocation8 + $0x188] sm:$0xf]
          %v6351 = vld [vmem:[#allocation8 + $0x18c] sm:$0xf]
          %v6352 = vld [vmem:[#allocation8 + $0x190] sm:$0xf]
          %v6353 = vld [vmem:[#allocation8 + $0x194] sm:$0xf]
          %v6354 = vld [vmem:[#allocation8 + $0x198] sm:$0xf]
          %v6355 = vld [vmem:[#allocation8 + $0x19c] sm:$0xf]
          %v6356 = vld [vmem:[#allocation8 + $0x1a0] sm:$0xf]
          %v6357 = vld [vmem:[#allocation8 + $0x1a4] sm:$0xf]
          %v6358 = vld [vmem:[#allocation8 + $0x1a8] sm:$0xf]
          %v6359 = vld [vmem:[#allocation8 + $0x1ac] sm:$0xf]
          %v6360 = vld [vmem:[#allocation8 + $0x1b0] sm:$0xf]
          %v6361 = vld [vmem:[#allocation8 + $0x1b4] sm:$0xf]
          %v6362 = vld [vmem:[#allocation8 + $0x1b8] sm:$0xf]
          %v6363 = vld [vmem:[#allocation8 + $0x1bc] sm:$0xf]
          %v6364 = vld [vmem:[#allocation8 + $0x1c0] sm:$0xf]
          %v6365 = vld [vmem:[#allocation8 + $0x1c4] sm:$0xf]
          %v6366 = vld [vmem:[#allocation8 + $0x1c8] sm:$0xf]
          %v6367 = vld [vmem:[#allocation8 + $0x1cc] sm:$0xf]
          %v6368 = vld [vmem:[#allocation8 + $0x1d0] sm:$0xf]
          %v6369 = vld [vmem:[#allocation8 + $0x1d4] sm:$0xf]
          %v6370 = vld [vmem:[#allocation8 + $0x1d8] sm:$0xf]
          %v6371 = vld [vmem:[#allocation8 + $0x1dc] sm:$0xf]
          %v6372 = vld [vmem:[#allocation8 + $0x1e0] sm:$0xf]
          %v6373 = vld [vmem:[#allocation8 + $0x1e4] sm:$0xf]
          %v6374 = vld [vmem:[#allocation8 + $0x1e8] sm:$0xf]
          %v6375 = vld [vmem:[#allocation8 + $0x1ec] sm:$0xf]
          %v6376 = vld [vmem:[#allocation8 + $0x1f0] sm:$0xf]
          %v6377 = vld [vmem:[#allocation8 + $0x1f4] sm:$0xf]
          %v6378 = vld [vmem:[#allocation8 + $0x1f8] sm:$0xf]
          %v6379 = vld [vmem:[#allocation8 + $0x1fc] sm:$0xf]
          %v6380 = vld [vmem:[#allocation9] sm:$0x1]
          %v6382 = vlaneseq
          %v6383 = vshrl.u32 %v6382, 7
          %v6384 = vsub.s32 0, %v6383
          %v6385 = vrot.slane %v6380, %v6384
          %v6515 = vunpack.c.l.b16 %v6252
          %v6516 = vunpack.c.l.b16 %v6253
          %v6517 = vunpack.c.l.b16 %v6254
          %v6518 = vunpack.c.l.b16 %v6255
          %v6519 = vunpack.c.l.b16 %v6256
          %v6520 = vunpack.c.l.b16 %v6257
          %v6521 = vunpack.c.l.b16 %v6258
          %v6522 = vunpack.c.l.b16 %v6259
          %v6523 = vunpack.c.l.b16 %v6260
          %v6524 = vunpack.c.l.b16 %v6261
          %v6525 = vunpack.c.l.b16 %v6262
          %v6526 = vunpack.c.l.b16 %v6263
          %v6527 = vunpack.c.l.b16 %v6264
          %v6528 = vunpack.c.l.b16 %v6265
          %v6529 = vunpack.c.l.b16 %v6266
          %v6530 = vunpack.c.l.b16 %v6267
          %v6531 = vunpack.c.l.b16 %v6268
          %v6532 = vunpack.c.l.b16 %v6269
          %v6533 = vunpack.c.l.b16 %v6270
          %v6534 = vunpack.c.l.b16 %v6271
          %v6535 = vunpack.c.l.b16 %v6272
          %v6536 = vunpack.c.l.b16 %v6273
          %v6537 = vunpack.c.l.b16 %v6274
          %v6538 = vunpack.c.l.b16 %v6275
          %v6539 = vunpack.c.l.b16 %v6276
          %v6540 = vunpack.c.l.b16 %v6277
          %v6541 = vunpack.c.l.b16 %v6278
          %v6542 = vunpack.c.l.b16 %v6279
          %v6543 = vunpack.c.l.b16 %v6280
          %v6544 = vunpack.c.l.b16 %v6281
          %v6545 = vunpack.c.l.b16 %v6282
          %v6546 = vunpack.c.l.b16 %v6283
          %v6547 = vunpack.c.l.b16 %v6284
          %v6548 = vunpack.c.l.b16 %v6285
          %v6549 = vunpack.c.l.b16 %v6286
          %v6550 = vunpack.c.l.b16 %v6287
          %v6551 = vunpack.c.l.b16 %v6288
          %v6552 = vunpack.c.l.b16 %v6289
          %v6553 = vunpack.c.l.b16 %v6290
          %v6554 = vunpack.c.l.b16 %v6291
          %v6555 = vunpack.c.l.b16 %v6292
          %v6556 = vunpack.c.l.b16 %v6293
          %v6557 = vunpack.c.l.b16 %v6294
          %v6558 = vunpack.c.l.b16 %v6295
          %v6559 = vunpack.c.l.b16 %v6296
          %v6560 = vunpack.c.l.b16 %v6297
          %v6561 = vunpack.c.l.b16 %v6298
          %v6562 = vunpack.c.l.b16 %v6299
          %v6563 = vunpack.c.l.b16 %v6300
          %v6564 = vunpack.c.l.b16 %v6301
          %v6565 = vunpack.c.l.b16 %v6302
          %v6566 = vunpack.c.l.b16 %v6303
          %v6567 = vunpack.c.l.b16 %v6304
          %v6568 = vunpack.c.l.b16 %v6305
          %v6569 = vunpack.c.l.b16 %v6306
          %v6570 = vunpack.c.l.b16 %v6307
          %v6571 = vunpack.c.l.b16 %v6308
          %v6572 = vunpack.c.l.b16 %v6309
          %v6573 = vunpack.c.l.b16 %v6310
          %v6574 = vunpack.c.l.b16 %v6311
          %v6575 = vunpack.c.l.b16 %v6312
          %v6576 = vunpack.c.l.b16 %v6313
          %v6577 = vunpack.c.l.b16 %v6314
          %v6578 = vunpack.c.l.b16 %v6315
          %v6579 = vunpack.c.l.b16 %v6316
          %v6580 = vunpack.c.l.b16 %v6317
          %v6581 = vunpack.c.l.b16 %v6318
          %v6582 = vunpack.c.l.b16 %v6319
          %v6583 = vunpack.c.l.b16 %v6320
          %v6584 = vunpack.c.l.b16 %v6321
          %v6585 = vunpack.c.l.b16 %v6322
          %v6586 = vunpack.c.l.b16 %v6323
          %v6587 = vunpack.c.l.b16 %v6324
          %v6588 = vunpack.c.l.b16 %v6325
          %v6589 = vunpack.c.l.b16 %v6326
          %v6590 = vunpack.c.l.b16 %v6327
          %v6591 = vunpack.c.l.b16 %v6328
          %v6592 = vunpack.c.l.b16 %v6329
          %v6593 = vunpack.c.l.b16 %v6330
          %v6594 = vunpack.c.l.b16 %v6331
          %v6595 = vunpack.c.l.b16 %v6332
          %v6596 = vunpack.c.l.b16 %v6333
          %v6597 = vunpack.c.l.b16 %v6334
          %v6598 = vunpack.c.l.b16 %v6335
          %v6599 = vunpack.c.l.b16 %v6336
          %v6600 = vunpack.c.l.b16 %v6337
          %v6601 = vunpack.c.l.b16 %v6338
          %v6602 = vunpack.c.l.b16 %v6339
          %v6603 = vunpack.c.l.b16 %v6340
          %v6604 = vunpack.c.l.b16 %v6341
          %v6605 = vunpack.c.l.b16 %v6342
          %v6606 = vunpack.c.l.b16 %v6343
          %v6607 = vunpack.c.l.b16 %v6344
          %v6608 = vunpack.c.l.b16 %v6345
          %v6609 = vunpack.c.l.b16 %v6346
          %v6610 = vunpack.c.l.b16 %v6347
          %v6611 = vunpack.c.l.b16 %v6348
          %v6612 = vunpack.c.l.b16 %v6349
          %v6613 = vunpack.c.l.b16 %v6350
          %v6614 = vunpack.c.l.b16 %v6351
          %v6615 = vunpack.c.l.b16 %v6352
          %v6616 = vunpack.c.l.b16 %v6353
          %v6617 = vunpack.c.l.b16 %v6354
          %v6618 = vunpack.c.l.b16 %v6355
          %v6619 = vunpack.c.l.b16 %v6356
          %v6620 = vunpack.c.l.b16 %v6357
          %v6621 = vunpack.c.l.b16 %v6358
          %v6622 = vunpack.c.l.b16 %v6359
          %v6623 = vunpack.c.l.b16 %v6360
          %v6624 = vunpack.c.l.b16 %v6361
          %v6625 = vunpack.c.l.b16 %v6362
          %v6626 = vunpack.c.l.b16 %v6363
          %v6627 = vunpack.c.l.b16 %v6364
          %v6628 = vunpack.c.l.b16 %v6365
          %v6629 = vunpack.c.l.b16 %v6366
          %v6630 = vunpack.c.l.b16 %v6367
          %v6631 = vunpack.c.l.b16 %v6368
          %v6632 = vunpack.c.l.b16 %v6369
          %v6633 = vunpack.c.l.b16 %v6370
          %v6634 = vunpack.c.l.b16 %v6371
          %v6635 = vunpack.c.l.b16 %v6372
          %v6636 = vunpack.c.l.b16 %v6373
          %v6637 = vunpack.c.l.b16 %v6374
          %v6638 = vunpack.c.l.b16 %v6375
          %v6639 = vunpack.c.l.b16 %v6376
          %v6640 = vunpack.c.l.b16 %v6377
          %v6641 = vunpack.c.l.b16 %v6378
          %v6642 = vunpack.c.l.b16 %v6379
          %v6643 = vpack.c.b16 %v6516, %v6515
          %v6644 = vpack.c.b16 %v6518, %v6517
          %v6645 = vpack.c.b16 %v6520, %v6519
          %v6646 = vpack.c.b16 %v6522, %v6521
          %v6647 = vpack.c.b16 %v6524, %v6523
          %v6648 = vpack.c.b16 %v6526, %v6525
          %v6649 = vpack.c.b16 %v6528, %v6527
          %v6650 = vpack.c.b16 %v6530, %v6529
          %v6651 = vpack.c.b16 %v6532, %v6531
          %v6652 = vpack.c.b16 %v6534, %v6533
          %v6653 = vpack.c.b16 %v6536, %v6535
          %v6654 = vpack.c.b16 %v6538, %v6537
          %v6655 = vpack.c.b16 %v6540, %v6539
          %v6656 = vpack.c.b16 %v6542, %v6541
          %v6657 = vpack.c.b16 %v6544, %v6543
          %v6658 = vpack.c.b16 %v6546, %v6545
          %v6659 = vpack.c.b16 %v6548, %v6547
          %v6660 = vpack.c.b16 %v6550, %v6549
          %v6661 = vpack.c.b16 %v6552, %v6551
          %v6662 = vpack.c.b16 %v6554, %v6553
          %v6663 = vpack.c.b16 %v6556, %v6555
          %v6664 = vpack.c.b16 %v6558, %v6557
          %v6665 = vpack.c.b16 %v6560, %v6559
          %v6666 = vpack.c.b16 %v6562, %v6561
          %v6667 = vpack.c.b16 %v6564, %v6563
          %v6668 = vpack.c.b16 %v6566, %v6565
          %v6669 = vpack.c.b16 %v6568, %v6567
          %v6670 = vpack.c.b16 %v6570, %v6569
          %v6671 = vpack.c.b16 %v6572, %v6571
          %v6672 = vpack.c.b16 %v6574, %v6573
          %v6673 = vpack.c.b16 %v6576, %v6575
          %v6674 = vpack.c.b16 %v6578, %v6577
          %v6675 = vpack.c.b16 %v6580, %v6579
          %v6676 = vpack.c.b16 %v6582, %v6581
          %v6677 = vpack.c.b16 %v6584, %v6583
          %v6678 = vpack.c.b16 %v6586, %v6585
          %v6679 = vpack.c.b16 %v6588, %v6587
          %v6680 = vpack.c.b16 %v6590, %v6589
          %v6681 = vpack.c.b16 %v6592, %v6591
          %v6682 = vpack.c.b16 %v6594, %v6593
          %v6683 = vpack.c.b16 %v6596, %v6595
          %v6684 = vpack.c.b16 %v6598, %v6597
          %v6685 = vpack.c.b16 %v6600, %v6599
          %v6686 = vpack.c.b16 %v6602, %v6601
          %v6687 = vpack.c.b16 %v6604, %v6603
          %v6688 = vpack.c.b16 %v6606, %v6605
          %v6689 = vpack.c.b16 %v6608, %v6607
          %v6690 = vpack.c.b16 %v6610, %v6609
          %v6691 = vpack.c.b16 %v6612, %v6611
          %v6692 = vpack.c.b16 %v6614, %v6613
          %v6693 = vpack.c.b16 %v6616, %v6615
          %v6694 = vpack.c.b16 %v6618, %v6617
          %v6695 = vpack.c.b16 %v6620, %v6619
          %v6696 = vpack.c.b16 %v6622, %v6621
          %v6697 = vpack.c.b16 %v6624, %v6623
          %v6698 = vpack.c.b16 %v6626, %v6625
          %v6699 = vpack.c.b16 %v6628, %v6627
          %v6700 = vpack.c.b16 %v6630, %v6629
          %v6701 = vpack.c.b16 %v6632, %v6631
          %v6702 = vpack.c.b16 %v6634, %v6633
          %v6703 = vpack.c.b16 %v6636, %v6635
          %v6704 = vpack.c.b16 %v6638, %v6637
          %v6705 = vpack.c.b16 %v6640, %v6639
          %v6706 = vpack.c.b16 %v6642, %v6641
          %6771 = vmatprep.subr.bf16.mxu0 0
          %6772 = vmatpush1.bf16.msra.mxu0 %v6643
          %6773 = vmatprep.subr.bf16.mxu0 0
          %6774 = vmatpush1.bf16.msra.mxu0 %v6644
          %6775 = vmatprep.subr.bf16.mxu0 0
          %6776 = vmatpush1.bf16.msra.mxu0 %v6645
          %6777 = vmatprep.subr.bf16.mxu0 0
          %6778 = vmatpush1.bf16.msra.mxu0 %v6646
          %6779 = vmatprep.subr.bf16.mxu0 0
          %6780 = vmatpush1.bf16.msra.mxu0 %v6647
          %6781 = vmatprep.subr.bf16.mxu0 0
          %6782 = vmatpush1.bf16.msra.mxu0 %v6648
          %6783 = vmatprep.subr.bf16.mxu0 0
          %6784 = vmatpush1.bf16.msra.mxu0 %v6649
          %6785 = vmatprep.subr.bf16.mxu0 0
          %6786 = vmatpush1.bf16.msra.mxu0 %v6650
          %6787 = vmatprep.subr.bf16.mxu0 0
          %6788 = vmatpush1.bf16.msra.mxu0 %v6651
          %6789 = vmatprep.subr.bf16.mxu0 0
          %6790 = vmatpush1.bf16.msra.mxu0 %v6652
          %6791 = vmatprep.subr.bf16.mxu0 0
          %6792 = vmatpush1.bf16.msra.mxu0 %v6653
          %6793 = vmatprep.subr.bf16.mxu0 0
          %6794 = vmatpush1.bf16.msra.mxu0 %v6654
          %6795 = vmatprep.subr.bf16.mxu0 0
          %6796 = vmatpush1.bf16.msra.mxu0 %v6655
          %6797 = vmatprep.subr.bf16.mxu0 0
          %6798 = vmatpush1.bf16.msra.mxu0 %v6656
          %6799 = vmatprep.subr.bf16.mxu0 0
          %6800 = vmatpush1.bf16.msra.mxu0 %v6657
          %6801 = vmatprep.subr.bf16.mxu0 0
          %6802 = vmatpush1.bf16.msra.mxu0 %v6658
          %6803 = vmatprep.mubr.bf16.mxu0 %v6245
          %6804 = vmatmul.mubr.bf16.gmra.mrb[0].mxu0 %v6244
          %v6805 = vpop.f32.mrb[0].mxu0
          %v6806 = vadd.f32 %v6385, %v6805
          %v6807 = vpop.f32.mrb[0].mxu0
          %v6808 = vpop.f32.mrb[0].mxu0
          %v6809 = vadd.f32 %v6385, %v6808
          %v6810 = vpop.f32.mrb[0].mxu0
          %6811 = vdwg.mxu0
          %6812 = vmatprep.subr.bf16.mxu0 0
          %6813 = vmatpush1.bf16.msra.mxu0 %v6659
          %6814 = vmatprep.subr.bf16.mxu0 0
          %6815 = vmatpush1.bf16.msra.mxu0 %v6660
          %6816 = vmatprep.subr.bf16.mxu0 0
          %6817 = vmatpush1.bf16.msra.mxu0 %v6661
          %6818 = vmatprep.subr.bf16.mxu0 0
          %6819 = vmatpush1.bf16.msra.mxu0 %v6662
          %6820 = vmatprep.subr.bf16.mxu0 0
          %6821 = vmatpush1.bf16.msra.mxu0 %v6663
          %6822 = vmatprep.subr.bf16.mxu0 0
          %6823 = vmatpush1.bf16.msra.mxu0 %v6664
          %6824 = vmatprep.subr.bf16.mxu0 0
          %6825 = vmatpush1.bf16.msra.mxu0 %v6665
          %6826 = vmatprep.subr.bf16.mxu0 0
          %6827 = vmatpush1.bf16.msra.mxu0 %v6666
          %6828 = vmatprep.subr.bf16.mxu0 0
          %6829 = vmatpush1.bf16.msra.mxu0 %v6667
          %6830 = vmatprep.subr.bf16.mxu0 0
          %6831 = vmatpush1.bf16.msra.mxu0 %v6668
          %6832 = vmatprep.subr.bf16.mxu0 0
          %6833 = vmatpush1.bf16.msra.mxu0 %v6669
          %6834 = vmatprep.subr.bf16.mxu0 0
          %6835 = vmatpush1.bf16.msra.mxu0 %v6670
          %6836 = vmatprep.subr.bf16.mxu0 0
          %6837 = vmatpush1.bf16.msra.mxu0 %v6671
          %6838 = vmatprep.subr.bf16.mxu0 0
          %6839 = vmatpush1.bf16.msra.mxu0 %v6672
          %6840 = vmatprep.subr.bf16.mxu0 0
          %6841 = vmatpush1.bf16.msra.mxu0 %v6673
          %6842 = vmatprep.subr.bf16.mxu0 0
          %6843 = vmatpush1.bf16.msra.mxu0 %v6674
          %6844 = vmatprep.mubr.bf16.mxu0 %v6247
          %6845 = vmatmul.mubr.bf16.gmra.mrb[0].mxu0 %v6246
          %v6846 = vpop.f32.mrb[0].mxu0
          %v6847 = vadd.f32 %v6806, %v6846
          %v6848 = vpop.f32.mrb[0].mxu0
          %v6849 = vpop.f32.mrb[0].mxu0
          %v6850 = vadd.f32 %v6809, %v6849
          %v6851 = vpop.f32.mrb[0].mxu0
          %6852 = vdwg.mxu0
          %6853 = vmatprep.subr.bf16.mxu0 0
          %6854 = vmatpush1.bf16.msra.mxu0 %v6675
          %6855 = vmatprep.subr.bf16.mxu0 0
          %6856 = vmatpush1.bf16.msra.mxu0 %v6676
          %6857 = vmatprep.subr.bf16.mxu0 0
          %6858 = vmatpush1.bf16.msra.mxu0 %v6677
          %6859 = vmatprep.subr.bf16.mxu0 0
          %6860 = vmatpush1.bf16.msra.mxu0 %v6678
          %6861 = vmatprep.subr.bf16.mxu0 0
          %6862 = vmatpush1.bf16.msra.mxu0 %v6679
          %6863 = vmatprep.subr.bf16.mxu0 0
          %6864 = vmatpush1.bf16.msra.mxu0 %v6680
          %6865 = vmatprep.subr.bf16.mxu0 0
          %6866 = vmatpush1.bf16.msra.mxu0 %v6681
          %6867 = vmatprep.subr.bf16.mxu0 0
          %6868 = vmatpush1.bf16.msra.mxu0 %v6682
          %6869 = vmatprep.subr.bf16.mxu0 0
          %6870 = vmatpush1.bf16.msra.mxu0 %v6683
          %6871 = vmatprep.subr.bf16.mxu0 0
          %6872 = vmatpush1.bf16.msra.mxu0 %v6684
          %6873 = vmatprep.subr.bf16.mxu0 0
          %6874 = vmatpush1.bf16.msra.mxu0 %v6685
          %6875 = vmatprep.subr.bf16.mxu0 0
          %6876 = vmatpush1.bf16.msra.mxu0 %v6686
          %6877 = vmatprep.subr.bf16.mxu0 0
          %6878 = vmatpush1.bf16.msra.mxu0 %v6687
          %6879 = vmatprep.subr.bf16.mxu0 0
          %6880 = vmatpush1.bf16.msra.mxu0 %v6688
          %6881 = vmatprep.subr.bf16.mxu0 0
          %6882 = vmatpush1.bf16.msra.mxu0 %v6689
          %6883 = vmatprep.subr.bf16.mxu0 0
          %6884 = vmatpush1.bf16.msra.mxu0 %v6690
          %6885 = vmatprep.mubr.bf16.mxu0 %v6249
          %6886 = vmatmul.mubr.bf16.gmra.mrb[0].mxu0 %v6248
          %v6887 = vpop.f32.mrb[0].mxu0
          %v6888 = vadd.f32 %v6847, %v6887
          %v6889 = vpop.f32.mrb[0].mxu0
          %v6890 = vpop.f32.mrb[0].mxu0
          %v6891 = vadd.f32 %v6850, %v6890
          %v6892 = vpop.f32.mrb[0].mxu0
          %6893 = vdwg.mxu0
          %6894 = vmatprep.subr.bf16.mxu0 0
          %6895 = vmatpush1.bf16.msra.mxu0 %v6691
          %6896 = vmatprep.subr.bf16.mxu0 0
          %6897 = vmatpush1.bf16.msra.mxu0 %v6692
          %6898 = vmatprep.subr.bf16.mxu0 0
          %6899 = vmatpush1.bf16.msra.mxu0 %v6693
          %6900 = vmatprep.subr.bf16.mxu0 0
          %6901 = vmatpush1.bf16.msra.mxu0 %v6694
          %6902 = vmatprep.subr.bf16.mxu0 0
          %6903 = vmatpush1.bf16.msra.mxu0 %v6695
          %6904 = vmatprep.subr.bf16.mxu0 0
          %6905 = vmatpush1.bf16.msra.mxu0 %v6696
          %6906 = vmatprep.subr.bf16.mxu0 0
          %6907 = vmatpush1.bf16.msra.mxu0 %v6697
          %6908 = vmatprep.subr.bf16.mxu0 0
          %6909 = vmatpush1.bf16.msra.mxu0 %v6698
          %6910 = vmatprep.subr.bf16.mxu0 0
          %6911 = vmatpush1.bf16.msra.mxu0 %v6699
          %6912 = vmatprep.subr.bf16.mxu0 0
          %6913 = vmatpush1.bf16.msra.mxu0 %v6700
          %6914 = vmatprep.subr.bf16.mxu0 0
          %6915 = vmatpush1.bf16.msra.mxu0 %v6701
          %6916 = vmatprep.subr.bf16.mxu0 0
          %6917 = vmatpush1.bf16.msra.mxu0 %v6702
          %6918 = vmatprep.subr.bf16.mxu0 0
          %6919 = vmatpush1.bf16.msra.mxu0 %v6703
          %6920 = vmatprep.subr.bf16.mxu0 0
          %6921 = vmatpush1.bf16.msra.mxu0 %v6704
          %6922 = vmatprep.subr.bf16.mxu0 0
          %6923 = vmatpush1.bf16.msra.mxu0 %v6705
          %6924 = vmatprep.subr.bf16.mxu0 0
          %6925 = vmatpush1.bf16.msra.mxu0 %v6706
          %6926 = vmatprep.mubr.bf16.mxu0 %v6251
          %6927 = vmatmul.mubr.bf16.gmra.mrb[0].mxu0 %v6250
          %v6928 = vpop.f32.mrb[0].mxu0
          %v6929 = vadd.f32 %v6888, %v6928
          %v6930 = vpop.f32.mrb[0].mxu0
          %v6931 = vpop.f32.mrb[0].mxu0
          %v6932 = vadd.f32 %v6891, %v6931
          %v6933 = vpop.f32.mrb[0].mxu0
          %6934 = vdwg.mxu0
          %6935 = vmax.xlane.f32.xlu0 %v6929
          %v6936 = vpop.xlane.xlu0 %6935
          %6937 = vmax.xlane.f32.xlu0 %v6932
          %v6938 = vpop.xlane.xlu0 %6937
          %v6939 = vsub.f32 %v6929, %v6936
          %v6940 = vsub.f32 %v6932, %v6938
          %v6941 = vmul.f32 %v6939, 1.442695
          %v6942 = vpow.pop %v6941
          %v6943 = vmul.f32 %v6940, 1.442695
          %v6944 = vpow.pop %v6943
          %6945 = vadd.xlane.f32.xlu0 %v6942
          %v6946 = vpop.xlane.xlu0 %6945
          %6947 = vadd.xlane.f32.xlu0 %v6944
          %v6948 = vpop.xlane.xlu0 %6947
          %v6949 = vrcp.pop %v6946
          %v6950 = vmul.f32 %v6942, %v6949
          %v6951 = vrcp.pop %v6948
          %v6952 = vmul.f32 %v6944, %v6951
          %6953 = vst [vmem:[%s367] sm:$0xff] %v6950
          %6954 = vst [vmem:[%s367 + $0x8] sm:$0xff] %v6952
        $region87: #{ffnn_forward.1} parent=58 // pred_fallthru
          _
        %s6955 = smul.u32 2, %s25
        %p6956 = scmp.lt.s32.totalorder %s6955, 1
        %s6957 = scalar_select %p6956, %s6955, 1
        %s6958 = smul.addr %s6957, 8
        %s6959 = scalar_lea.vmem %s5, %s6958
        // Predicated region
        $region88: #{ffnn_forward.1} parent=58 // pred_check
          %p6960 = pneg %p168
        $region89: #{ffnn_forward.1} parent=58 // pred_check_branch
          %6962 = sbr.rel (%p6960) target = $region91
        $region90: #{ffnn_forward.1} parent=58 // pred_region
          %s6963 = smul.u32 2, %s25
        $region91: #{ffnn_forward.1} parent=58 // pred_fallthru
          _
        // Predicated region
        $region92: #{ffnn_forward.1} parent=58 // pred_check
          %p6964 = pneg %p168
        $region93: #{ffnn_forward.1} parent=58 // pred_check_branch
          %6966 = sbr.rel (%p6964) target = $region95
        $region94: #{ffnn_forward.1} parent=58 // pred_region
          %s6967 = smul.u32 2, %s25
          %p6968 = scmp.lt.s32.totalorder %s6967, 1
          %s6969 = scalar_select %p6968, %s6967, 1
          %s6970 = smul.addr %s6969, 8
          %s6971 = scalar_lea.vmem %s5, %s6970
        $region95: #{ffnn_forward.1} parent=58 // pred_fallthru
          _
      $region59: #{ffnn_forward.1} parent=5 // pred_fallthru
        _
      %p6972 = scmp.le.s32.totalorder 2, %s16
      // Predicated region
      $region96: #{ffnn_forward.1} parent=5 // pred_check
        %p6973 = pneg %p6972
      $region97: #{ffnn_forward.1} parent=5 // pred_check_branch
        %6975 = sbr.rel (%p6973) target = $region99
      $region98: #{ffnn_forward.1} parent=5 // pred_region
        %s6976 = ssub.s32 %s16, 2
      $region99: #{ffnn_forward.1} parent=5 // pred_fallthru
        _
    $region6: #{ffnn_forward.1} parent=1 // loop_footer
      %s20 = sadd.s32 1, %s16
    $region7: #{ffnn_forward.1} parent=1 // loop_footer_branch
      %15 = sbr.rel target = $region3
    $region8: #{ffnn_forward.1} parent=1 // loop_exit
      _
    %6977 = vsyncpa [#allocation5], 1
    %s6978 = scalar_lea.sflag [#allocation5], 1
    %6979 = vsyncpa %s6978, 1
    %6980 = vsyncpa [#allocation7], 1
    %6981 = vsyncpa [#allocation10], 1

</llo_original>
